<compile_context>
chip_gen: v7x
topology: tpu7x:2x2x1
jax: 0.10.0
libtpu: 0.0.40
codegen_flags: <defaults>
</compile_context>

<pallas_src>
import functools

import jax
import jax.numpy as jnp
from jax.experimental import pallas as pl
from jax.experimental.pallas import tpu as pltpu

N_FILTERS = 32
HIDDEN = 64
OUT_PAD = 128  # lane-dense padded head width


# --------------------------------------------------------------------------- kernel
def _maicnn_fused_kernel(x_ref, e_ref, w1_ref, b1_ref, w2_ref, b2_ref,
                         w3c_ref, w3e_ref, b3_ref, w4_ref, b4_ref,
                         o_ref, h1_ref, h2_ref, *, H, W):
    """Full per-agent forward: conv1 -> conv2 -> fc1(+extras) -> fc2, all in VMEM."""
    HW = H * W
    PAD = 2 * W + 2            # max 3x3 tap offset on the flattened spatial axis
    HW1 = HW + PAD             # conv1 rows kept so conv2 taps stay in range
    OH2, OW2 = H - 4, W - 4    # valid spatial extent after two 3x3 valid convs

    # ---- conv1: 9 shifted-window matmuls over the flattened spatial axis ----------
    acc = jnp.zeros((HW1, N_FILTERS), jnp.float32)
    for di in range(3):
        for dj in range(3):
            off = di * W + dj
            lhs = x_ref[off:off + HW1, :].astype(jnp.bfloat16)      # (HW1, C)
            acc = acc + jnp.dot(lhs, w1_ref[di * 3 + dj],
                                preferred_element_type=jnp.float32)
    h1_ref[...] = jnp.maximum(acc + b1_ref[...], 0.0)               # f32 in VMEM

    # ---- conv2: same trick on the conv1 activation kept in VMEM -------------------
    acc = jnp.zeros((HW, N_FILTERS), jnp.float32)
    for di in range(3):
        for dj in range(3):
            off = di * W + dj
            lhs = h1_ref[off:off + HW, :].astype(jnp.bfloat16)      # (HW, F)
            acc = acc + jnp.dot(lhs, w2_ref[di * 3 + dj],
                                preferred_element_type=jnp.float32)
    h2_ref[...] = jnp.maximum(acc + b2_ref[...], 0.0)               # f32 in VMEM

    # ---- fc1: contract the valid (OH2, OW2) positions against per-position slices -
    z = jnp.dot(e_ref[...].astype(jnp.bfloat16), w3e_ref[...],
                preferred_element_type=jnp.float32)                 # extras part
    for i in range(OH2):
        for j in range(OW2):
            q = i * W + j
            lhs = h2_ref[q:q + 1, :].astype(jnp.bfloat16)           # (1, F)
            z = z + jnp.dot(lhs, w3c_ref[i * OW2 + j],
                            preferred_element_type=jnp.float32)
    z = jnp.maximum(z + b3_ref[...], 0.0).astype(jnp.bfloat16)      # (1, HIDDEN)

    # ---- fc2 head, 128-lane-dense output -------------------------------------------
    q_out = jnp.dot(z, w4_ref[...], preferred_element_type=jnp.float32) + b4_ref[...]
    o_ref[...] = q_out.astype(o_ref.dtype)                          # (1, OUT_PAD)


# --------------------------------------------------------------------------- params
def init_params(key, input_shape, extras_shape, output_shape):
    C, H, W = input_shape
    (E,) = extras_shape
    n_actions, n_objectives = output_shape
    n_out = n_actions * n_objectives
    OH2, OW2 = H - 4, W - 4
    flat_dim = N_FILTERS * OH2 * OW2 + E

    def xavier(k, shape, fan_in, fan_out):
        bound = (6.0 / (fan_in + fan_out)) ** 0.5
        return jax.random.uniform(k, shape, jnp.float32, -bound, bound)

    k1, k2, k3, k4, k5 = jax.random.split(key, 5)
    # conv weights stored tap-major for the in-kernel shifted-window matmuls:
    #   w[t, c, f] corresponds to torch conv weight[f, c, t // 3, t % 3]
    w1 = xavier(k1, (9, C, N_FILTERS), C * 9, N_FILTERS * 9)
    w2 = xavier(k2, (9, N_FILTERS, N_FILTERS), N_FILTERS * 9, N_FILTERS * 9)
    # fc1 weight split into per-spatial-position slices (q = i*OW2 + j) + extras slice.
    w3c = xavier(k3, (OH2 * OW2, N_FILTERS, HIDDEN), flat_dim, HIDDEN)
    w3e = xavier(k4, (E, HIDDEN), flat_dim, HIDDEN)
    # head weight zero-padded to 128 output lanes (lane-dense stores); cols >= n_out = 0
    w4 = jnp.zeros((HIDDEN, OUT_PAD), jnp.float32)
    w4 = w4.at[:, :n_out].set(xavier(k5, (HIDDEN, n_out), HIDDEN, n_out))
    return {
        "w1": w1.astype(jnp.bfloat16), "b1": jnp.zeros((1, N_FILTERS), jnp.float32),
        "w2": w2.astype(jnp.bfloat16), "b2": jnp.zeros((1, N_FILTERS), jnp.float32),
        "w3c": w3c.astype(jnp.bfloat16), "w3e": w3e.astype(jnp.bfloat16),
        "b3": jnp.zeros((1, HIDDEN), jnp.float32),
        "w4": w4.astype(jnp.bfloat16), "b4": jnp.zeros((1, OUT_PAD), jnp.float32),
    }


# --------------------------------------------------------------------------- forward
def maicnn_forward(obs, extras, params, output_shape):
    """obs: (B, A, C, H, W) f32 (PyTorch NCHW per agent), extras: (B, A, E) f32.

    Returns objective_qvalues of shape (B, A, n_actions, n_objectives).
    """
    # TODO(synk): MAICNN.forward is abstract in the source; this is the standard MAIC CNN head.
    n_actions, n_objectives = output_shape
    n_out = n_actions * n_objectives
    B, A, C, H, W = obs.shape
    BA = B * A
    HW = H * W
    PAD = 2 * W + 2
    HWP = HW + 2 * PAD  # input rows incl. zero tail so every tap slice is in range
    E = extras.shape[-1]

    # NCHW -> flattened NHWC rows (spatial on sublanes, channels on lanes) + zero tail.
    x = jnp.transpose(obs.reshape(BA, C, H, W), (0, 2, 3, 1)).reshape(BA, HW, C)
    x = jnp.pad(x, ((0, 0), (0, 2 * PAD), (0, 0)))
    e = extras.reshape(BA, 1, E)

    def _full(arr):  # whole-array block, fetched once (constant index map)
        return pl.BlockSpec(arr.shape, lambda *_: (0,) * arr.ndim)

    q_pad = pl.pallas_call(
        functools.partial(_maicnn_fused_kernel, H=H, W=W),
        grid=(BA,),
        in_specs=[
            pl.BlockSpec((None, HWP, C), lambda i: (i, 0, 0)),   # per-agent obs rows
            pl.BlockSpec((None, 1, E), lambda i: (i, 0, 0)),     # per-agent extras
            _full(params["w1"]), _full(params["b1"]),
            _full(params["w2"]), _full(params["b2"]),
            _full(params["w3c"]), _full(params["w3e"]), _full(params["b3"]),
            _full(params["w4"]), _full(params["b4"]),
        ],
        out_specs=pl.BlockSpec((None, 1, OUT_PAD), lambda i: (i, 0, 0)),
        out_shape=jax.ShapeDtypeStruct((BA, 1, OUT_PAD), jnp.float32),
        scratch_shapes=[
            pltpu.VMEM((HW + PAD, N_FILTERS), jnp.float32),  # h1
            pltpu.VMEM((HW, N_FILTERS), jnp.float32),        # h2
        ],
        compiler_params=pltpu.CompilerParams(
            dimension_semantics=("parallel",),
            vmem_limit_bytes=32 * 1024 * 1024,
        ),
    )(x, e, params["w1"], params["b1"], params["w2"], params["b2"],
      params["w3c"], params["w3e"], params["b3"], params["w4"], params["b4"])

    return q_pad[:, 0, :n_out].reshape(B, A, n_actions, n_objectives)


def maicnn_value(objective_qvalues):
    """MAICNN.value(): sum over objectives -> max over actions -> mean over agents.

    Plain jnp on purpose: a few XLU reduction ops, far cheaper than a kernel launch.
    """
    q_sum = jnp.sum(objective_qvalues, axis=-1)       # (B, A, n_actions)
    agent_values = jnp.max(q_sum, axis=-1)            # (B, A)
    return jnp.mean(agent_values, axis=-1)            # (B,)


# --------------------------------------------------------------------------- main
if __name__ == "__main__":
    key = jax.random.PRNGKey(0)
    k_obs, k_ext, k_par = jax.random.split(key, 3)

    # small shapes consistent with the module
    B, A = 2, 3                      # batch, n_agents
    input_shape = (4, 8, 8)          # (C, H, W) per agent (NCHW like PyTorch)
    extras_shape = (8,)
    output_shape = (5, 2)            # (n_actions, n_objectives)

    obs = jax.random.normal(k_obs, (B, A) + input_shape, jnp.float32)
    extras = jax.random.normal(k_ext, (B, A) + extras_shape, jnp.float32)
    params = init_params(k_par, input_shape, extras_shape, output_shape)

    fwd = jax.jit(functools.partial(maicnn_forward, output_shape=output_shape))
    objective_qvalues = fwd(obs, extras, params)
    values = maicnn_value(objective_qvalues)          # MAICNN.value() aggregation

    jax.block_until_ready((objective_qvalues, values))
    assert objective_qvalues.shape == (B, A) + output_shape
    assert values.shape == (B,)
    assert bool(jnp.all(jnp.isfinite(objective_qvalues)))
    print("KERNEL_OK")
</pallas_src>

<mosaic_0001>
module attributes {stable_mosaic.version = 11 : i64} {
  func.func @_maicnn_fused_kernel(%arg0: i32, %arg1: memref<1x100x4xf32, #tpu.memory_space<vmem>>, %arg2: memref<1x1x8xf32, #tpu.memory_space<vmem>>, %arg3: memref<9x4x32xbf16, #tpu.memory_space<vmem>>, %arg4: memref<1x32xf32, #tpu.memory_space<vmem>>, %arg5: memref<9x32x32xbf16, #tpu.memory_space<vmem>>, %arg6: memref<1x32xf32, #tpu.memory_space<vmem>>, %arg7: memref<16x32x64xbf16, #tpu.memory_space<vmem>>, %arg8: memref<8x64xbf16, #tpu.memory_space<vmem>>, %arg9: memref<1x64xf32, #tpu.memory_space<vmem>>, %arg10: memref<64x128xbf16, #tpu.memory_space<vmem>>, %arg11: memref<1x128xf32, #tpu.memory_space<vmem>>, %arg12: memref<1x1x128xf32, #tpu.memory_space<vmem>>, %arg13: memref<82x32xf32, #tpu.memory_space<vmem>>, %arg14: memref<64x32xf32, #tpu.memory_space<vmem>>) attributes {dimension_semantics = [#tpu.dimension_semantics<parallel>], iteration_bounds = array<i64: 6>, scalar_prefetch = 0 : i64, scratch_operands = 2 : i64, tpu.core_type = #tpu.core_type<tc>, window_params = [{transform_indices = @transform_0, window_bounds = array<i64: 1, 100, 4>}, {transform_indices = @transform_1, window_bounds = array<i64: 1, 1, 8>}, {pipeline_mode = #tpu.pipeline_mode<synchronous>, transform_indices = @transform_2, window_bounds = array<i64: 9, 4, 32>}, {pipeline_mode = #tpu.pipeline_mode<synchronous>, transform_indices = @transform_3, window_bounds = array<i64: 1, 32>}, {pipeline_mode = #tpu.pipeline_mode<synchronous>, transform_indices = @transform_4, window_bounds = array<i64: 9, 32, 32>}, {pipeline_mode = #tpu.pipeline_mode<synchronous>, transform_indices = @transform_5, window_bounds = array<i64: 1, 32>}, {pipeline_mode = #tpu.pipeline_mode<synchronous>, transform_indices = @transform_6, window_bounds = array<i64: 16, 32, 64>}, {pipeline_mode = #tpu.pipeline_mode<synchronous>, transform_indices = @transform_7, window_bounds = array<i64: 8, 64>}, {pipeline_mode = #tpu.pipeline_mode<synchronous>, transform_indices = @transform_8, window_bounds = array<i64: 1, 64>}, {pipeline_mode = #tpu.pipeline_mode<synchronous>, transform_indices = @transform_9, window_bounds = array<i64: 64, 128>}, {pipeline_mode = #tpu.pipeline_mode<synchronous>, transform_indices = @transform_10, window_bounds = array<i64: 1, 128>}, {transform_indices = @transform_11, window_bounds = array<i64: 1, 1, 128>}]} {
    %cst = arith.constant 0.000000e+00 : f32
    %0 = vector.broadcast %cst : f32 to vector<82x32xf32>
    %c0 = arith.constant 0 : index
    %c0_0 = arith.constant 0 : index
    %c0_1 = arith.constant 0 : index
    %1 = vector.load %arg1[%c0, %c0_0, %c0_1] : memref<1x100x4xf32, #tpu.memory_space<vmem>>, vector<1x82x4xf32>
    %2 = vector.shape_cast %1 : vector<1x82x4xf32> to vector<82x4xf32>
    %3 = arith.truncf %2 : vector<82x4xf32> to vector<82x4xbf16>
    %c0_2 = arith.constant 0 : index
    %c0_3 = arith.constant 0 : index
    %c0_4 = arith.constant 0 : index
    %4 = vector.load %arg3[%c0_2, %c0_3, %c0_4] : memref<9x4x32xbf16, #tpu.memory_space<vmem>>, vector<1x4x32xbf16>
    %5 = vector.shape_cast %4 : vector<1x4x32xbf16> to vector<4x32xbf16>
    %cst_5 = arith.constant dense<0.000000e+00> : vector<82x32xf32>
    %6 = tpu.matmul %3, %5, %cst_5 {dimension_numbers = #tpu.dot_dimension_numbers<[1], [0], [0], [1], [0, 0, 1, 1], [], []>} : vector<82x4xbf16>, vector<4x32xbf16>, vector<82x32xf32> -> vector<82x32xf32>
    %7 = arith.addf %0, %6 : vector<82x32xf32>
    %c0_6 = arith.constant 0 : index
    %c1 = arith.constant 1 : index
    %c0_7 = arith.constant 0 : index
    %8 = vector.load %arg1[%c0_6, %c1, %c0_7] : memref<1x100x4xf32, #tpu.memory_space<vmem>>, vector<1x82x4xf32>
    %9 = vector.shape_cast %8 : vector<1x82x4xf32> to vector<82x4xf32>
    %10 = arith.truncf %9 : vector<82x4xf32> to vector<82x4xbf16>
    %c1_8 = arith.constant 1 : index
    %c0_9 = arith.constant 0 : index
    %c0_10 = arith.constant 0 : index
    %11 = vector.load %arg3[%c1_8, %c0_9, %c0_10] : memref<9x4x32xbf16, #tpu.memory_space<vmem>>, vector<1x4x32xbf16>
    %12 = vector.shape_cast %11 : vector<1x4x32xbf16> to vector<4x32xbf16>
    %cst_11 = arith.constant dense<0.000000e+00> : vector<82x32xf32>
    %13 = tpu.matmul %10, %12, %cst_11 {dimension_numbers = #tpu.dot_dimension_numbers<[1], [0], [0], [1], [0, 0, 1, 1], [], []>} : vector<82x4xbf16>, vector<4x32xbf16>, vector<82x32xf32> -> vector<82x32xf32>
    %14 = arith.addf %7, %13 : vector<82x32xf32>
    %c0_12 = arith.constant 0 : index
    %c2 = arith.constant 2 : index
    %c0_13 = arith.constant 0 : index
    %15 = vector.load %arg1[%c0_12, %c2, %c0_13] : memref<1x100x4xf32, #tpu.memory_space<vmem>>, vector<1x82x4xf32>
    %16 = vector.shape_cast %15 : vector<1x82x4xf32> to vector<82x4xf32>
    %17 = arith.truncf %16 : vector<82x4xf32> to vector<82x4xbf16>
    %c2_14 = arith.constant 2 : index
    %c0_15 = arith.constant 0 : index
    %c0_16 = arith.constant 0 : index
    %18 = vector.load %arg3[%c2_14, %c0_15, %c0_16] : memref<9x4x32xbf16, #tpu.memory_space<vmem>>, vector<1x4x32xbf16>
    %19 = vector.shape_cast %18 : vector<1x4x32xbf16> to vector<4x32xbf16>
    %cst_17 = arith.constant dense<0.000000e+00> : vector<82x32xf32>
    %20 = tpu.matmul %17, %19, %cst_17 {dimension_numbers = #tpu.dot_dimension_numbers<[1], [0], [0], [1], [0, 0, 1, 1], [], []>} : vector<82x4xbf16>, vector<4x32xbf16>, vector<82x32xf32> -> vector<82x32xf32>
    %21 = arith.addf %14, %20 : vector<82x32xf32>
    %c0_18 = arith.constant 0 : index
    %c8 = arith.constant 8 : index
    %c0_19 = arith.constant 0 : index
    %22 = vector.load %arg1[%c0_18, %c8, %c0_19] : memref<1x100x4xf32, #tpu.memory_space<vmem>>, vector<1x82x4xf32>
    %23 = vector.shape_cast %22 : vector<1x82x4xf32> to vector<82x4xf32>
    %24 = arith.truncf %23 : vector<82x4xf32> to vector<82x4xbf16>
    %c3 = arith.constant 3 : index
    %c0_20 = arith.constant 0 : index
    %c0_21 = arith.constant 0 : index
    %25 = vector.load %arg3[%c3, %c0_20, %c0_21] : memref<9x4x32xbf16, #tpu.memory_space<vmem>>, vector<1x4x32xbf16>
    %26 = vector.shape_cast %25 : vector<1x4x32xbf16> to vector<4x32xbf16>
    %cst_22 = arith.constant dense<0.000000e+00> : vector<82x32xf32>
    %27 = tpu.matmul %24, %26, %cst_22 {dimension_numbers = #tpu.dot_dimension_numbers<[1], [0], [0], [1], [0, 0, 1, 1], [], []>} : vector<82x4xbf16>, vector<4x32xbf16>, vector<82x32xf32> -> vector<82x32xf32>
    %28 = arith.addf %21, %27 : vector<82x32xf32>
    %c0_23 = arith.constant 0 : index
    %c9 = arith.constant 9 : index
    %c0_24 = arith.constant 0 : index
    %29 = vector.load %arg1[%c0_23, %c9, %c0_24] : memref<1x100x4xf32, #tpu.memory_space<vmem>>, vector<1x82x4xf32>
    %30 = vector.shape_cast %29 : vector<1x82x4xf32> to vector<82x4xf32>
    %31 = arith.truncf %30 : vector<82x4xf32> to vector<82x4xbf16>
    %c4 = arith.constant 4 : index
    %c0_25 = arith.constant 0 : index
    %c0_26 = arith.constant 0 : index
    %32 = vector.load %arg3[%c4, %c0_25, %c0_26] : memref<9x4x32xbf16, #tpu.memory_space<vmem>>, vector<1x4x32xbf16>
    %33 = vector.shape_cast %32 : vector<1x4x32xbf16> to vector<4x32xbf16>
    %cst_27 = arith.constant dense<0.000000e+00> : vector<82x32xf32>
    %34 = tpu.matmul %31, %33, %cst_27 {dimension_numbers = #tpu.dot_dimension_numbers<[1], [0], [0], [1], [0, 0, 1, 1], [], []>} : vector<82x4xbf16>, vector<4x32xbf16>, vector<82x32xf32> -> vector<82x32xf32>
    %35 = arith.addf %28, %34 : vector<82x32xf32>
    %c0_28 = arith.constant 0 : index
    %c10 = arith.constant 10 : index
    %c0_29 = arith.constant 0 : index
    %36 = vector.load %arg1[%c0_28, %c10, %c0_29] : memref<1x100x4xf32, #tpu.memory_space<vmem>>, vector<1x82x4xf32>
    %37 = vector.shape_cast %36 : vector<1x82x4xf32> to vector<82x4xf32>
    %38 = arith.truncf %37 : vector<82x4xf32> to vector<82x4xbf16>
    %c5 = arith.constant 5 : index
    %c0_30 = arith.constant 0 : index
    %c0_31 = arith.constant 0 : index
    %39 = vector.load %arg3[%c5, %c0_30, %c0_31] : memref<9x4x32xbf16, #tpu.memory_space<vmem>>, vector<1x4x32xbf16>
    %40 = vector.shape_cast %39 : vector<1x4x32xbf16> to vector<4x32xbf16>
    %cst_32 = arith.constant dense<0.000000e+00> : vector<82x32xf32>
    %41 = tpu.matmul %38, %40, %cst_32 {dimension_numbers = #tpu.dot_dimension_numbers<[1], [0], [0], [1], [0, 0, 1, 1], [], []>} : vector<82x4xbf16>, vector<4x32xbf16>, vector<82x32xf32> -> vector<82x32xf32>
    %42 = arith.addf %35, %41 : vector<82x32xf32>
    %c0_33 = arith.constant 0 : index
    %c16 = arith.constant 16 : index
    %c0_34 = arith.constant 0 : index
    %43 = vector.load %arg1[%c0_33, %c16, %c0_34] : memref<1x100x4xf32, #tpu.memory_space<vmem>>, vector<1x82x4xf32>
    %44 = vector.shape_cast %43 : vector<1x82x4xf32> to vector<82x4xf32>
    %45 = arith.truncf %44 : vector<82x4xf32> to vector<82x4xbf16>
    %c6 = arith.constant 6 : index
    %c0_35 = arith.constant 0 : index
    %c0_36 = arith.constant 0 : index
    %46 = vector.load %arg3[%c6, %c0_35, %c0_36] : memref<9x4x32xbf16, #tpu.memory_space<vmem>>, vector<1x4x32xbf16>
    %47 = vector.shape_cast %46 : vector<1x4x32xbf16> to vector<4x32xbf16>
    %cst_37 = arith.constant dense<0.000000e+00> : vector<82x32xf32>
    %48 = tpu.matmul %45, %47, %cst_37 {dimension_numbers = #tpu.dot_dimension_numbers<[1], [0], [0], [1], [0, 0, 1, 1], [], []>} : vector<82x4xbf16>, vector<4x32xbf16>, vector<82x32xf32> -> vector<82x32xf32>
    %49 = arith.addf %42, %48 : vector<82x32xf32>
    %c0_38 = arith.constant 0 : index
    %c17 = arith.constant 17 : index
    %c0_39 = arith.constant 0 : index
    %50 = vector.load %arg1[%c0_38, %c17, %c0_39] : memref<1x100x4xf32, #tpu.memory_space<vmem>>, vector<1x82x4xf32>
    %51 = vector.shape_cast %50 : vector<1x82x4xf32> to vector<82x4xf32>
    %52 = arith.truncf %51 : vector<82x4xf32> to vector<82x4xbf16>
    %c7 = arith.constant 7 : index
    %c0_40 = arith.constant 0 : index
    %c0_41 = arith.constant 0 : index
    %53 = vector.load %arg3[%c7, %c0_40, %c0_41] : memref<9x4x32xbf16, #tpu.memory_space<vmem>>, vector<1x4x32xbf16>
    %54 = vector.shape_cast %53 : vector<1x4x32xbf16> to vector<4x32xbf16>
    %cst_42 = arith.constant dense<0.000000e+00> : vector<82x32xf32>
    %55 = tpu.matmul %52, %54, %cst_42 {dimension_numbers = #tpu.dot_dimension_numbers<[1], [0], [0], [1], [0, 0, 1, 1], [], []>} : vector<82x4xbf16>, vector<4x32xbf16>, vector<82x32xf32> -> vector<82x32xf32>
    %56 = arith.addf %49, %55 : vector<82x32xf32>
    %c0_43 = arith.constant 0 : index
    %c18 = arith.constant 18 : index
    %c0_44 = arith.constant 0 : index
    %57 = vector.load %arg1[%c0_43, %c18, %c0_44] : memref<1x100x4xf32, #tpu.memory_space<vmem>>, vector<1x82x4xf32>
    %58 = vector.shape_cast %57 : vector<1x82x4xf32> to vector<82x4xf32>
    %59 = arith.truncf %58 : vector<82x4xf32> to vector<82x4xbf16>
    %c8_45 = arith.constant 8 : index
    %c0_46 = arith.constant 0 : index
    %c0_47 = arith.constant 0 : index
    %60 = vector.load %arg3[%c8_45, %c0_46, %c0_47] : memref<9x4x32xbf16, #tpu.memory_space<vmem>>, vector<1x4x32xbf16>
    %61 = vector.shape_cast %60 : vector<1x4x32xbf16> to vector<4x32xbf16>
    %cst_48 = arith.constant dense<0.000000e+00> : vector<82x32xf32>
    %62 = tpu.matmul %59, %61, %cst_48 {dimension_numbers = #tpu.dot_dimension_numbers<[1], [0], [0], [1], [0, 0, 1, 1], [], []>} : vector<82x4xbf16>, vector<4x32xbf16>, vector<82x32xf32> -> vector<82x32xf32>
    %63 = arith.addf %56, %62 : vector<82x32xf32>
    %c0_49 = arith.constant 0 : index
    %c0_50 = arith.constant 0 : index
    %64 = vector.load %arg4[%c0_49, %c0_50] : memref<1x32xf32, #tpu.memory_space<vmem>>, vector<1x32xf32>
    %65 = vector.broadcast %64 : vector<1x32xf32> to vector<82x32xf32>
    %66 = arith.addf %63, %65 : vector<82x32xf32>
    %cst_51 = arith.constant 0.000000e+00 : f32
    %67 = vector.broadcast %cst_51 : f32 to vector<82x32xf32>
    %68 = arith.maximumf %66, %67 : vector<82x32xf32>
    %c0_52 = arith.constant 0 : index
    %c0_53 = arith.constant 0 : index
    %69 = vector.load %arg13[%c0_52, %c0_53] : memref<82x32xf32, #tpu.memory_space<vmem>>, vector<82x32xf32>
    tpu.vector_store %arg13[%c0_52, %c0_53], %68 {strides = array<i32>} : memref<82x32xf32, #tpu.memory_space<vmem>>, vector<82x32xf32>,
    %cst_54 = arith.constant 0.000000e+00 : f32
    %70 = vector.broadcast %cst_54 : f32 to vector<64x32xf32>
    %c0_55 = arith.constant 0 : index
    %c0_56 = arith.constant 0 : index
    %71 = vector.load %arg13[%c0_55, %c0_56] : memref<82x32xf32, #tpu.memory_space<vmem>>, vector<64x32xf32>
    %72 = arith.truncf %71 : vector<64x32xf32> to vector<64x32xbf16>
    %c0_57 = arith.constant 0 : index
    %c0_58 = arith.constant 0 : index
    %c0_59 = arith.constant 0 : index
    %73 = vector.load %arg5[%c0_57, %c0_58, %c0_59] : memref<9x32x32xbf16, #tpu.memory_space<vmem>>, vector<1x32x32xbf16>
    %74 = vector.shape_cast %73 : vector<1x32x32xbf16> to vector<32x32xbf16>
    %cst_60 = arith.constant dense<0.000000e+00> : vector<64x32xf32>
    %75 = tpu.matmul %72, %74, %cst_60 {dimension_numbers = #tpu.dot_dimension_numbers<[1], [0], [0], [1], [0, 0, 1, 1], [], []>} : vector<64x32xbf16>, vector<32x32xbf16>, vector<64x32xf32> -> vector<64x32xf32>
    %76 = arith.addf %70, %75 : vector<64x32xf32>
    %c1_61 = arith.constant 1 : index
    %c0_62 = arith.constant 0 : index
    %77 = vector.load %arg13[%c1_61, %c0_62] : memref<82x32xf32, #tpu.memory_space<vmem>>, vector<64x32xf32>
    %78 = arith.truncf %77 : vector<64x32xf32> to vector<64x32xbf16>
    %c1_63 = arith.constant 1 : index
    %c0_64 = arith.constant 0 : index
    %c0_65 = arith.constant 0 : index
    %79 = vector.load %arg5[%c1_63, %c0_64, %c0_65] : memref<9x32x32xbf16, #tpu.memory_space<vmem>>, vector<1x32x32xbf16>
    %80 = vector.shape_cast %79 : vector<1x32x32xbf16> to vector<32x32xbf16>
    %cst_66 = arith.constant dense<0.000000e+00> : vector<64x32xf32>
    %81 = tpu.matmul %78, %80, %cst_66 {dimension_numbers = #tpu.dot_dimension_numbers<[1], [0], [0], [1], [0, 0, 1, 1], [], []>} : vector<64x32xbf16>, vector<32x32xbf16>, vector<64x32xf32> -> vector<64x32xf32>
    %82 = arith.addf %76, %81 : vector<64x32xf32>
    %c2_67 = arith.constant 2 : index
    %c0_68 = arith.constant 0 : index
    %83 = vector.load %arg13[%c2_67, %c0_68] : memref<82x32xf32, #tpu.memory_space<vmem>>, vector<64x32xf32>
    %84 = arith.truncf %83 : vector<64x32xf32> to vector<64x32xbf16>
    %c2_69 = arith.constant 2 : index
    %c0_70 = arith.constant 0 : index
    %c0_71 = arith.constant 0 : index
    %85 = vector.load %arg5[%c2_69, %c0_70, %c0_71] : memref<9x32x32xbf16, #tpu.memory_space<vmem>>, vector<1x32x32xbf16>
    %86 = vector.shape_cast %85 : vector<1x32x32xbf16> to vector<32x32xbf16>
    %cst_72 = arith.constant dense<0.000000e+00> : vector<64x32xf32>
    %87 = tpu.matmul %84, %86, %cst_72 {dimension_numbers = #tpu.dot_dimension_numbers<[1], [0], [0], [1], [0, 0, 1, 1], [], []>} : vector<64x32xbf16>, vector<32x32xbf16>, vector<64x32xf32> -> vector<64x32xf32>
    %88 = arith.addf %82, %87 : vector<64x32xf32>
    %c8_73 = arith.constant 8 : index
    %c0_74 = arith.constant 0 : index
    %89 = vector.load %arg13[%c8_73, %c0_74] : memref<82x32xf32, #tpu.memory_space<vmem>>, vector<64x32xf32>
    %90 = arith.truncf %89 : vector<64x32xf32> to vector<64x32xbf16>
    %c3_75 = arith.constant 3 : index
    %c0_76 = arith.constant 0 : index
    %c0_77 = arith.constant 0 : index
    %91 = vector.load %arg5[%c3_75, %c0_76, %c0_77] : memref<9x32x32xbf16, #tpu.memory_space<vmem>>, vector<1x32x32xbf16>
    %92 = vector.shape_cast %91 : vector<1x32x32xbf16> to vector<32x32xbf16>
    %cst_78 = arith.constant dense<0.000000e+00> : vector<64x32xf32>
    %93 = tpu.matmul %90, %92, %cst_78 {dimension_numbers = #tpu.dot_dimension_numbers<[1], [0], [0], [1], [0, 0, 1, 1], [], []>} : vector<64x32xbf16>, vector<32x32xbf16>, vector<64x32xf32> -> vector<64x32xf32>
    %94 = arith.addf %88, %93 : vector<64x32xf32>
    %c9_79 = arith.constant 9 : index
    %c0_80 = arith.constant 0 : index
    %95 = vector.load %arg13[%c9_79, %c0_80] : memref<82x32xf32, #tpu.memory_space<vmem>>, vector<64x32xf32>
    %96 = arith.truncf %95 : vector<64x32xf32> to vector<64x32xbf16>
    %c4_81 = arith.constant 4 : index
    %c0_82 = arith.constant 0 : index
    %c0_83 = arith.constant 0 : index
    %97 = vector.load %arg5[%c4_81, %c0_82, %c0_83] : memref<9x32x32xbf16, #tpu.memory_space<vmem>>, vector<1x32x32xbf16>
    %98 = vector.shape_cast %97 : vector<1x32x32xbf16> to vector<32x32xbf16>
    %cst_84 = arith.constant dense<0.000000e+00> : vector<64x32xf32>
    %99 = tpu.matmul %96, %98, %cst_84 {dimension_numbers = #tpu.dot_dimension_numbers<[1], [0], [0], [1], [0, 0, 1, 1], [], []>} : vector<64x32xbf16>, vector<32x32xbf16>, vector<64x32xf32> -> vector<64x32xf32>
    %100 = arith.addf %94, %99 : vector<64x32xf32>
    %c10_85 = arith.constant 10 : index
    %c0_86 = arith.constant 0 : index
    %101 = vector.load %arg13[%c10_85, %c0_86] : memref<82x32xf32, #tpu.memory_space<vmem>>, vector<64x32xf32>
    %102 = arith.truncf %101 : vector<64x32xf32> to vector<64x32xbf16>
    %c5_87 = arith.constant 5 : index
    %c0_88 = arith.constant 0 : index
    %c0_89 = arith.constant 0 : index
    %103 = vector.load %arg5[%c5_87, %c0_88, %c0_89] : memref<9x32x32xbf16, #tpu.memory_space<vmem>>, vector<1x32x32xbf16>
    %104 = vector.shape_cast %103 : vector<1x32x32xbf16> to vector<32x32xbf16>
    %cst_90 = arith.constant dense<0.000000e+00> : vector<64x32xf32>
    %105 = tpu.matmul %102, %104, %cst_90 {dimension_numbers = #tpu.dot_dimension_numbers<[1], [0], [0], [1], [0, 0, 1, 1], [], []>} : vector<64x32xbf16>, vector<32x32xbf16>, vector<64x32xf32> -> vector<64x32xf32>
    %106 = arith.addf %100, %105 : vector<64x32xf32>
    %c16_91 = arith.constant 16 : index
    %c0_92 = arith.constant 0 : index
    %107 = vector.load %arg13[%c16_91, %c0_92] : memref<82x32xf32, #tpu.memory_space<vmem>>, vector<64x32xf32>
    %108 = arith.truncf %107 : vector<64x32xf32> to vector<64x32xbf16>
    %c6_93 = arith.constant 6 : index
    %c0_94 = arith.constant 0 : index
    %c0_95 = arith.constant 0 : index
    %109 = vector.load %arg5[%c6_93, %c0_94, %c0_95] : memref<9x32x32xbf16, #tpu.memory_space<vmem>>, vector<1x32x32xbf16>
    %110 = vector.shape_cast %109 : vector<1x32x32xbf16> to vector<32x32xbf16>
    %cst_96 = arith.constant dense<0.000000e+00> : vector<64x32xf32>
    %111 = tpu.matmul %108, %110, %cst_96 {dimension_numbers = #tpu.dot_dimension_numbers<[1], [0], [0], [1], [0, 0, 1, 1], [], []>} : vector<64x32xbf16>, vector<32x32xbf16>, vector<64x32xf32> -> vector<64x32xf32>
    %112 = arith.addf %106, %111 : vector<64x32xf32>
    %c17_97 = arith.constant 17 : index
    %c0_98 = arith.constant 0 : index
    %113 = vector.load %arg13[%c17_97, %c0_98] : memref<82x32xf32, #tpu.memory_space<vmem>>, vector<64x32xf32>
    %114 = arith.truncf %113 : vector<64x32xf32> to vector<64x32xbf16>
    %c7_99 = arith.constant 7 : index
    %c0_100 = arith.constant 0 : index
    %c0_101 = arith.constant 0 : index
    %115 = vector.load %arg5[%c7_99, %c0_100, %c0_101] : memref<9x32x32xbf16, #tpu.memory_space<vmem>>, vector<1x32x32xbf16>
    %116 = vector.shape_cast %115 : vector<1x32x32xbf16> to vector<32x32xbf16>
    %cst_102 = arith.constant dense<0.000000e+00> : vector<64x32xf32>
    %117 = tpu.matmul %114, %116, %cst_102 {dimension_numbers = #tpu.dot_dimension_numbers<[1], [0], [0], [1], [0, 0, 1, 1], [], []>} : vector<64x32xbf16>, vector<32x32xbf16>, vector<64x32xf32> -> vector<64x32xf32>
    %118 = arith.addf %112, %117 : vector<64x32xf32>
    %c18_103 = arith.constant 18 : index
    %c0_104 = arith.constant 0 : index
    %119 = vector.load %arg13[%c18_103, %c0_104] : memref<82x32xf32, #tpu.memory_space<vmem>>, vector<64x32xf32>
    %120 = arith.truncf %119 : vector<64x32xf32> to vector<64x32xbf16>
    %c8_105 = arith.constant 8 : index
    %c0_106 = arith.constant 0 : index
    %c0_107 = arith.constant 0 : index
    %121 = vector.load %arg5[%c8_105, %c0_106, %c0_107] : memref<9x32x32xbf16, #tpu.memory_space<vmem>>, vector<1x32x32xbf16>
    %122 = vector.shape_cast %121 : vector<1x32x32xbf16> to vector<32x32xbf16>
    %cst_108 = arith.constant dense<0.000000e+00> : vector<64x32xf32>
    %123 = tpu.matmul %120, %122, %cst_108 {dimension_numbers = #tpu.dot_dimension_numbers<[1], [0], [0], [1], [0, 0, 1, 1], [], []>} : vector<64x32xbf16>, vector<32x32xbf16>, vector<64x32xf32> -> vector<64x32xf32>
    %124 = arith.addf %118, %123 : vector<64x32xf32>
    %c0_109 = arith.constant 0 : index
    %c0_110 = arith.constant 0 : index
    %125 = vector.load %arg6[%c0_109, %c0_110] : memref<1x32xf32, #tpu.memory_space<vmem>>, vector<1x32xf32>
    %126 = vector.broadcast %125 : vector<1x32xf32> to vector<64x32xf32>
    %127 = arith.addf %124, %126 : vector<64x32xf32>
    %cst_111 = arith.constant 0.000000e+00 : f32
    %128 = vector.broadcast %cst_111 : f32 to vector<64x32xf32>
    %129 = arith.maximumf %127, %128 : vector<64x32xf32>
    %c0_112 = arith.constant 0 : index
    %c0_113 = arith.constant 0 : index
    %130 = vector.load %arg14[%c0_112, %c0_113] : memref<64x32xf32, #tpu.memory_space<vmem>>, vector<64x32xf32>
    tpu.vector_store %arg14[%c0_112, %c0_113], %129 {strides = array<i32>} : memref<64x32xf32, #tpu.memory_space<vmem>>, vector<64x32xf32>,
    %c0_114 = arith.constant 0 : index
    %c0_115 = arith.constant 0 : index
    %c0_116 = arith.constant 0 : index
    %131 = vector.load %arg2[%c0_114, %c0_115, %c0_116] : memref<1x1x8xf32, #tpu.memory_space<vmem>>, vector<1x1x8xf32>
    %132 = vector.shape_cast %131 : vector<1x1x8xf32> to vector<1x8xf32>
    %133 = arith.truncf %132 : vector<1x8xf32> to vector<1x8xbf16>
    %c0_117 = arith.constant 0 : index
    %c0_118 = arith.constant 0 : index
    %134 = vector.load %arg8[%c0_117, %c0_118] : memref<8x64xbf16, #tpu.memory_space<vmem>>, vector<8x64xbf16>
    %cst_119 = arith.constant dense<0.000000e+00> : vector<1x64xf32>
    %135 = tpu.matmul %133, %134, %cst_119 {dimension_numbers = #tpu.dot_dimension_numbers<[1], [0], [0], [1], [0, 0, 1, 1], [], []>} : vector<1x8xbf16>, vector<8x64xbf16>, vector<1x64xf32> -> vector<1x64xf32>
    %c0_120 = arith.constant 0 : index
    %c0_121 = arith.constant 0 : index
    %136 = vector.load %arg14[%c0_120, %c0_121] : memref<64x32xf32, #tpu.memory_space<vmem>>, vector<1x32xf32>
    %137 = arith.truncf %136 : vector<1x32xf32> to vector<1x32xbf16>
    %c0_122 = arith.constant 0 : index
    %c0_123 = arith.constant 0 : index
    %c0_124 = arith.constant 0 : index
    %138 = vector.load %arg7[%c0_122, %c0_123, %c0_124] : memref<16x32x64xbf16, #tpu.memory_space<vmem>>, vector<1x32x64xbf16>
    %139 = vector.shape_cast %138 : vector<1x32x64xbf16> to vector<32x64xbf16>
    %cst_125 = arith.constant dense<0.000000e+00> : vector<1x64xf32>
    %140 = tpu.matmul %137, %139, %cst_125 {dimension_numbers = #tpu.dot_dimension_numbers<[1], [0], [0], [1], [0, 0, 1, 1], [], []>} : vector<1x32xbf16>, vector<32x64xbf16>, vector<1x64xf32> -> vector<1x64xf32>
    %141 = arith.addf %135, %140 : vector<1x64xf32>
    %c1_126 = arith.constant 1 : index
    %c0_127 = arith.constant 0 : index
    %142 = vector.load %arg14[%c1_126, %c0_127] : memref<64x32xf32, #tpu.memory_space<vmem>>, vector<1x32xf32>
    %143 = arith.truncf %142 : vector<1x32xf32> to vector<1x32xbf16>
    %c1_128 = arith.constant 1 : index
    %c0_129 = arith.constant 0 : index
    %c0_130 = arith.constant 0 : index
    %144 = vector.load %arg7[%c1_128, %c0_129, %c0_130] : memref<16x32x64xbf16, #tpu.memory_space<vmem>>, vector<1x32x64xbf16>
    %145 = vector.shape_cast %144 : vector<1x32x64xbf16> to vector<32x64xbf16>
    %cst_131 = arith.constant dense<0.000000e+00> : vector<1x64xf32>
    %146 = tpu.matmul %143, %145, %cst_131 {dimension_numbers = #tpu.dot_dimension_numbers<[1], [0], [0], [1], [0, 0, 1, 1], [], []>} : vector<1x32xbf16>, vector<32x64xbf16>, vector<1x64xf32> -> vector<1x64xf32>
    %147 = arith.addf %141, %146 : vector<1x64xf32>
    %c2_132 = arith.constant 2 : index
    %c0_133 = arith.constant 0 : index
    %148 = vector.load %arg14[%c2_132, %c0_133] : memref<64x32xf32, #tpu.memory_space<vmem>>, vector<1x32xf32>
    %149 = arith.truncf %148 : vector<1x32xf32> to vector<1x32xbf16>
    %c2_134 = arith.constant 2 : index
    %c0_135 = arith.constant 0 : index
    %c0_136 = arith.constant 0 : index
    %150 = vector.load %arg7[%c2_134, %c0_135, %c0_136] : memref<16x32x64xbf16, #tpu.memory_space<vmem>>, vector<1x32x64xbf16>
    %151 = vector.shape_cast %150 : vector<1x32x64xbf16> to vector<32x64xbf16>
    %cst_137 = arith.constant dense<0.000000e+00> : vector<1x64xf32>
    %152 = tpu.matmul %149, %151, %cst_137 {dimension_numbers = #tpu.dot_dimension_numbers<[1], [0], [0], [1], [0, 0, 1, 1], [], []>} : vector<1x32xbf16>, vector<32x64xbf16>, vector<1x64xf32> -> vector<1x64xf32>
    %153 = arith.addf %147, %152 : vector<1x64xf32>
    %c3_138 = arith.constant 3 : index
    %c0_139 = arith.constant 0 : index
    %154 = vector.load %arg14[%c3_138, %c0_139] : memref<64x32xf32, #tpu.memory_space<vmem>>, vector<1x32xf32>
    %155 = arith.truncf %154 : vector<1x32xf32> to vector<1x32xbf16>
    %c3_140 = arith.constant 3 : index
    %c0_141 = arith.constant 0 : index
    %c0_142 = arith.constant 0 : index
    %156 = vector.load %arg7[%c3_140, %c0_141, %c0_142] : memref<16x32x64xbf16, #tpu.memory_space<vmem>>, vector<1x32x64xbf16>
    %157 = vector.shape_cast %156 : vector<1x32x64xbf16> to vector<32x64xbf16>
    %cst_143 = arith.constant dense<0.000000e+00> : vector<1x64xf32>
    %158 = tpu.matmul %155, %157, %cst_143 {dimension_numbers = #tpu.dot_dimension_numbers<[1], [0], [0], [1], [0, 0, 1, 1], [], []>} : vector<1x32xbf16>, vector<32x64xbf16>, vector<1x64xf32> -> vector<1x64xf32>
    %159 = arith.addf %153, %158 : vector<1x64xf32>
    %c8_144 = arith.constant 8 : index
    %c0_145 = arith.constant 0 : index
    %160 = vector.load %arg14[%c8_144, %c0_145] : memref<64x32xf32, #tpu.memory_space<vmem>>, vector<1x32xf32>
    %161 = arith.truncf %160 : vector<1x32xf32> to vector<1x32xbf16>
    %c4_146 = arith.constant 4 : index
    %c0_147 = arith.constant 0 : index
    %c0_148 = arith.constant 0 : index
    %162 = vector.load %arg7[%c4_146, %c0_147, %c0_148] : memref<16x32x64xbf16, #tpu.memory_space<vmem>>, vector<1x32x64xbf16>
    %163 = vector.shape_cast %162 : vector<1x32x64xbf16> to vector<32x64xbf16>
    %cst_149 = arith.constant dense<0.000000e+00> : vector<1x64xf32>
    %164 = tpu.matmul %161, %163, %cst_149 {dimension_numbers = #tpu.dot_dimension_numbers<[1], [0], [0], [1], [0, 0, 1, 1], [], []>} : vector<1x32xbf16>, vector<32x64xbf16>, vector<1x64xf32> -> vector<1x64xf32>
    %165 = arith.addf %159, %164 : vector<1x64xf32>
    %c9_150 = arith.constant 9 : index
    %c0_151 = arith.constant 0 : index
    %166 = vector.load %arg14[%c9_150, %c0_151] : memref<64x32xf32, #tpu.memory_space<vmem>>, vector<1x32xf32>
    %167 = arith.truncf %166 : vector<1x32xf32> to vector<1x32xbf16>
    %c5_152 = arith.constant 5 : index
    %c0_153 = arith.constant 0 : index
    %c0_154 = arith.constant 0 : index
    %168 = vector.load %arg7[%c5_152, %c0_153, %c0_154] : memref<16x32x64xbf16, #tpu.memory_space<vmem>>, vector<1x32x64xbf16>
    %169 = vector.shape_cast %168 : vector<1x32x64xbf16> to vector<32x64xbf16>
    %cst_155 = arith.constant dense<0.000000e+00> : vector<1x64xf32>
    %170 = tpu.matmul %167, %169, %cst_155 {dimension_numbers = #tpu.dot_dimension_numbers<[1], [0], [0], [1], [0, 0, 1, 1], [], []>} : vector<1x32xbf16>, vector<32x64xbf16>, vector<1x64xf32> -> vector<1x64xf32>
    %171 = arith.addf %165, %170 : vector<1x64xf32>
    %c10_156 = arith.constant 10 : index
    %c0_157 = arith.constant 0 : index
    %172 = vector.load %arg14[%c10_156, %c0_157] : memref<64x32xf32, #tpu.memory_space<vmem>>, vector<1x32xf32>
    %173 = arith.truncf %172 : vector<1x32xf32> to vector<1x32xbf16>
    %c6_158 = arith.constant 6 : index
    %c0_159 = arith.constant 0 : index
    %c0_160 = arith.constant 0 : index
    %174 = vector.load %arg7[%c6_158, %c0_159, %c0_160] : memref<16x32x64xbf16, #tpu.memory_space<vmem>>, vector<1x32x64xbf16>
    %175 = vector.shape_cast %174 : vector<1x32x64xbf16> to vector<32x64xbf16>
    %cst_161 = arith.constant dense<0.000000e+00> : vector<1x64xf32>
    %176 = tpu.matmul %173, %175, %cst_161 {dimension_numbers = #tpu.dot_dimension_numbers<[1], [0], [0], [1], [0, 0, 1, 1], [], []>} : vector<1x32xbf16>, vector<32x64xbf16>, vector<1x64xf32> -> vector<1x64xf32>
    %177 = arith.addf %171, %176 : vector<1x64xf32>
    %c11 = arith.constant 11 : index
    %c0_162 = arith.constant 0 : index
    %178 = vector.load %arg14[%c11, %c0_162] : memref<64x32xf32, #tpu.memory_space<vmem>>, vector<1x32xf32>
    %179 = arith.truncf %178 : vector<1x32xf32> to vector<1x32xbf16>
    %c7_163 = arith.constant 7 : index
    %c0_164 = arith.constant 0 : index
    %c0_165 = arith.constant 0 : index
    %180 = vector.load %arg7[%c7_163, %c0_164, %c0_165] : memref<16x32x64xbf16, #tpu.memory_space<vmem>>, vector<1x32x64xbf16>
    %181 = vector.shape_cast %180 : vector<1x32x64xbf16> to vector<32x64xbf16>
    %cst_166 = arith.constant dense<0.000000e+00> : vector<1x64xf32>
    %182 = tpu.matmul %179, %181, %cst_166 {dimension_numbers = #tpu.dot_dimension_numbers<[1], [0], [0], [1], [0, 0, 1, 1], [], []>} : vector<1x32xbf16>, vector<32x64xbf16>, vector<1x64xf32> -> vector<1x64xf32>
    %183 = arith.addf %177, %182 : vector<1x64xf32>
    %c16_167 = arith.constant 16 : index
    %c0_168 = arith.constant 0 : index
    %184 = vector.load %arg14[%c16_167, %c0_168] : memref<64x32xf32, #tpu.memory_space<vmem>>, vector<1x32xf32>
    %185 = arith.truncf %184 : vector<1x32xf32> to vector<1x32xbf16>
    %c8_169 = arith.constant 8 : index
    %c0_170 = arith.constant 0 : index
    %c0_171 = arith.constant 0 : index
    %186 = vector.load %arg7[%c8_169, %c0_170, %c0_171] : memref<16x32x64xbf16, #tpu.memory_space<vmem>>, vector<1x32x64xbf16>
    %187 = vector.shape_cast %186 : vector<1x32x64xbf16> to vector<32x64xbf16>
    %cst_172 = arith.constant dense<0.000000e+00> : vector<1x64xf32>
    %188 = tpu.matmul %185, %187, %cst_172 {dimension_numbers = #tpu.dot_dimension_numbers<[1], [0], [0], [1], [0, 0, 1, 1], [], []>} : vector<1x32xbf16>, vector<32x64xbf16>, vector<1x64xf32> -> vector<1x64xf32>
    %189 = arith.addf %183, %188 : vector<1x64xf32>
    %c17_173 = arith.constant 17 : index
    %c0_174 = arith.constant 0 : index
    %190 = vector.load %arg14[%c17_173, %c0_174] : memref<64x32xf32, #tpu.memory_space<vmem>>, vector<1x32xf32>
    %191 = arith.truncf %190 : vector<1x32xf32> to vector<1x32xbf16>
    %c9_175 = arith.constant 9 : index
    %c0_176 = arith.constant 0 : index
    %c0_177 = arith.constant 0 : index
    %192 = vector.load %arg7[%c9_175, %c0_176, %c0_177] : memref<16x32x64xbf16, #tpu.memory_space<vmem>>, vector<1x32x64xbf16>
    %193 = vector.shape_cast %192 : vector<1x32x64xbf16> to vector<32x64xbf16>
    %cst_178 = arith.constant dense<0.000000e+00> : vector<1x64xf32>
    %194 = tpu.matmul %191, %193, %cst_178 {dimension_numbers = #tpu.dot_dimension_numbers<[1], [0], [0], [1], [0, 0, 1, 1], [], []>} : vector<1x32xbf16>, vector<32x64xbf16>, vector<1x64xf32> -> vector<1x64xf32>
    %195 = arith.addf %189, %194 : vector<1x64xf32>
    %c18_179 = arith.constant 18 : index
    %c0_180 = arith.constant 0 : index
    %196 = vector.load %arg14[%c18_179, %c0_180] : memref<64x32xf32, #tpu.memory_space<vmem>>, vector<1x32xf32>
    %197 = arith.truncf %196 : vector<1x32xf32> to vector<1x32xbf16>
    %c10_181 = arith.constant 10 : index
    %c0_182 = arith.constant 0 : index
    %c0_183 = arith.constant 0 : index
    %198 = vector.load %arg7[%c10_181, %c0_182, %c0_183] : memref<16x32x64xbf16, #tpu.memory_space<vmem>>, vector<1x32x64xbf16>
    %199 = vector.shape_cast %198 : vector<1x32x64xbf16> to vector<32x64xbf16>
    %cst_184 = arith.constant dense<0.000000e+00> : vector<1x64xf32>
    %200 = tpu.matmul %197, %199, %cst_184 {dimension_numbers = #tpu.dot_dimension_numbers<[1], [0], [0], [1], [0, 0, 1, 1], [], []>} : vector<1x32xbf16>, vector<32x64xbf16>, vector<1x64xf32> -> vector<1x64xf32>
    %201 = arith.addf %195, %200 : vector<1x64xf32>
    %c19 = arith.constant 19 : index
    %c0_185 = arith.constant 0 : index
    %202 = vector.load %arg14[%c19, %c0_185] : memref<64x32xf32, #tpu.memory_space<vmem>>, vector<1x32xf32>
    %203 = arith.truncf %202 : vector<1x32xf32> to vector<1x32xbf16>
    %c11_186 = arith.constant 11 : index
    %c0_187 = arith.constant 0 : index
    %c0_188 = arith.constant 0 : index
    %204 = vector.load %arg7[%c11_186, %c0_187, %c0_188] : memref<16x32x64xbf16, #tpu.memory_space<vmem>>, vector<1x32x64xbf16>
    %205 = vector.shape_cast %204 : vector<1x32x64xbf16> to vector<32x64xbf16>
    %cst_189 = arith.constant dense<0.000000e+00> : vector<1x64xf32>
    %206 = tpu.matmul %203, %205, %cst_189 {dimension_numbers = #tpu.dot_dimension_numbers<[1], [0], [0], [1], [0, 0, 1, 1], [], []>} : vector<1x32xbf16>, vector<32x64xbf16>, vector<1x64xf32> -> vector<1x64xf32>
    %207 = arith.addf %201, %206 : vector<1x64xf32>
    %c24 = arith.constant 24 : index
    %c0_190 = arith.constant 0 : index
    %208 = vector.load %arg14[%c24, %c0_190] : memref<64x32xf32, #tpu.memory_space<vmem>>, vector<1x32xf32>
    %209 = arith.truncf %208 : vector<1x32xf32> to vector<1x32xbf16>
    %c12 = arith.constant 12 : index
    %c0_191 = arith.constant 0 : index
    %c0_192 = arith.constant 0 : index
    %210 = vector.load %arg7[%c12, %c0_191, %c0_192] : memref<16x32x64xbf16, #tpu.memory_space<vmem>>, vector<1x32x64xbf16>
    %211 = vector.shape_cast %210 : vector<1x32x64xbf16> to vector<32x64xbf16>
    %cst_193 = arith.constant dense<0.000000e+00> : vector<1x64xf32>
    %212 = tpu.matmul %209, %211, %cst_193 {dimension_numbers = #tpu.dot_dimension_numbers<[1], [0], [0], [1], [0, 0, 1, 1], [], []>} : vector<1x32xbf16>, vector<32x64xbf16>, vector<1x64xf32> -> vector<1x64xf32>
    %213 = arith.addf %207, %212 : vector<1x64xf32>
    %c25 = arith.constant 25 : index
    %c0_194 = arith.constant 0 : index
    %214 = vector.load %arg14[%c25, %c0_194] : memref<64x32xf32, #tpu.memory_space<vmem>>, vector<1x32xf32>
    %215 = arith.truncf %214 : vector<1x32xf32> to vector<1x32xbf16>
    %c13 = arith.constant 13 : index
    %c0_195 = arith.constant 0 : index
    %c0_196 = arith.constant 0 : index
    %216 = vector.load %arg7[%c13, %c0_195, %c0_196] : memref<16x32x64xbf16, #tpu.memory_space<vmem>>, vector<1x32x64xbf16>
    %217 = vector.shape_cast %216 : vector<1x32x64xbf16> to vector<32x64xbf16>
    %cst_197 = arith.constant dense<0.000000e+00> : vector<1x64xf32>
    %218 = tpu.matmul %215, %217, %cst_197 {dimension_numbers = #tpu.dot_dimension_numbers<[1], [0], [0], [1], [0, 0, 1, 1], [], []>} : vector<1x32xbf16>, vector<32x64xbf16>, vector<1x64xf32> -> vector<1x64xf32>
    %219 = arith.addf %213, %218 : vector<1x64xf32>
    %c26 = arith.constant 26 : index
    %c0_198 = arith.constant 0 : index
    %220 = vector.load %arg14[%c26, %c0_198] : memref<64x32xf32, #tpu.memory_space<vmem>>, vector<1x32xf32>
    %221 = arith.truncf %220 : vector<1x32xf32> to vector<1x32xbf16>
    %c14 = arith.constant 14 : index
    %c0_199 = arith.constant 0 : index
    %c0_200 = arith.constant 0 : index
    %222 = vector.load %arg7[%c14, %c0_199, %c0_200] : memref<16x32x64xbf16, #tpu.memory_space<vmem>>, vector<1x32x64xbf16>
    %223 = vector.shape_cast %222 : vector<1x32x64xbf16> to vector<32x64xbf16>
    %cst_201 = arith.constant dense<0.000000e+00> : vector<1x64xf32>
    %224 = tpu.matmul %221, %223, %cst_201 {dimension_numbers = #tpu.dot_dimension_numbers<[1], [0], [0], [1], [0, 0, 1, 1], [], []>} : vector<1x32xbf16>, vector<32x64xbf16>, vector<1x64xf32> -> vector<1x64xf32>
    %225 = arith.addf %219, %224 : vector<1x64xf32>
    %c27 = arith.constant 27 : index
    %c0_202 = arith.constant 0 : index
    %226 = vector.load %arg14[%c27, %c0_202] : memref<64x32xf32, #tpu.memory_space<vmem>>, vector<1x32xf32>
    %227 = arith.truncf %226 : vector<1x32xf32> to vector<1x32xbf16>
    %c15 = arith.constant 15 : index
    %c0_203 = arith.constant 0 : index
    %c0_204 = arith.constant 0 : index
    %228 = vector.load %arg7[%c15, %c0_203, %c0_204] : memref<16x32x64xbf16, #tpu.memory_space<vmem>>, vector<1x32x64xbf16>
    %229 = vector.shape_cast %228 : vector<1x32x64xbf16> to vector<32x64xbf16>
    %cst_205 = arith.constant dense<0.000000e+00> : vector<1x64xf32>
    %230 = tpu.matmul %227, %229, %cst_205 {dimension_numbers = #tpu.dot_dimension_numbers<[1], [0], [0], [1], [0, 0, 1, 1], [], []>} : vector<1x32xbf16>, vector<32x64xbf16>, vector<1x64xf32> -> vector<1x64xf32>
    %231 = arith.addf %225, %230 : vector<1x64xf32>
    %c0_206 = arith.constant 0 : index
    %c0_207 = arith.constant 0 : index
    %232 = vector.load %arg9[%c0_206, %c0_207] : memref<1x64xf32, #tpu.memory_space<vmem>>, vector<1x64xf32>
    %233 = arith.addf %231, %232 : vector<1x64xf32>
    %cst_208 = arith.constant 0.000000e+00 : f32
    %234 = vector.broadcast %cst_208 : f32 to vector<1x64xf32>
    %235 = arith.maximumf %233, %234 : vector<1x64xf32>
    %236 = arith.truncf %235 : vector<1x64xf32> to vector<1x64xbf16>
    %c0_209 = arith.constant 0 : index
    %c0_210 = arith.constant 0 : index
    %237 = vector.load %arg10[%c0_209, %c0_210] : memref<64x128xbf16, #tpu.memory_space<vmem>>, vector<64x128xbf16>
    %cst_211 = arith.constant dense<0.000000e+00> : vector<1x128xf32>
    %238 = tpu.matmul %236, %237, %cst_211 {dimension_numbers = #tpu.dot_dimension_numbers<[1], [0], [0], [1], [0, 0, 1, 1], [], []>} : vector<1x64xbf16>, vector<64x128xbf16>, vector<1x128xf32> -> vector<1x128xf32>
    %c0_212 = arith.constant 0 : index
    %c0_213 = arith.constant 0 : index
    %239 = vector.load %arg11[%c0_212, %c0_213] : memref<1x128xf32, #tpu.memory_space<vmem>>, vector<1x128xf32>
    %240 = arith.addf %238, %239 : vector<1x128xf32>
    %c0_214 = arith.constant 0 : index
    %c0_215 = arith.constant 0 : index
    %c0_216 = arith.constant 0 : index
    %241 = vector.load %arg12[%c0_214, %c0_215, %c0_216] : memref<1x1x128xf32, #tpu.memory_space<vmem>>, vector<1x1x128xf32>
    %242 = vector.shape_cast %241 : vector<1x1x128xf32> to vector<1x128xf32>
    %243 = vector.shape_cast %240 : vector<1x128xf32> to vector<1x1x128xf32>
    tpu.vector_store %arg12[%c0_214, %c0_215, %c0_216], %243 {strides = array<i32>} : memref<1x1x128xf32, #tpu.memory_space<vmem>>, vector<1x1x128xf32>,
    return
  }
  func.func @transform_0(%arg0: i32) -> (i32, i32, i32) {
    %c0_i32 = arith.constant 0 : i32
    %c0_i32_0 = arith.constant 0 : i32
    %c0_i32_1 = arith.constant 0 : i32
    return %arg0, %c0_i32, %c0_i32_0 : i32, i32, i32
  }
  func.func @transform_1(%arg0: i32) -> (i32, i32, i32) {
    %c0_i32 = arith.constant 0 : i32
    %c0_i32_0 = arith.constant 0 : i32
    %c0_i32_1 = arith.constant 0 : i32
    return %arg0, %c0_i32, %c0_i32_0 : i32, i32, i32
  }
  func.func @transform_2(%arg0: i32) -> (i32, i32, i32) {
    %c0_i32 = arith.constant 0 : i32
    %c0_i32_0 = arith.constant 0 : i32
    %c0_i32_1 = arith.constant 0 : i32
    %c0_i32_2 = arith.constant 0 : i32
    return %c0_i32, %c0_i32_0, %c0_i32_1 : i32, i32, i32
  }
  func.func @transform_3(%arg0: i32) -> (i32, i32) {
    %c0_i32 = arith.constant 0 : i32
    %c0_i32_0 = arith.constant 0 : i32
    %c0_i32_1 = arith.constant 0 : i32
    return %c0_i32, %c0_i32_0 : i32, i32
  }
  func.func @transform_4(%arg0: i32) -> (i32, i32, i32) {
    %c0_i32 = arith.constant 0 : i32
    %c0_i32_0 = arith.constant 0 : i32
    %c0_i32_1 = arith.constant 0 : i32
    %c0_i32_2 = arith.constant 0 : i32
    return %c0_i32, %c0_i32_0, %c0_i32_1 : i32, i32, i32
  }
  func.func @transform_5(%arg0: i32) -> (i32, i32) {
    %c0_i32 = arith.constant 0 : i32
    %c0_i32_0 = arith.constant 0 : i32
    %c0_i32_1 = arith.constant 0 : i32
    return %c0_i32, %c0_i32_0 : i32, i32
  }
  func.func @transform_6(%arg0: i32) -> (i32, i32, i32) {
    %c0_i32 = arith.constant 0 : i32
    %c0_i32_0 = arith.constant 0 : i32
    %c0_i32_1 = arith.constant 0 : i32
    %c0_i32_2 = arith.constant 0 : i32
    return %c0_i32, %c0_i32_0, %c0_i32_1 : i32, i32, i32
  }
  func.func @transform_7(%arg0: i32) -> (i32, i32) {
    %c0_i32 = arith.constant 0 : i32
    %c0_i32_0 = arith.constant 0 : i32
    %c0_i32_1 = arith.constant 0 : i32
    return %c0_i32, %c0_i32_0 : i32, i32
  }
  func.func @transform_8(%arg0: i32) -> (i32, i32) {
    %c0_i32 = arith.constant 0 : i32
    %c0_i32_0 = arith.constant 0 : i32
    %c0_i32_1 = arith.constant 0 : i32
    return %c0_i32, %c0_i32_0 : i32, i32
  }
  func.func @transform_9(%arg0: i32) -> (i32, i32) {
    %c0_i32 = arith.constant 0 : i32
    %c0_i32_0 = arith.constant 0 : i32
    %c0_i32_1 = arith.constant 0 : i32
    return %c0_i32, %c0_i32_0 : i32, i32
  }
  func.func @transform_10(%arg0: i32) -> (i32, i32) {
    %c0_i32 = arith.constant 0 : i32
    %c0_i32_0 = arith.constant 0 : i32
    %c0_i32_1 = arith.constant 0 : i32
    return %c0_i32, %c0_i32_0 : i32, i32
  }
  func.func @transform_11(%arg0: i32) -> (i32, i32, i32) {
    %c0_i32 = arith.constant 0 : i32
    %c0_i32_0 = arith.constant 0 : i32
    %c0_i32_1 = arith.constant 0 : i32
    return %arg0, %c0_i32, %c0_i32_0 : i32, i32, i32
  }
}

</mosaic_0001>

<llo_original>
// kernel: squeeze.1
$region0: #{squeeze.1}
  %s0 = inlined_call_operand.vmem [shape: f32[6,1,10], index: 0, kind: input, shape index: {}]
  %s1 = inlined_call_operand.vmem [shape: f32[2,3,5,2], index: 1, kind: output, shape index: {}]
  $region1: #{squeeze.1} parent=0
    #allocation0 [shape = 'u8[40960]{0}', space=vmem, size = 0xa000, scoped, tag = 'scoped mem for output reshape']
    %v2 = vld [vmem:[%s0] sm:$0xff]
    %vm3 = vcmask 23552
    %4 = vst.msk [vmem:[#allocation0] ss:$8 sm:$0xf] %vm3, %v2
    %5 = vst.msk [vmem:[#allocation0] ss:$8 sm:$0xf0] %vm3, %v2
    %s6 = scalar_lea.vmem %s0, 8
    %v7 = vld [vmem:[%s6] sm:$0x3]
    %vm8 = vcmask 23552
    %s9 = scalar_lea.vmem [#allocation0], 64
    %10 = vst.msk [vmem:[%s9] ss:$8 sm:$0x3] %vm8, %v7
    %v11 = vld [vmem:[%s0] sm:$0xff]
    %12 = vrot.lane.b32.xlu0 %v11, 125
    %v13 = vpop.permute.xlu0 %12
    %vm14 = vcmask 23552
    %s15 = scalar_lea.vmem [#allocation0], 1
    %16 = vst.msk [vmem:[%s15] ss:$8 sm:$0xf] %vm14, %v13
    %s17 = scalar_lea.vmem [#allocation0], 1
    %18 = vst.msk [vmem:[%s17] ss:$8 sm:$0xf0] %vm14, %v13
    %s19 = scalar_lea.vmem %s0, 8
    %v20 = vld [vmem:[%s19] sm:$0x3]
    %21 = vrot.lane.b32.xlu0 %v20, 125
    %v22 = vpop.permute.xlu0 %21
    %vm23 = vcmask 23552
    %s24 = scalar_lea.vmem [#allocation0], 65
    %25 = vst.msk [vmem:[%s24] ss:$8 sm:$0x3] %vm23, %v22
    %s27 = sshllo.u32 0, 2
    %v29 = vld [vmem:[#allocation0] sm:%s27]
    %s30 = sshllo.u32 0, 2
    %31 = vst [vmem:[%s1] sm:%s30] %v29
    %s32 = scalar_lea.vmem [#allocation0], 8
    %v33 = vld [vmem:[%s32] sm:%s27]
    %s34 = sshllo.u32 0, 2
    %s35 = scalar_lea.vmem %s1, 2
    %36 = vst [vmem:[%s35] sm:%s34] %v33
    %s37 = scalar_lea.vmem [#allocation0], 16
    %v38 = vld [vmem:[%s37] sm:%s27]
    %s39 = sshllo.u32 0, 2
    %s40 = smul.addr 2, 2
    %s41 = scalar_lea.vmem %s1, %s40
    %42 = vst [vmem:[%s41] sm:%s39] %v38
    %s43 = scalar_lea.vmem [#allocation0], 24
    %v44 = vld [vmem:[%s43] sm:%s27]
    %s45 = sshllo.u32 0, 2
    %s46 = smul.addr 2, 3
    %s47 = scalar_lea.vmem %s1, %s46
    %48 = vst [vmem:[%s47] sm:%s45] %v44
    %s49 = scalar_lea.vmem [#allocation0], 32
    %v50 = vld [vmem:[%s49] sm:%s27]
    %s51 = sshllo.u32 0, 2
    %s52 = smul.addr 2, 4
    %s53 = scalar_lea.vmem %s1, %s52
    %54 = vst [vmem:[%s53] sm:%s51] %v50
    %s55 = scalar_lea.vmem [#allocation0], 40
    %v56 = vld [vmem:[%s55] sm:%s27]
    %s57 = sshllo.u32 0, 2
    %s58 = smul.addr 2, 5
    %s59 = scalar_lea.vmem %s1, %s58
    %60 = vst [vmem:[%s59] sm:%s57] %v56
    %s61 = scalar_lea.vmem [#allocation0], 48
    %v62 = vld [vmem:[%s61] sm:%s27]
    %s63 = sshllo.u32 0, 2
    %s64 = smul.addr 2, 6
    %s65 = scalar_lea.vmem %s1, %s64
    %66 = vst [vmem:[%s65] sm:%s63] %v62
    %s67 = scalar_lea.vmem [#allocation0], 56
    %v68 = vld [vmem:[%s67] sm:%s27]
    %s69 = sshllo.u32 0, 2
    %s70 = smul.addr 2, 7
    %s71 = scalar_lea.vmem %s1, %s70
    %72 = vst [vmem:[%s71] sm:%s69] %v68
    %s73 = scalar_lea.vmem [#allocation0], 64
    %v74 = vld [vmem:[%s73] sm:%s27]
    %s75 = sshllo.u32 0, 2
    %s76 = smul.addr 2, 8
    %s77 = scalar_lea.vmem %s1, %s76
    %78 = vst [vmem:[%s77] sm:%s75] %v74
    %s79 = scalar_lea.vmem [#allocation0], 72
    %v80 = vld [vmem:[%s79] sm:%s27]
    %s81 = sshllo.u32 0, 2
    %s82 = smul.addr 2, 9
    %s83 = scalar_lea.vmem %s1, %s82
    %84 = vst [vmem:[%s83] sm:%s81] %v80

// kernel: maicnn_forward.1
$region0: #{maicnn_forward.1}
  #allocation0 [shape = 'u32[]', space=smem, size = 0x4, offset = 0x4, fixed_abs, tag = 'smem constant byte address 0x4 - core index']
  #allocation1 [shape = 'u32[144,128]{1,0:T(1,128)}', space=vmem, size = 0x12000, scoped, tag = 'internal scratch']
  #allocation2 [shape = 'f32[82,32]{1,0:T(8,128)}', space=vmem, size = 0xb000, scoped, tag = 'scratch operand']
  #allocation3 [shape = 'f32[64,32]{1,0:T(8,128)}', space=vmem, size = 0x8000, scoped, tag = 'scratch operand']
  %s0 = inlined_call_operand.vmem [shape: f32[6,100,4], index: 0, kind: input, shape index: {}]
  %s1 = inlined_call_operand.vmem [shape: f32[6,1,8], index: 1, kind: input, shape index: {}]
  %s2 = inlined_call_operand.vmem [shape: bf16[9,4,32], index: 2, kind: input, shape index: {}]
  %s3 = inlined_call_operand.vmem [shape: f32[1,32], index: 3, kind: input, shape index: {}]
  %s4 = inlined_call_operand.vmem [shape: bf16[9,32,32], index: 4, kind: input, shape index: {}]
  %s5 = inlined_call_operand.vmem [shape: f32[1,32], index: 5, kind: input, shape index: {}]
  %s6 = inlined_call_operand.vmem [shape: bf16[16,32,64], index: 6, kind: input, shape index: {}]
  %s7 = inlined_call_operand.vmem [shape: bf16[8,64], index: 7, kind: input, shape index: {}]
  %s8 = inlined_call_operand.vmem [shape: f32[1,64], index: 8, kind: input, shape index: {}]
  %s9 = inlined_call_operand.vmem [shape: bf16[64,128], index: 9, kind: input, shape index: {}]
  %s10 = inlined_call_operand.vmem [shape: f32[1,128], index: 10, kind: input, shape index: {}]
  %s11 = inlined_call_operand.vmem [shape: f32[6,1,128], index: 11, kind: output, shape index: {}]
  %s12 = sld [smem:[#allocation0]]
  $region77: #{maicnn_forward.1} parent=0
    _
  %s14 = ssub.s32 1, %s12
  %s15 = scalar_select 0, %s14, %s12
  loop: start=0, step=1, limit=8
  $region2: #{maicnn_forward.1} parent=0 // loop_pre_header
    _
  $region3: #{maicnn_forward.1} parent=0 // loop_header
    %s17 = sphi 0, %s21
    %p18 = scmp.ge.s32.totalorder %s17, 8
    %s27 = sphi 0, %s29
    %s30 = sphi 0, %s27
    %s31 = sphi 0, %s30
    %s47 = sphi 0, %s31
    %s53 = sphi 0, %s55
    %s56 = sphi 0, %s53
    %s57 = sphi 0, %s56
    %s73 = sphi 0, %s57
    %s77 = sphi 0, %s77
    %s79 = sphi 0, %s77
    %s80 = sphi 0, %s79
    %s94 = sphi 0, %s80
    %s98 = sphi 0, %s98
    %s100 = sphi 0, %s98
    %s101 = sphi 0, %s100
    %s115 = sphi 0, %s101
    %s119 = sphi 0, %s119
    %s121 = sphi 0, %s119
    %s122 = sphi 0, %s121
    %s136 = sphi 0, %s122
    %s140 = sphi 0, %s140
    %s142 = sphi 0, %s140
    %s143 = sphi 0, %s142
    %s157 = sphi 0, %s143
    %s161 = sphi 0, %s161
    %s163 = sphi 0, %s161
    %s164 = sphi 0, %s163
    %s178 = sphi 0, %s164
    %s182 = sphi 0, %s182
    %s184 = sphi 0, %s182
    %s185 = sphi 0, %s184
    %s199 = sphi 0, %s185
    %s203 = sphi 0, %s203
    %s205 = sphi 0, %s203
    %s206 = sphi 0, %s205
    %s220 = sphi 0, %s206
    %s224 = sphi 0, %s224
    %s226 = sphi 0, %s224
    %s227 = sphi 0, %s226
    %s241 = sphi 0, %s227
    %s245 = sphi 0, %s245
    %s247 = sphi 0, %s245
    %s248 = sphi 0, %s247
    %s262 = sphi 0, %s248
    %s268 = sphi 0, %s270
    %s271 = sphi 0, %s268
    %s272 = sphi 0, %s271
    %s288 = sphi 0, %s272
  $region4: #{maicnn_forward.1} parent=0 // loop_header_branch
    %20 = sbr.rel (%p18) target = $region8
  $region5: #{maicnn_forward.1} parent=0 // loop_body
    %s22 = ssub.s32 %s17, 1
    %s23 = ssub.s32 %s17, 2
    %s24 = sadd.s32 %s17, 1
    %s25 = ssub.s32 %s17, %s24
    %p26 = scmp.eq.s32.totalorder %s25, 0
    %s28 = sadd.s32 %s27, 1
    %s29 = scalar_select %p26, %s27, %s28
    %p32 = pneg %p26
    %p33 = scmp.eq.s32.totalorder %s17, 5
    %p34 = por %p32, %p33
    %p35 = scmp.ne.s32.totalorder %s27, %s30
    %p36 = scmp.eq.s32.totalorder %s17, 0
    %p37 = por %p35, %p36
    %p38 = scmp.ne.s32.totalorder %s27, %s30
    %p39 = scmp.eq.s32.totalorder %s22, 5
    %p40 = por %p38, %p39
    %p41 = scmp.ne.s32.totalorder %s30, %s31
    %p42 = scmp.eq.s32.totalorder %s22, 0
    %p43 = por %p41, %p42
    %p44 = scmp.ne.s32.totalorder %s30, %s31
    %p45 = scmp.eq.s32.totalorder %s23, 5
    %p46 = por %p44, %p45
    %p48 = scmp.ne.s32.totalorder %s31, %s47
    %p49 = scmp.eq.s32.totalorder %s23, 0
    %p50 = por %p48, %p49
    %s51 = ssub.s32 %s17, %s24
    %p52 = scmp.eq.s32.totalorder %s51, 0
    %s54 = sadd.s32 %s53, 1
    %s55 = scalar_select %p52, %s53, %s54
    %p58 = pneg %p52
    %p59 = scmp.eq.s32.totalorder %s17, 5
    %p60 = por %p58, %p59
    %p61 = scmp.ne.s32.totalorder %s53, %s56
    %p62 = scmp.eq.s32.totalorder %s17, 0
    %p63 = por %p61, %p62
    %p64 = scmp.ne.s32.totalorder %s53, %s56
    %p65 = scmp.eq.s32.totalorder %s22, 5
    %p66 = por %p64, %p65
    %p67 = scmp.ne.s32.totalorder %s56, %s57
    %p68 = scmp.eq.s32.totalorder %s22, 0
    %p69 = por %p67, %p68
    %p70 = scmp.ne.s32.totalorder %s56, %s57
    %p71 = scmp.eq.s32.totalorder %s23, 5
    %p72 = por %p70, %p71
    %p74 = scmp.ne.s32.totalorder %s57, %s73
    %p75 = scmp.eq.s32.totalorder %s23, 0
    %p76 = por %p74, %p75
    %s78 = sadd.s32 %s77, 1
    %p81 = scmp.eq.s32.totalorder %s17, 5
    %p82 = scmp.ne.s32.totalorder %s77, %s79
    %p83 = scmp.eq.s32.totalorder %s17, 0
    %p84 = por %p82, %p83
    %p85 = scmp.ne.s32.totalorder %s77, %s79
    %p86 = scmp.eq.s32.totalorder %s22, 5
    %p87 = por %p85, %p86
    %p88 = scmp.ne.s32.totalorder %s79, %s80
    %p89 = scmp.eq.s32.totalorder %s22, 0
    %p90 = por %p88, %p89
    %p91 = scmp.ne.s32.totalorder %s79, %s80
    %p92 = scmp.eq.s32.totalorder %s23, 5
    %p93 = por %p91, %p92
    %p95 = scmp.ne.s32.totalorder %s80, %s94
    %p96 = scmp.eq.s32.totalorder %s23, 0
    %p97 = por %p95, %p96
    %s99 = sadd.s32 %s98, 1
    %p102 = scmp.eq.s32.totalorder %s17, 5
    %p103 = scmp.ne.s32.totalorder %s98, %s100
    %p104 = scmp.eq.s32.totalorder %s17, 0
    %p105 = por %p103, %p104
    %p106 = scmp.ne.s32.totalorder %s98, %s100
    %p107 = scmp.eq.s32.totalorder %s22, 5
    %p108 = por %p106, %p107
    %p109 = scmp.ne.s32.totalorder %s100, %s101
    %p110 = scmp.eq.s32.totalorder %s22, 0
    %p111 = por %p109, %p110
    %p112 = scmp.ne.s32.totalorder %s100, %s101
    %p113 = scmp.eq.s32.totalorder %s23, 5
    %p114 = por %p112, %p113
    %p116 = scmp.ne.s32.totalorder %s101, %s115
    %p117 = scmp.eq.s32.totalorder %s23, 0
    %p118 = por %p116, %p117
    %s120 = sadd.s32 %s119, 1
    %p123 = scmp.eq.s32.totalorder %s17, 5
    %p124 = scmp.ne.s32.totalorder %s119, %s121
    %p125 = scmp.eq.s32.totalorder %s17, 0
    %p126 = por %p124, %p125
    %p127 = scmp.ne.s32.totalorder %s119, %s121
    %p128 = scmp.eq.s32.totalorder %s22, 5
    %p129 = por %p127, %p128
    %p130 = scmp.ne.s32.totalorder %s121, %s122
    %p131 = scmp.eq.s32.totalorder %s22, 0
    %p132 = por %p130, %p131
    %p133 = scmp.ne.s32.totalorder %s121, %s122
    %p134 = scmp.eq.s32.totalorder %s23, 5
    %p135 = por %p133, %p134
    %p137 = scmp.ne.s32.totalorder %s122, %s136
    %p138 = scmp.eq.s32.totalorder %s23, 0
    %p139 = por %p137, %p138
    %s141 = sadd.s32 %s140, 1
    %p144 = scmp.eq.s32.totalorder %s17, 5
    %p145 = scmp.ne.s32.totalorder %s140, %s142
    %p146 = scmp.eq.s32.totalorder %s17, 0
    %p147 = por %p145, %p146
    %p148 = scmp.ne.s32.totalorder %s140, %s142
    %p149 = scmp.eq.s32.totalorder %s22, 5
    %p150 = por %p148, %p149
    %p151 = scmp.ne.s32.totalorder %s142, %s143
    %p152 = scmp.eq.s32.totalorder %s22, 0
    %p153 = por %p151, %p152
    %p154 = scmp.ne.s32.totalorder %s142, %s143
    %p155 = scmp.eq.s32.totalorder %s23, 5
    %p156 = por %p154, %p155
    %p158 = scmp.ne.s32.totalorder %s143, %s157
    %p159 = scmp.eq.s32.totalorder %s23, 0
    %p160 = por %p158, %p159
    %s162 = sadd.s32 %s161, 1
    %p165 = scmp.eq.s32.totalorder %s17, 5
    %p166 = scmp.ne.s32.totalorder %s161, %s163
    %p167 = scmp.eq.s32.totalorder %s17, 0
    %p168 = por %p166, %p167
    %p169 = scmp.ne.s32.totalorder %s161, %s163
    %p170 = scmp.eq.s32.totalorder %s22, 5
    %p171 = por %p169, %p170
    %p172 = scmp.ne.s32.totalorder %s163, %s164
    %p173 = scmp.eq.s32.totalorder %s22, 0
    %p174 = por %p172, %p173
    %p175 = scmp.ne.s32.totalorder %s163, %s164
    %p176 = scmp.eq.s32.totalorder %s23, 5
    %p177 = por %p175, %p176
    %p179 = scmp.ne.s32.totalorder %s164, %s178
    %p180 = scmp.eq.s32.totalorder %s23, 0
    %p181 = por %p179, %p180
    %s183 = sadd.s32 %s182, 1
    %p186 = scmp.eq.s32.totalorder %s17, 5
    %p187 = scmp.ne.s32.totalorder %s182, %s184
    %p188 = scmp.eq.s32.totalorder %s17, 0
    %p189 = por %p187, %p188
    %p190 = scmp.ne.s32.totalorder %s182, %s184
    %p191 = scmp.eq.s32.totalorder %s22, 5
    %p192 = por %p190, %p191
    %p193 = scmp.ne.s32.totalorder %s184, %s185
    %p194 = scmp.eq.s32.totalorder %s22, 0
    %p195 = por %p193, %p194
    %p196 = scmp.ne.s32.totalorder %s184, %s185
    %p197 = scmp.eq.s32.totalorder %s23, 5
    %p198 = por %p196, %p197
    %p200 = scmp.ne.s32.totalorder %s185, %s199
    %p201 = scmp.eq.s32.totalorder %s23, 0
    %p202 = por %p200, %p201
    %s204 = sadd.s32 %s203, 1
    %p207 = scmp.eq.s32.totalorder %s17, 5
    %p208 = scmp.ne.s32.totalorder %s203, %s205
    %p209 = scmp.eq.s32.totalorder %s17, 0
    %p210 = por %p208, %p209
    %p211 = scmp.ne.s32.totalorder %s203, %s205
    %p212 = scmp.eq.s32.totalorder %s22, 5
    %p213 = por %p211, %p212
    %p214 = scmp.ne.s32.totalorder %s205, %s206
    %p215 = scmp.eq.s32.totalorder %s22, 0
    %p216 = por %p214, %p215
    %p217 = scmp.ne.s32.totalorder %s205, %s206
    %p218 = scmp.eq.s32.totalorder %s23, 5
    %p219 = por %p217, %p218
    %p221 = scmp.ne.s32.totalorder %s206, %s220
    %p222 = scmp.eq.s32.totalorder %s23, 0
    %p223 = por %p221, %p222
    %s225 = sadd.s32 %s224, 1
    %p228 = scmp.eq.s32.totalorder %s17, 5
    %p229 = scmp.ne.s32.totalorder %s224, %s226
    %p230 = scmp.eq.s32.totalorder %s17, 0
    %p231 = por %p229, %p230
    %p232 = scmp.ne.s32.totalorder %s224, %s226
    %p233 = scmp.eq.s32.totalorder %s22, 5
    %p234 = por %p232, %p233
    %p235 = scmp.ne.s32.totalorder %s226, %s227
    %p236 = scmp.eq.s32.totalorder %s22, 0
    %p237 = por %p235, %p236
    %p238 = scmp.ne.s32.totalorder %s226, %s227
    %p239 = scmp.eq.s32.totalorder %s23, 5
    %p240 = por %p238, %p239
    %p242 = scmp.ne.s32.totalorder %s227, %s241
    %p243 = scmp.eq.s32.totalorder %s23, 0
    %p244 = por %p242, %p243
    %s246 = sadd.s32 %s245, 1
    %p249 = scmp.eq.s32.totalorder %s17, 5
    %p250 = scmp.ne.s32.totalorder %s245, %s247
    %p251 = scmp.eq.s32.totalorder %s17, 0
    %p252 = por %p250, %p251
    %p253 = scmp.ne.s32.totalorder %s245, %s247
    %p254 = scmp.eq.s32.totalorder %s22, 5
    %p255 = por %p253, %p254
    %p256 = scmp.ne.s32.totalorder %s247, %s248
    %p257 = scmp.eq.s32.totalorder %s22, 0
    %p258 = por %p256, %p257
    %p259 = scmp.ne.s32.totalorder %s247, %s248
    %p260 = scmp.eq.s32.totalorder %s23, 5
    %p261 = por %p259, %p260
    %p263 = scmp.ne.s32.totalorder %s248, %s262
    %p264 = scmp.eq.s32.totalorder %s23, 0
    %p265 = por %p263, %p264
    %s266 = ssub.s32 %s17, %s24
    %p267 = scmp.eq.s32.totalorder %s266, 0
    %s269 = sadd.s32 %s268, 1
    %s270 = scalar_select %p267, %s268, %s269
    %p273 = pneg %p267
    %p274 = scmp.eq.s32.totalorder %s17, 5
    %p275 = por %p273, %p274
    %p276 = scmp.ne.s32.totalorder %s268, %s271
    %p277 = scmp.eq.s32.totalorder %s17, 0
    %p278 = por %p276, %p277
    %p279 = scmp.ne.s32.totalorder %s268, %s271
    %p280 = scmp.eq.s32.totalorder %s22, 5
    %p281 = por %p279, %p280
    %p282 = scmp.ne.s32.totalorder %s271, %s272
    %p283 = scmp.eq.s32.totalorder %s22, 0
    %p284 = por %p282, %p283
    %p285 = scmp.ne.s32.totalorder %s271, %s272
    %p286 = scmp.eq.s32.totalorder %s23, 5
    %p287 = por %p285, %p286
    %p289 = scmp.ne.s32.totalorder %s272, %s288
    %p290 = scmp.eq.s32.totalorder %s23, 0
    %p291 = por %p289, %p290
    %p292 = scmp.le.s32.totalorder 1, %s17
    %p293 = scmp.lt.s32.totalorder %s17, 7
    %p294 = pnand %p292, %p293
    %p295 = pneg %p294
    // Predicated region
    $region9: #{maicnn_forward.1} parent=5 // pred_check
      _
    $region10: #{maicnn_forward.1} parent=5 // pred_check_branch
      %297 = sbr.rel (%p294) target = $region12
    $region11: #{maicnn_forward.1} parent=5 // pred_region
      %s298 = ssub.s32 %s17, 1
      // Predicated region
      $region13: #{maicnn_forward.1} parent=11 // pred_check
        %p299 = pneg %p90
      $region14: #{maicnn_forward.1} parent=11 // pred_check_branch
        %301 = sbr.rel (%p299) target = $region16
      $region15: #{maicnn_forward.1} parent=11 // pred_region
        _
      $region16: #{maicnn_forward.1} parent=11 // pred_fallthru
        _
      // Predicated region
      $region17: #{maicnn_forward.1} parent=11 // pred_check
        %p302 = pneg %p111
      $region18: #{maicnn_forward.1} parent=11 // pred_check_branch
        %304 = sbr.rel (%p302) target = $region20
      $region19: #{maicnn_forward.1} parent=11 // pred_region
        _
      $region20: #{maicnn_forward.1} parent=11 // pred_fallthru
        _
      // Predicated region
      $region21: #{maicnn_forward.1} parent=11 // pred_check
        %p305 = pneg %p132
      $region22: #{maicnn_forward.1} parent=11 // pred_check_branch
        %307 = sbr.rel (%p305) target = $region24
      $region23: #{maicnn_forward.1} parent=11 // pred_region
        _
      $region24: #{maicnn_forward.1} parent=11 // pred_fallthru
        _
      // Predicated region
      $region25: #{maicnn_forward.1} parent=11 // pred_check
        %p308 = pneg %p153
      $region26: #{maicnn_forward.1} parent=11 // pred_check_branch
        %310 = sbr.rel (%p308) target = $region28
      $region27: #{maicnn_forward.1} parent=11 // pred_region
        _
      $region28: #{maicnn_forward.1} parent=11 // pred_fallthru
        _
      // Predicated region
      $region29: #{maicnn_forward.1} parent=11 // pred_check
        %p311 = pneg %p174
      $region30: #{maicnn_forward.1} parent=11 // pred_check_branch
        %313 = sbr.rel (%p311) target = $region32
      $region31: #{maicnn_forward.1} parent=11 // pred_region
        _
      $region32: #{maicnn_forward.1} parent=11 // pred_fallthru
        _
      // Predicated region
      $region33: #{maicnn_forward.1} parent=11 // pred_check
        %p314 = pneg %p195
      $region34: #{maicnn_forward.1} parent=11 // pred_check_branch
        %316 = sbr.rel (%p314) target = $region36
      $region35: #{maicnn_forward.1} parent=11 // pred_region
        _
      $region36: #{maicnn_forward.1} parent=11 // pred_fallthru
        _
      // Predicated region
      $region37: #{maicnn_forward.1} parent=11 // pred_check
        %p317 = pneg %p216
      $region38: #{maicnn_forward.1} parent=11 // pred_check_branch
        %319 = sbr.rel (%p317) target = $region40
      $region39: #{maicnn_forward.1} parent=11 // pred_region
        _
      $region40: #{maicnn_forward.1} parent=11 // pred_fallthru
        _
      // Predicated region
      $region41: #{maicnn_forward.1} parent=11 // pred_check
        %p320 = pneg %p237
      $region42: #{maicnn_forward.1} parent=11 // pred_check_branch
        %322 = sbr.rel (%p320) target = $region44
      $region43: #{maicnn_forward.1} parent=11 // pred_region
        _
      $region44: #{maicnn_forward.1} parent=11 // pred_fallthru
        _
      // Predicated region
      $region45: #{maicnn_forward.1} parent=11 // pred_check
        %p323 = pneg %p258
      $region46: #{maicnn_forward.1} parent=11 // pred_check_branch
        %325 = sbr.rel (%p323) target = $region48
      $region47: #{maicnn_forward.1} parent=11 // pred_region
        _
      $region48: #{maicnn_forward.1} parent=11 // pred_fallthru
        _
    $region12: #{maicnn_forward.1} parent=5 // pred_fallthru
      _
    %p326 = scmp.lt.s32.totalorder %s17, 6
    // Predicated region
    $region49: #{maicnn_forward.1} parent=5 // pred_check
      %p327 = pneg %p326
    $region50: #{maicnn_forward.1} parent=5 // pred_check_branch
      %329 = sbr.rel (%p327) target = $region52
    $region51: #{maicnn_forward.1} parent=5 // pred_region
      // Predicated region
      $region53: #{maicnn_forward.1} parent=51 // pred_check
        %p330 = pneg %p37
      $region54: #{maicnn_forward.1} parent=51 // pred_check_branch
        %332 = sbr.rel (%p330) target = $region56
      $region55: #{maicnn_forward.1} parent=51 // pred_region
        %p333 = scmp.lt.s32.totalorder %s17, 5
        %s334 = scalar_select %p333, %s17, 5
        %s335 = smul.addr %s334, 13
        %s336 = smul.addr %s335, 8
        %s337 = scalar_lea.vmem %s0, %s336
      $region56: #{maicnn_forward.1} parent=51 // pred_fallthru
        _
      // Predicated region
      $region57: #{maicnn_forward.1} parent=51 // pred_check
        %p338 = pneg %p63
      $region58: #{maicnn_forward.1} parent=51 // pred_check_branch
        %340 = sbr.rel (%p338) target = $region60
      $region59: #{maicnn_forward.1} parent=51 // pred_region
        %p341 = scmp.lt.s32.totalorder %s17, 5
        %s342 = scalar_select %p341, %s17, 5
        %s343 = scalar_lea.vmem %s1, %s342
      $region60: #{maicnn_forward.1} parent=51 // pred_fallthru
        _
    $region52: #{maicnn_forward.1} parent=5 // pred_fallthru
      _
    %p344 = scmp.le.s32.totalorder 1, %s17
    %p345 = scmp.lt.s32.totalorder %s17, 7
    %p346 = pnand %p344, %p345
    %p347 = pneg %p346
    // Predicated region
    $region61: #{maicnn_forward.1} parent=5 // pred_check
      _
    $region62: #{maicnn_forward.1} parent=5 // pred_check_branch
      %349 = sbr.rel (%p346) target = $region64
    $region63: #{maicnn_forward.1} parent=5 // pred_region
      %s350 = ssub.s32 %s17, 1
      %p351 = scmp.lt.s32.totalorder %s22, 5
      %s352 = scalar_select %p351, %s22, 5
      %s353 = smul.addr %s352, 13
      %s354 = smul.addr %s353, 8
      %s355 = scalar_lea.vmem %s0, %s354
      %p356 = pneg %p43
      %p357 = pneg %p40
      %p358 = scmp.lt.s32.totalorder %s22, 5
      %s359 = scalar_select %p358, %s22, 5
      %s360 = scalar_lea.vmem %s1, %s359
      %p361 = pneg %p69
      %p362 = pneg %p66
      %p363 = pneg %p90
      %p364 = pneg %p87
      %p365 = pneg %p111
      %p366 = pneg %p108
      %p367 = pneg %p132
      %p368 = pneg %p129
      %p369 = pneg %p153
      %p370 = pneg %p150
      %p371 = pneg %p174
      %p372 = pneg %p171
      %p373 = pneg %p195
      %p374 = pneg %p192
      %p375 = pneg %p216
      %p376 = pneg %p213
      %p377 = pneg %p237
      %p378 = pneg %p234
      %p379 = pneg %p258
      %p380 = pneg %p255
      %p381 = pneg %p284
      %p382 = pneg %p281
      %p383 = scmp.lt.s32.totalorder %s22, 5
      %s384 = scalar_select %p383, %s22, 5
      %s385 = scalar_lea.vmem %s11, %s384
      %p386 = scmp.lt.s32.totalorder %s22, 5
      %s387 = scalar_select %p386, %s22, 5
      %s388 = smul.addr %s387, 13
      %s389 = smul.addr %s388, 8
      %s390 = scalar_lea.vmem %s0, %s389
      %p391 = scmp.lt.s32.totalorder %s22, 5
      %s392 = scalar_select %p391, %s22, 5
      %s393 = scalar_lea.vmem %s1, %s392
      %p394 = scmp.lt.s32.totalorder %s22, 5
      %s395 = scalar_select %p394, %s22, 5
      %s396 = scalar_lea.vmem %s11, %s395
      %v398 = vld [vmem:[%s390] sm:$0xff]
      %v399 = vld [vmem:[%s390 + $0x8] sm:$0xff]
      %v400 = vld [vmem:[%s390 + $0x10] sm:$0xff]
      %v401 = vld [vmem:[%s390 + $0x18] sm:$0xff]
      %v402 = vld [vmem:[%s390 + $0x20] sm:$0xff]
      %v403 = vld [vmem:[%s390 + $0x28] sm:$0xff]
      %v404 = vld [vmem:[%s390 + $0x30] sm:$0xff]
      %v405 = vld [vmem:[%s390 + $0x38] sm:$0xff]
      %v406 = vld [vmem:[%s390 + $0x40] sm:$0xff]
      %v407 = vld [vmem:[%s390 + $0x48] sm:$0xff]
      %v408 = vld [vmem:[%s390 + $0x50] sm:$0x3]
      %v409 = vpack.c.bf16 %v399, %v398
      %v410 = vpack.c.bf16 %v401, %v400
      %v411 = vpack.c.bf16 %v403, %v402
      %v412 = vpack.c.bf16 %v405, %v404
      %v413 = vpack.c.bf16 %v407, %v406
      %v414 = vpack.c.bf16 %v408, %v408
      %v415 = vld [vmem:[%s2] sm:$0x3]
      %v416 = vld [vmem:[%s390 + $0x1] sm:$0xff]
      %v417 = vld [vmem:[%s390 + $0x9] sm:$0xff]
      %v418 = vld [vmem:[%s390 + $0x11] sm:$0xff]
      %v419 = vld [vmem:[%s390 + $0x19] sm:$0xff]
      %v420 = vld [vmem:[%s390 + $0x21] sm:$0xff]
      %v421 = vld [vmem:[%s390 + $0x29] sm:$0xff]
      %v422 = vld [vmem:[%s390 + $0x31] sm:$0xff]
      %v423 = vld [vmem:[%s390 + $0x39] sm:$0xff]
      %v424 = vld [vmem:[%s390 + $0x41] sm:$0xff]
      %v425 = vld [vmem:[%s390 + $0x49] sm:$0xff]
      %v426 = vld [vmem:[%s390 + $0x51] sm:$0x3]
      %v427 = vpack.c.bf16 %v417, %v416
      %v428 = vpack.c.bf16 %v419, %v418
      %v429 = vpack.c.bf16 %v421, %v420
      %v430 = vpack.c.bf16 %v423, %v422
      %v431 = vpack.c.bf16 %v425, %v424
      %v432 = vpack.c.bf16 %v426, %v426
      %s433 = scalar_lea.vmem %s2, 2
      %v434 = vld [vmem:[%s433] sm:$0x3]
      %vm435 = vcmask 31744
      %v437 = vsel %vm435, %v427, 0
      %v440 = vsel %vm435, %v428, 0
      %v443 = vsel %vm435, %v429, 0
      %v446 = vsel %vm435, %v430, 0
      %v449 = vsel %vm435, %v431, 0
      %v452 = vsel %vm435, %v432, 0
      %vm454 = vcmask 1041408
      %v456 = vsel %vm454, %v434, 0
      %458 = vmatprep.subr.bf16.mxu0 0
      %459 = vmatpush1.bf16.msra.mxu0 %v456
      %460 = vmatprep.subr.bf16.mxu0 0
      %461 = vmatpush1.bf16.msra.mxu0 0
      %462 = vmatprep.subr.bf16.mxu0 0
      %463 = vmatpush1.bf16.msra.mxu0 0
      %464 = vmatprep.subr.bf16.mxu0 0
      %465 = vmatpush1.bf16.msra.mxu0 0
      %466 = vmatprep.subr.bf16.mxu0 0
      %467 = vmatpush1.bf16.msra.mxu0 0
      %468 = vmatprep.subr.bf16.mxu0 0
      %469 = vmatpush1.bf16.msra.mxu0 0
      %470 = vmatprep.subr.bf16.mxu0 0
      %471 = vmatpush1.bf16.msra.mxu0 0
      %472 = vmatprep.subr.bf16.mxu0 0
      %473 = vmatpush1.bf16.msra.mxu0 0
      %474 = vmatprep.subr.bf16.mxu0 0
      %475 = vmatpush1.bf16.msra.mxu0 0
      %476 = vmatprep.subr.bf16.mxu0 0
      %477 = vmatpush1.bf16.msra.mxu0 0
      %478 = vmatprep.subr.bf16.mxu0 0
      %479 = vmatpush1.bf16.msra.mxu0 0
      %480 = vmatprep.subr.bf16.mxu0 0
      %481 = vmatpush1.bf16.msra.mxu0 0
      %482 = vmatprep.subr.bf16.mxu0 0
      %483 = vmatpush1.bf16.msra.mxu0 0
      %484 = vmatprep.subr.bf16.mxu0 0
      %485 = vmatpush1.bf16.msra.mxu0 0
      %486 = vmatprep.subr.bf16.mxu0 0
      %487 = vmatpush1.bf16.msra.mxu0 0
      %488 = vmatprep.subr.bf16.mxu0 0
      %489 = vmatpush1.bf16.msra.mxu0 0
      %490 = vmatprep.mubr.bf16.mxu0 0
      %491 = vmatmul.mubr.bf16.gmra.mrb[0].mxu0 %v437
      %v492 = vpop.f32.mrb[0].mxu0
      %v493 = vadd.f32 0.0, %v492
      %v494 = vpop.f32.mrb[0].mxu0
      %v495 = vpop.f32.mrb[0].mxu0
      %v496 = vadd.f32 0.0, %v495
      %v497 = vpop.f32.mrb[0].mxu0
      %498 = vmatprep.mubr.bf16.mxu0 0
      %499 = vmatmul.mubr.bf16.gmra.mrb[0].mxu0 %v440
      %v500 = vpop.f32.mrb[0].mxu0
      %v501 = vadd.f32 0.0, %v500
      %v502 = vpop.f32.mrb[0].mxu0
      %v503 = vpop.f32.mrb[0].mxu0
      %v504 = vadd.f32 0.0, %v503
      %v505 = vpop.f32.mrb[0].mxu0
      %506 = vmatprep.mubr.bf16.mxu0 0
      %507 = vmatmul.mubr.bf16.gmra.mrb[0].mxu0 %v443
      %v508 = vpop.f32.mrb[0].mxu0
      %v509 = vadd.f32 0.0, %v508
      %v510 = vpop.f32.mrb[0].mxu0
      %v511 = vpop.f32.mrb[0].mxu0
      %v512 = vadd.f32 0.0, %v511
      %v513 = vpop.f32.mrb[0].mxu0
      %514 = vmatprep.mubr.bf16.mxu0 0
      %515 = vmatmul.mubr.bf16.gmra.mrb[0].mxu0 %v446
      %v516 = vpop.f32.mrb[0].mxu0
      %v517 = vadd.f32 0.0, %v516
      %v518 = vpop.f32.mrb[0].mxu0
      %v519 = vpop.f32.mrb[0].mxu0
      %v520 = vadd.f32 0.0, %v519
      %v521 = vpop.f32.mrb[0].mxu0
      %522 = vmatprep.mubr.bf16.mxu0 0
      %523 = vmatmul.mubr.bf16.gmra.mrb[0].mxu0 %v449
      %v524 = vpop.f32.mrb[0].mxu0
      %v525 = vadd.f32 0.0, %v524
      %v526 = vpop.f32.mrb[0].mxu0
      %v527 = vpop.f32.mrb[0].mxu0
      %v528 = vadd.f32 0.0, %v527
      %v529 = vpop.f32.mrb[0].mxu0
      %530 = vmatprep.mubr.bf16.mxu0 0
      %531 = vmatmul.mubr.bf16.gmra.mrb[0].mxu0 %v452
      %v532 = vpop.f32.mrb[0].mxu0
      %v533 = vadd.f32 0.0, %v532
      %v534 = vpop.f32.mrb[0].mxu0
      %v535 = vpop.f32.mrb[0].mxu0
      %v536 = vpop.f32.mrb[0].mxu0
      %537 = vdwg.mxu0
      %v539 = vsel %vm435, %v409, 0
      %v542 = vsel %vm435, %v410, 0
      %v545 = vsel %vm435, %v411, 0
      %v548 = vsel %vm435, %v412, 0
      %v551 = vsel %vm435, %v413, 0
      %v554 = vsel %vm435, %v414, 0
      %v557 = vsel %vm454, %v415, 0
      %559 = vmatprep.subr.bf16.mxu0 0
      %560 = vmatpush1.bf16.msra.mxu0 %v557
      %561 = vmatprep.subr.bf16.mxu0 0
      %562 = vmatpush1.bf16.msra.mxu0 0
      %563 = vmatprep.subr.bf16.mxu0 0
      %564 = vmatpush1.bf16.msra.mxu0 0
      %565 = vmatprep.subr.bf16.mxu0 0
      %566 = vmatpush1.bf16.msra.mxu0 0
      %567 = vmatprep.subr.bf16.mxu0 0
      %568 = vmatpush1.bf16.msra.mxu0 0
      %569 = vmatprep.subr.bf16.mxu0 0
      %570 = vmatpush1.bf16.msra.mxu0 0
      %571 = vmatprep.subr.bf16.mxu0 0
      %572 = vmatpush1.bf16.msra.mxu0 0
      %573 = vmatprep.subr.bf16.mxu0 0
      %574 = vmatpush1.bf16.msra.mxu0 0
      %575 = vmatprep.subr.bf16.mxu0 0
      %576 = vmatpush1.bf16.msra.mxu0 0
      %577 = vmatprep.subr.bf16.mxu0 0
      %578 = vmatpush1.bf16.msra.mxu0 0
      %579 = vmatprep.subr.bf16.mxu0 0
      %580 = vmatpush1.bf16.msra.mxu0 0
      %581 = vmatprep.subr.bf16.mxu0 0
      %582 = vmatpush1.bf16.msra.mxu0 0
      %583 = vmatprep.subr.bf16.mxu0 0
      %584 = vmatpush1.bf16.msra.mxu0 0
      %585 = vmatprep.subr.bf16.mxu0 0
      %586 = vmatpush1.bf16.msra.mxu0 0
      %587 = vmatprep.subr.bf16.mxu0 0
      %588 = vmatpush1.bf16.msra.mxu0 0
      %589 = vmatprep.subr.bf16.mxu0 0
      %590 = vmatpush1.bf16.msra.mxu0 0
      %591 = vmatprep.mubr.bf16.mxu0 0
      %592 = vmatmul.mubr.bf16.gmra.mrb[0].mxu0 %v539
      %v593 = vpop.f32.mrb[0].mxu0
      %v594 = vadd.f32 %v493, %v593
      %v595 = vpop.f32.mrb[0].mxu0
      %v596 = vpop.f32.mrb[0].mxu0
      %v597 = vadd.f32 %v496, %v596
      %v598 = vpop.f32.mrb[0].mxu0
      %599 = vmatprep.mubr.bf16.mxu0 0
      %600 = vmatmul.mubr.bf16.gmra.mrb[0].mxu0 %v542
      %v601 = vpop.f32.mrb[0].mxu0
      %v602 = vadd.f32 %v501, %v601
      %v603 = vpop.f32.mrb[0].mxu0
      %v604 = vpop.f32.mrb[0].mxu0
      %v605 = vadd.f32 %v504, %v604
      %v606 = vpop.f32.mrb[0].mxu0
      %607 = vmatprep.mubr.bf16.mxu0 0
      %608 = vmatmul.mubr.bf16.gmra.mrb[0].mxu0 %v545
      %v609 = vpop.f32.mrb[0].mxu0
      %v610 = vadd.f32 %v509, %v609
      %v611 = vpop.f32.mrb[0].mxu0
      %v612 = vpop.f32.mrb[0].mxu0
      %v613 = vadd.f32 %v512, %v612
      %v614 = vpop.f32.mrb[0].mxu0
      %615 = vmatprep.mubr.bf16.mxu0 0
      %616 = vmatmul.mubr.bf16.gmra.mrb[0].mxu0 %v548
      %v617 = vpop.f32.mrb[0].mxu0
      %v618 = vadd.f32 %v517, %v617
      %v619 = vpop.f32.mrb[0].mxu0
      %v620 = vpop.f32.mrb[0].mxu0
      %v621 = vadd.f32 %v520, %v620
      %v622 = vpop.f32.mrb[0].mxu0
      %623 = vmatprep.mubr.bf16.mxu0 0
      %624 = vmatmul.mubr.bf16.gmra.mrb[0].mxu0 %v551
      %v625 = vpop.f32.mrb[0].mxu0
      %v626 = vadd.f32 %v525, %v625
      %v627 = vpop.f32.mrb[0].mxu0
      %v628 = vpop.f32.mrb[0].mxu0
      %v629 = vadd.f32 %v528, %v628
      %v630 = vpop.f32.mrb[0].mxu0
      %631 = vmatprep.mubr.bf16.mxu0 0
      %632 = vmatmul.mubr.bf16.gmra.mrb[0].mxu0 %v554
      %v633 = vpop.f32.mrb[0].mxu0
      %v634 = vadd.f32 %v533, %v633
      %v635 = vpop.f32.mrb[0].mxu0
      %v636 = vpop.f32.mrb[0].mxu0
      %v637 = vpop.f32.mrb[0].mxu0
      %638 = vdwg.mxu0
      %v639 = vld [vmem:[%s390 + $0x2] sm:$0xff]
      %v640 = vld [vmem:[%s390 + $0xa] sm:$0xff]
      %v641 = vld [vmem:[%s390 + $0x12] sm:$0xff]
      %v642 = vld [vmem:[%s390 + $0x1a] sm:$0xff]
      %v643 = vld [vmem:[%s390 + $0x22] sm:$0xff]
      %v644 = vld [vmem:[%s390 + $0x2a] sm:$0xff]
      %v645 = vld [vmem:[%s390 + $0x32] sm:$0xff]
      %v646 = vld [vmem:[%s390 + $0x3a] sm:$0xff]
      %v647 = vld [vmem:[%s390 + $0x42] sm:$0xff]
      %v648 = vld [vmem:[%s390 + $0x4a] sm:$0xff]
      %v649 = vld [vmem:[%s390 + $0x52] sm:$0x3]
      %v650 = vpack.c.bf16 %v640, %v639
      %v651 = vpack.c.bf16 %v642, %v641
      %v652 = vpack.c.bf16 %v644, %v643
      %v653 = vpack.c.bf16 %v646, %v645
      %v654 = vpack.c.bf16 %v648, %v647
      %v655 = vpack.c.bf16 %v649, %v649
      %s656 = scalar_lea.vmem %s2, 4
      %v657 = vld [vmem:[%s656] sm:$0x3]
      %v659 = vsel %vm435, %v650, 0
      %v662 = vsel %vm435, %v651, 0
      %v665 = vsel %vm435, %v652, 0
      %v668 = vsel %vm435, %v653, 0
      %v671 = vsel %vm435, %v654, 0
      %v674 = vsel %vm435, %v655, 0
      %v677 = vsel %vm454, %v657, 0
      %679 = vmatprep.subr.bf16.mxu0 0
      %680 = vmatpush1.bf16.msra.mxu0 %v677
      %681 = vmatprep.subr.bf16.mxu0 0
      %682 = vmatpush1.bf16.msra.mxu0 0
      %683 = vmatprep.subr.bf16.mxu0 0
      %684 = vmatpush1.bf16.msra.mxu0 0
      %685 = vmatprep.subr.bf16.mxu0 0
      %686 = vmatpush1.bf16.msra.mxu0 0
      %687 = vmatprep.subr.bf16.mxu0 0
      %688 = vmatpush1.bf16.msra.mxu0 0
      %689 = vmatprep.subr.bf16.mxu0 0
      %690 = vmatpush1.bf16.msra.mxu0 0
      %691 = vmatprep.subr.bf16.mxu0 0
      %692 = vmatpush1.bf16.msra.mxu0 0
      %693 = vmatprep.subr.bf16.mxu0 0
      %694 = vmatpush1.bf16.msra.mxu0 0
      %695 = vmatprep.subr.bf16.mxu0 0
      %696 = vmatpush1.bf16.msra.mxu0 0
      %697 = vmatprep.subr.bf16.mxu0 0
      %698 = vmatpush1.bf16.msra.mxu0 0
      %699 = vmatprep.subr.bf16.mxu0 0
      %700 = vmatpush1.bf16.msra.mxu0 0
      %701 = vmatprep.subr.bf16.mxu0 0
      %702 = vmatpush1.bf16.msra.mxu0 0
      %703 = vmatprep.subr.bf16.mxu0 0
      %704 = vmatpush1.bf16.msra.mxu0 0
      %705 = vmatprep.subr.bf16.mxu0 0
      %706 = vmatpush1.bf16.msra.mxu0 0
      %707 = vmatprep.subr.bf16.mxu0 0
      %708 = vmatpush1.bf16.msra.mxu0 0
      %709 = vmatprep.subr.bf16.mxu0 0
      %710 = vmatpush1.bf16.msra.mxu0 0
      %711 = vmatprep.mubr.bf16.mxu0 0
      %712 = vmatmul.mubr.bf16.gmra.mrb[0].mxu0 %v659
      %v713 = vpop.f32.mrb[0].mxu0
      %v714 = vadd.f32 0.0, %v713
      %v715 = vpop.f32.mrb[0].mxu0
      %v716 = vpop.f32.mrb[0].mxu0
      %v717 = vadd.f32 0.0, %v716
      %v718 = vpop.f32.mrb[0].mxu0
      %719 = vmatprep.mubr.bf16.mxu0 0
      %720 = vmatmul.mubr.bf16.gmra.mrb[0].mxu0 %v662
      %v721 = vpop.f32.mrb[0].mxu0
      %v722 = vadd.f32 0.0, %v721
      %v723 = vpop.f32.mrb[0].mxu0
      %v724 = vpop.f32.mrb[0].mxu0
      %v725 = vadd.f32 0.0, %v724
      %v726 = vpop.f32.mrb[0].mxu0
      %727 = vmatprep.mubr.bf16.mxu0 0
      %728 = vmatmul.mubr.bf16.gmra.mrb[0].mxu0 %v665
      %v729 = vpop.f32.mrb[0].mxu0
      %v730 = vadd.f32 0.0, %v729
      %v731 = vpop.f32.mrb[0].mxu0
      %v732 = vpop.f32.mrb[0].mxu0
      %v733 = vadd.f32 0.0, %v732
      %v734 = vpop.f32.mrb[0].mxu0
      %735 = vmatprep.mubr.bf16.mxu0 0
      %736 = vmatmul.mubr.bf16.gmra.mrb[0].mxu0 %v668
      %v737 = vpop.f32.mrb[0].mxu0
      %v738 = vadd.f32 0.0, %v737
      %v739 = vpop.f32.mrb[0].mxu0
      %v740 = vpop.f32.mrb[0].mxu0
      %v741 = vadd.f32 0.0, %v740
      %v742 = vpop.f32.mrb[0].mxu0
      %743 = vmatprep.mubr.bf16.mxu0 0
      %744 = vmatmul.mubr.bf16.gmra.mrb[0].mxu0 %v671
      %v745 = vpop.f32.mrb[0].mxu0
      %v746 = vadd.f32 0.0, %v745
      %v747 = vpop.f32.mrb[0].mxu0
      %v748 = vpop.f32.mrb[0].mxu0
      %v749 = vadd.f32 0.0, %v748
      %v750 = vpop.f32.mrb[0].mxu0
      %751 = vmatprep.mubr.bf16.mxu0 0
      %752 = vmatmul.mubr.bf16.gmra.mrb[0].mxu0 %v674
      %v753 = vpop.f32.mrb[0].mxu0
      %v754 = vadd.f32 0.0, %v753
      %v755 = vpop.f32.mrb[0].mxu0
      %v756 = vpop.f32.mrb[0].mxu0
      %v757 = vpop.f32.mrb[0].mxu0
      %758 = vdwg.mxu0
      %v759 = vadd.f32 %v594, %v714
      %v760 = vadd.f32 %v597, %v717
      %v761 = vadd.f32 %v602, %v722
      %v762 = vadd.f32 %v605, %v725
      %v763 = vadd.f32 %v610, %v730
      %v764 = vadd.f32 %v613, %v733
      %v765 = vadd.f32 %v618, %v738
      %v766 = vadd.f32 %v621, %v741
      %v767 = vadd.f32 %v626, %v746
      %v768 = vadd.f32 %v629, %v749
      %v769 = vadd.f32 %v634, %v754
      %v770 = vld [vmem:[%s390 + $0x8] sm:$0xff]
      %v771 = vld [vmem:[%s390 + $0x10] sm:$0xff]
      %v772 = vld [vmem:[%s390 + $0x18] sm:$0xff]
      %v773 = vld [vmem:[%s390 + $0x20] sm:$0xff]
      %v774 = vld [vmem:[%s390 + $0x28] sm:$0xff]
      %v775 = vld [vmem:[%s390 + $0x30] sm:$0xff]
      %v776 = vld [vmem:[%s390 + $0x38] sm:$0xff]
      %v777 = vld [vmem:[%s390 + $0x40] sm:$0xff]
      %v778 = vld [vmem:[%s390 + $0x48] sm:$0xff]
      %v779 = vld [vmem:[%s390 + $0x50] sm:$0xff]
      %v780 = vld [vmem:[%s390 + $0x58] sm:$0x3]
      %v781 = vpack.c.bf16 %v771, %v770
      %v782 = vpack.c.bf16 %v773, %v772
      %v783 = vpack.c.bf16 %v775, %v774
      %v784 = vpack.c.bf16 %v777, %v776
      %v785 = vpack.c.bf16 %v779, %v778
      %v786 = vpack.c.bf16 %v780, %v780
      %s787 = scalar_lea.vmem %s2, 6
      %v788 = vld [vmem:[%s787] sm:$0x3]
      %v790 = vsel %vm435, %v781, 0
      %v793 = vsel %vm435, %v782, 0
      %v796 = vsel %vm435, %v783, 0
      %v799 = vsel %vm435, %v784, 0
      %v802 = vsel %vm435, %v785, 0
      %v805 = vsel %vm435, %v786, 0
      %v808 = vsel %vm454, %v788, 0
      %810 = vmatprep.subr.bf16.mxu0 0
      %811 = vmatpush1.bf16.msra.mxu0 %v808
      %812 = vmatprep.subr.bf16.mxu0 0
      %813 = vmatpush1.bf16.msra.mxu0 0
      %814 = vmatprep.subr.bf16.mxu0 0
      %815 = vmatpush1.bf16.msra.mxu0 0
      %816 = vmatprep.subr.bf16.mxu0 0
      %817 = vmatpush1.bf16.msra.mxu0 0
      %818 = vmatprep.subr.bf16.mxu0 0
      %819 = vmatpush1.bf16.msra.mxu0 0
      %820 = vmatprep.subr.bf16.mxu0 0
      %821 = vmatpush1.bf16.msra.mxu0 0
      %822 = vmatprep.subr.bf16.mxu0 0
      %823 = vmatpush1.bf16.msra.mxu0 0
      %824 = vmatprep.subr.bf16.mxu0 0
      %825 = vmatpush1.bf16.msra.mxu0 0
      %826 = vmatprep.subr.bf16.mxu0 0
      %827 = vmatpush1.bf16.msra.mxu0 0
      %828 = vmatprep.subr.bf16.mxu0 0
      %829 = vmatpush1.bf16.msra.mxu0 0
      %830 = vmatprep.subr.bf16.mxu0 0
      %831 = vmatpush1.bf16.msra.mxu0 0
      %832 = vmatprep.subr.bf16.mxu0 0
      %833 = vmatpush1.bf16.msra.mxu0 0
      %834 = vmatprep.subr.bf16.mxu0 0
      %835 = vmatpush1.bf16.msra.mxu0 0
      %836 = vmatprep.subr.bf16.mxu0 0
      %837 = vmatpush1.bf16.msra.mxu0 0
      %838 = vmatprep.subr.bf16.mxu0 0
      %839 = vmatpush1.bf16.msra.mxu0 0
      %840 = vmatprep.subr.bf16.mxu0 0
      %841 = vmatpush1.bf16.msra.mxu0 0
      %842 = vmatprep.mubr.bf16.mxu0 0
      %843 = vmatmul.mubr.bf16.gmra.mrb[0].mxu0 %v790
      %v844 = vpop.f32.mrb[0].mxu0
      %v845 = vadd.f32 0.0, %v844
      %v846 = vpop.f32.mrb[0].mxu0
      %v847 = vpop.f32.mrb[0].mxu0
      %v848 = vadd.f32 0.0, %v847
      %v849 = vpop.f32.mrb[0].mxu0
      %850 = vmatprep.mubr.bf16.mxu0 0
      %851 = vmatmul.mubr.bf16.gmra.mrb[0].mxu0 %v793
      %v852 = vpop.f32.mrb[0].mxu0
      %v853 = vadd.f32 0.0, %v852
      %v854 = vpop.f32.mrb[0].mxu0
      %v855 = vpop.f32.mrb[0].mxu0
      %v856 = vadd.f32 0.0, %v855
      %v857 = vpop.f32.mrb[0].mxu0
      %858 = vmatprep.mubr.bf16.mxu0 0
      %859 = vmatmul.mubr.bf16.gmra.mrb[0].mxu0 %v796
      %v860 = vpop.f32.mrb[0].mxu0
      %v861 = vadd.f32 0.0, %v860
      %v862 = vpop.f32.mrb[0].mxu0
      %v863 = vpop.f32.mrb[0].mxu0
      %v864 = vadd.f32 0.0, %v863
      %v865 = vpop.f32.mrb[0].mxu0
      %866 = vmatprep.mubr.bf16.mxu0 0
      %867 = vmatmul.mubr.bf16.gmra.mrb[0].mxu0 %v799
      %v868 = vpop.f32.mrb[0].mxu0
      %v869 = vadd.f32 0.0, %v868
      %v870 = vpop.f32.mrb[0].mxu0
      %v871 = vpop.f32.mrb[0].mxu0
      %v872 = vadd.f32 0.0, %v871
      %v873 = vpop.f32.mrb[0].mxu0
      %874 = vmatprep.mubr.bf16.mxu0 0
      %875 = vmatmul.mubr.bf16.gmra.mrb[0].mxu0 %v802
      %v876 = vpop.f32.mrb[0].mxu0
      %v877 = vadd.f32 0.0, %v876
      %v878 = vpop.f32.mrb[0].mxu0
      %v879 = vpop.f32.mrb[0].mxu0
      %v880 = vadd.f32 0.0, %v879
      %v881 = vpop.f32.mrb[0].mxu0
      %882 = vmatprep.mubr.bf16.mxu0 0
      %883 = vmatmul.mubr.bf16.gmra.mrb[0].mxu0 %v805
      %v884 = vpop.f32.mrb[0].mxu0
      %v885 = vadd.f32 0.0, %v884
      %v886 = vpop.f32.mrb[0].mxu0
      %v887 = vpop.f32.mrb[0].mxu0
      %v888 = vpop.f32.mrb[0].mxu0
      %889 = vdwg.mxu0
      %v890 = vadd.f32 %v759, %v845
      %v891 = vadd.f32 %v760, %v848
      %v892 = vadd.f32 %v761, %v853
      %v893 = vadd.f32 %v762, %v856
      %v894 = vadd.f32 %v763, %v861
      %v895 = vadd.f32 %v764, %v864
      %v896 = vadd.f32 %v765, %v869
      %v897 = vadd.f32 %v766, %v872
      %v898 = vadd.f32 %v767, %v877
      %v899 = vadd.f32 %v768, %v880
      %v900 = vadd.f32 %v769, %v885
      %v901 = vld [vmem:[%s390 + $0x9] sm:$0xff]
      %v902 = vld [vmem:[%s390 + $0x11] sm:$0xff]
      %v903 = vld [vmem:[%s390 + $0x19] sm:$0xff]
      %v904 = vld [vmem:[%s390 + $0x21] sm:$0xff]
      %v905 = vld [vmem:[%s390 + $0x29] sm:$0xff]
      %v906 = vld [vmem:[%s390 + $0x31] sm:$0xff]
      %v907 = vld [vmem:[%s390 + $0x39] sm:$0xff]
      %v908 = vld [vmem:[%s390 + $0x41] sm:$0xff]
      %v909 = vld [vmem:[%s390 + $0x49] sm:$0xff]
      %v910 = vld [vmem:[%s390 + $0x51] sm:$0xff]
      %v911 = vld [vmem:[%s390 + $0x59] sm:$0x3]
      %v912 = vpack.c.bf16 %v902, %v901
      %v913 = vpack.c.bf16 %v904, %v903
      %v914 = vpack.c.bf16 %v906, %v905
      %v915 = vpack.c.bf16 %v908, %v907
      %v916 = vpack.c.bf16 %v910, %v909
      %v917 = vpack.c.bf16 %v911, %v911
      %s918 = scalar_lea.vmem %s2, 8
      %v919 = vld [vmem:[%s918] sm:$0x3]
      %v921 = vsel %vm435, %v912, 0
      %v924 = vsel %vm435, %v913, 0
      %v927 = vsel %vm435, %v914, 0
      %v930 = vsel %vm435, %v915, 0
      %v933 = vsel %vm435, %v916, 0
      %v936 = vsel %vm435, %v917, 0
      %v939 = vsel %vm454, %v919, 0
      %941 = vmatprep.subr.bf16.mxu0 0
      %942 = vmatpush1.bf16.msra.mxu0 %v939
      %943 = vmatprep.subr.bf16.mxu0 0
      %944 = vmatpush1.bf16.msra.mxu0 0
      %945 = vmatprep.subr.bf16.mxu0 0
      %946 = vmatpush1.bf16.msra.mxu0 0
      %947 = vmatprep.subr.bf16.mxu0 0
      %948 = vmatpush1.bf16.msra.mxu0 0
      %949 = vmatprep.subr.bf16.mxu0 0
      %950 = vmatpush1.bf16.msra.mxu0 0
      %951 = vmatprep.subr.bf16.mxu0 0
      %952 = vmatpush1.bf16.msra.mxu0 0
      %953 = vmatprep.subr.bf16.mxu0 0
      %954 = vmatpush1.bf16.msra.mxu0 0
      %955 = vmatprep.subr.bf16.mxu0 0
      %956 = vmatpush1.bf16.msra.mxu0 0
      %957 = vmatprep.subr.bf16.mxu0 0
      %958 = vmatpush1.bf16.msra.mxu0 0
      %959 = vmatprep.subr.bf16.mxu0 0
      %960 = vmatpush1.bf16.msra.mxu0 0
      %961 = vmatprep.subr.bf16.mxu0 0
      %962 = vmatpush1.bf16.msra.mxu0 0
      %963 = vmatprep.subr.bf16.mxu0 0
      %964 = vmatpush1.bf16.msra.mxu0 0
      %965 = vmatprep.subr.bf16.mxu0 0
      %966 = vmatpush1.bf16.msra.mxu0 0
      %967 = vmatprep.subr.bf16.mxu0 0
      %968 = vmatpush1.bf16.msra.mxu0 0
      %969 = vmatprep.subr.bf16.mxu0 0
      %970 = vmatpush1.bf16.msra.mxu0 0
      %971 = vmatprep.subr.bf16.mxu0 0
      %972 = vmatpush1.bf16.msra.mxu0 0
      %973 = vmatprep.mubr.bf16.mxu0 0
      %974 = vmatmul.mubr.bf16.gmra.mrb[0].mxu0 %v921
      %v975 = vpop.f32.mrb[0].mxu0
      %v976 = vadd.f32 0.0, %v975
      %v977 = vpop.f32.mrb[0].mxu0
      %v978 = vpop.f32.mrb[0].mxu0
      %v979 = vadd.f32 0.0, %v978
      %v980 = vpop.f32.mrb[0].mxu0
      %981 = vmatprep.mubr.bf16.mxu0 0
      %982 = vmatmul.mubr.bf16.gmra.mrb[0].mxu0 %v924
      %v983 = vpop.f32.mrb[0].mxu0
      %v984 = vadd.f32 0.0, %v983
      %v985 = vpop.f32.mrb[0].mxu0
      %v986 = vpop.f32.mrb[0].mxu0
      %v987 = vadd.f32 0.0, %v986
      %v988 = vpop.f32.mrb[0].mxu0
      %989 = vmatprep.mubr.bf16.mxu0 0
      %990 = vmatmul.mubr.bf16.gmra.mrb[0].mxu0 %v927
      %v991 = vpop.f32.mrb[0].mxu0
      %v992 = vadd.f32 0.0, %v991
      %v993 = vpop.f32.mrb[0].mxu0
      %v994 = vpop.f32.mrb[0].mxu0
      %v995 = vadd.f32 0.0, %v994
      %v996 = vpop.f32.mrb[0].mxu0
      %997 = vmatprep.mubr.bf16.mxu0 0
      %998 = vmatmul.mubr.bf16.gmra.mrb[0].mxu0 %v930
      %v999 = vpop.f32.mrb[0].mxu0
      %v1000 = vadd.f32 0.0, %v999
      %v1001 = vpop.f32.mrb[0].mxu0
      %v1002 = vpop.f32.mrb[0].mxu0
      %v1003 = vadd.f32 0.0, %v1002
      %v1004 = vpop.f32.mrb[0].mxu0
      %1005 = vmatprep.mubr.bf16.mxu0 0
      %1006 = vmatmul.mubr.bf16.gmra.mrb[0].mxu0 %v933
      %v1007 = vpop.f32.mrb[0].mxu0
      %v1008 = vadd.f32 0.0, %v1007
      %v1009 = vpop.f32.mrb[0].mxu0
      %v1010 = vpop.f32.mrb[0].mxu0
      %v1011 = vadd.f32 0.0, %v1010
      %v1012 = vpop.f32.mrb[0].mxu0
      %1013 = vmatprep.mubr.bf16.mxu0 0
      %1014 = vmatmul.mubr.bf16.gmra.mrb[0].mxu0 %v936
      %v1015 = vpop.f32.mrb[0].mxu0
      %v1016 = vadd.f32 0.0, %v1015
      %v1017 = vpop.f32.mrb[0].mxu0
      %v1018 = vpop.f32.mrb[0].mxu0
      %v1019 = vpop.f32.mrb[0].mxu0
      %1020 = vdwg.mxu0
      %v1021 = vadd.f32 %v890, %v976
      %v1022 = vadd.f32 %v891, %v979
      %v1023 = vadd.f32 %v892, %v984
      %v1024 = vadd.f32 %v893, %v987
      %v1025 = vadd.f32 %v894, %v992
      %v1026 = vadd.f32 %v895, %v995
      %v1027 = vadd.f32 %v896, %v1000
      %v1028 = vadd.f32 %v897, %v1003
      %v1029 = vadd.f32 %v898, %v1008
      %v1030 = vadd.f32 %v899, %v1011
      %v1031 = vadd.f32 %v900, %v1016
      %v1032 = vld [vmem:[%s390 + $0xa] sm:$0xff]
      %v1033 = vld [vmem:[%s390 + $0x12] sm:$0xff]
      %v1034 = vld [vmem:[%s390 + $0x1a] sm:$0xff]
      %v1035 = vld [vmem:[%s390 + $0x22] sm:$0xff]
      %v1036 = vld [vmem:[%s390 + $0x2a] sm:$0xff]
      %v1037 = vld [vmem:[%s390 + $0x32] sm:$0xff]
      %v1038 = vld [vmem:[%s390 + $0x3a] sm:$0xff]
      %v1039 = vld [vmem:[%s390 + $0x42] sm:$0xff]
      %v1040 = vld [vmem:[%s390 + $0x4a] sm:$0xff]
      %v1041 = vld [vmem:[%s390 + $0x52] sm:$0xff]
      %v1042 = vld [vmem:[%s390 + $0x5a] sm:$0x3]
      %v1043 = vpack.c.bf16 %v1033, %v1032
      %v1044 = vpack.c.bf16 %v1035, %v1034
      %v1045 = vpack.c.bf16 %v1037, %v1036
      %v1046 = vpack.c.bf16 %v1039, %v1038
      %v1047 = vpack.c.bf16 %v1041, %v1040
      %v1048 = vpack.c.bf16 %v1042, %v1042
      %s1049 = scalar_lea.vmem %s2, 10
      %v1050 = vld [vmem:[%s1049] sm:$0x3]
      %v1052 = vsel %vm435, %v1043, 0
      %v1055 = vsel %vm435, %v1044, 0
      %v1058 = vsel %vm435, %v1045, 0
      %v1061 = vsel %vm435, %v1046, 0
      %v1064 = vsel %vm435, %v1047, 0
      %v1067 = vsel %vm435, %v1048, 0
      %v1070 = vsel %vm454, %v1050, 0
      %1072 = vmatprep.subr.bf16.mxu0 0
      %1073 = vmatpush1.bf16.msra.mxu0 %v1070
      %1074 = vmatprep.subr.bf16.mxu0 0
      %1075 = vmatpush1.bf16.msra.mxu0 0
      %1076 = vmatprep.subr.bf16.mxu0 0
      %1077 = vmatpush1.bf16.msra.mxu0 0
      %1078 = vmatprep.subr.bf16.mxu0 0
      %1079 = vmatpush1.bf16.msra.mxu0 0
      %1080 = vmatprep.subr.bf16.mxu0 0
      %1081 = vmatpush1.bf16.msra.mxu0 0
      %1082 = vmatprep.subr.bf16.mxu0 0
      %1083 = vmatpush1.bf16.msra.mxu0 0
      %1084 = vmatprep.subr.bf16.mxu0 0
      %1085 = vmatpush1.bf16.msra.mxu0 0
      %1086 = vmatprep.subr.bf16.mxu0 0
      %1087 = vmatpush1.bf16.msra.mxu0 0
      %1088 = vmatprep.subr.bf16.mxu0 0
      %1089 = vmatpush1.bf16.msra.mxu0 0
      %1090 = vmatprep.subr.bf16.mxu0 0
      %1091 = vmatpush1.bf16.msra.mxu0 0
      %1092 = vmatprep.subr.bf16.mxu0 0
      %1093 = vmatpush1.bf16.msra.mxu0 0
      %1094 = vmatprep.subr.bf16.mxu0 0
      %1095 = vmatpush1.bf16.msra.mxu0 0
      %1096 = vmatprep.subr.bf16.mxu0 0
      %1097 = vmatpush1.bf16.msra.mxu0 0
      %1098 = vmatprep.subr.bf16.mxu0 0
      %1099 = vmatpush1.bf16.msra.mxu0 0
      %1100 = vmatprep.subr.bf16.mxu0 0
      %1101 = vmatpush1.bf16.msra.mxu0 0
      %1102 = vmatprep.subr.bf16.mxu0 0
      %1103 = vmatpush1.bf16.msra.mxu0 0
      %1104 = vmatprep.mubr.bf16.mxu0 0
      %1105 = vmatmul.mubr.bf16.gmra.mrb[0].mxu0 %v1052
      %v1106 = vpop.f32.mrb[0].mxu0
      %v1107 = vadd.f32 0.0, %v1106
      %v1108 = vpop.f32.mrb[0].mxu0
      %v1109 = vpop.f32.mrb[0].mxu0
      %v1110 = vadd.f32 0.0, %v1109
      %v1111 = vpop.f32.mrb[0].mxu0
      %1112 = vmatprep.mubr.bf16.mxu0 0
      %1113 = vmatmul.mubr.bf16.gmra.mrb[0].mxu0 %v1055
      %v1114 = vpop.f32.mrb[0].mxu0
      %v1115 = vadd.f32 0.0, %v1114
      %v1116 = vpop.f32.mrb[0].mxu0
      %v1117 = vpop.f32.mrb[0].mxu0
      %v1118 = vadd.f32 0.0, %v1117
      %v1119 = vpop.f32.mrb[0].mxu0
      %1120 = vmatprep.mubr.bf16.mxu0 0
      %1121 = vmatmul.mubr.bf16.gmra.mrb[0].mxu0 %v1058
      %v1122 = vpop.f32.mrb[0].mxu0
      %v1123 = vadd.f32 0.0, %v1122
      %v1124 = vpop.f32.mrb[0].mxu0
      %v1125 = vpop.f32.mrb[0].mxu0
      %v1126 = vadd.f32 0.0, %v1125
      %v1127 = vpop.f32.mrb[0].mxu0
      %1128 = vmatprep.mubr.bf16.mxu0 0
      %1129 = vmatmul.mubr.bf16.gmra.mrb[0].mxu0 %v1061
      %v1130 = vpop.f32.mrb[0].mxu0
      %v1131 = vadd.f32 0.0, %v1130
      %v1132 = vpop.f32.mrb[0].mxu0
      %v1133 = vpop.f32.mrb[0].mxu0
      %v1134 = vadd.f32 0.0, %v1133
      %v1135 = vpop.f32.mrb[0].mxu0
      %1136 = vmatprep.mubr.bf16.mxu0 0
      %1137 = vmatmul.mubr.bf16.gmra.mrb[0].mxu0 %v1064
      %v1138 = vpop.f32.mrb[0].mxu0
      %v1139 = vadd.f32 0.0, %v1138
      %v1140 = vpop.f32.mrb[0].mxu0
      %v1141 = vpop.f32.mrb[0].mxu0
      %v1142 = vadd.f32 0.0, %v1141
      %v1143 = vpop.f32.mrb[0].mxu0
      %1144 = vmatprep.mubr.bf16.mxu0 0
      %1145 = vmatmul.mubr.bf16.gmra.mrb[0].mxu0 %v1067
      %v1146 = vpop.f32.mrb[0].mxu0
      %v1147 = vadd.f32 0.0, %v1146
      %v1148 = vpop.f32.mrb[0].mxu0
      %v1149 = vpop.f32.mrb[0].mxu0
      %v1150 = vpop.f32.mrb[0].mxu0
      %1151 = vdwg.mxu0
      %v1152 = vadd.f32 %v1021, %v1107
      %v1153 = vadd.f32 %v1022, %v1110
      %v1154 = vadd.f32 %v1023, %v1115
      %v1155 = vadd.f32 %v1024, %v1118
      %v1156 = vadd.f32 %v1025, %v1123
      %v1157 = vadd.f32 %v1026, %v1126
      %v1158 = vadd.f32 %v1027, %v1131
      %v1159 = vadd.f32 %v1028, %v1134
      %v1160 = vadd.f32 %v1029, %v1139
      %v1161 = vadd.f32 %v1030, %v1142
      %v1162 = vadd.f32 %v1031, %v1147
      %v1163 = vld [vmem:[%s390 + $0x10] sm:$0xff]
      %v1164 = vld [vmem:[%s390 + $0x18] sm:$0xff]
      %v1165 = vld [vmem:[%s390 + $0x20] sm:$0xff]
      %v1166 = vld [vmem:[%s390 + $0x28] sm:$0xff]
      %v1167 = vld [vmem:[%s390 + $0x30] sm:$0xff]
      %v1168 = vld [vmem:[%s390 + $0x38] sm:$0xff]
      %v1169 = vld [vmem:[%s390 + $0x40] sm:$0xff]
      %v1170 = vld [vmem:[%s390 + $0x48] sm:$0xff]
      %v1171 = vld [vmem:[%s390 + $0x50] sm:$0xff]
      %v1172 = vld [vmem:[%s390 + $0x58] sm:$0xff]
      %v1173 = vld [vmem:[%s390 + $0x60] sm:$0x3]
      %v1174 = vpack.c.bf16 %v1164, %v1163
      %v1175 = vpack.c.bf16 %v1166, %v1165
      %v1176 = vpack.c.bf16 %v1168, %v1167
      %v1177 = vpack.c.bf16 %v1170, %v1169
      %v1178 = vpack.c.bf16 %v1172, %v1171
      %v1179 = vpack.c.bf16 %v1173, %v1173
      %s1180 = scalar_lea.vmem %s2, 12
      %v1181 = vld [vmem:[%s1180] sm:$0x3]
      %v1183 = vsel %vm435, %v1174, 0
      %v1186 = vsel %vm435, %v1175, 0
      %v1189 = vsel %vm435, %v1176, 0
      %v1192 = vsel %vm435, %v1177, 0
      %v1195 = vsel %vm435, %v1178, 0
      %v1198 = vsel %vm435, %v1179, 0
      %v1201 = vsel %vm454, %v1181, 0
      %1203 = vmatprep.subr.bf16.mxu0 0
      %1204 = vmatpush1.bf16.msra.mxu0 %v1201
      %1205 = vmatprep.subr.bf16.mxu0 0
      %1206 = vmatpush1.bf16.msra.mxu0 0
      %1207 = vmatprep.subr.bf16.mxu0 0
      %1208 = vmatpush1.bf16.msra.mxu0 0
      %1209 = vmatprep.subr.bf16.mxu0 0
      %1210 = vmatpush1.bf16.msra.mxu0 0
      %1211 = vmatprep.subr.bf16.mxu0 0
      %1212 = vmatpush1.bf16.msra.mxu0 0
      %1213 = vmatprep.subr.bf16.mxu0 0
      %1214 = vmatpush1.bf16.msra.mxu0 0
      %1215 = vmatprep.subr.bf16.mxu0 0
      %1216 = vmatpush1.bf16.msra.mxu0 0
      %1217 = vmatprep.subr.bf16.mxu0 0
      %1218 = vmatpush1.bf16.msra.mxu0 0
      %1219 = vmatprep.subr.bf16.mxu0 0
      %1220 = vmatpush1.bf16.msra.mxu0 0
      %1221 = vmatprep.subr.bf16.mxu0 0
      %1222 = vmatpush1.bf16.msra.mxu0 0
      %1223 = vmatprep.subr.bf16.mxu0 0
      %1224 = vmatpush1.bf16.msra.mxu0 0
      %1225 = vmatprep.subr.bf16.mxu0 0
      %1226 = vmatpush1.bf16.msra.mxu0 0
      %1227 = vmatprep.subr.bf16.mxu0 0
      %1228 = vmatpush1.bf16.msra.mxu0 0
      %1229 = vmatprep.subr.bf16.mxu0 0
      %1230 = vmatpush1.bf16.msra.mxu0 0
      %1231 = vmatprep.subr.bf16.mxu0 0
      %1232 = vmatpush1.bf16.msra.mxu0 0
      %1233 = vmatprep.subr.bf16.mxu0 0
      %1234 = vmatpush1.bf16.msra.mxu0 0
      %1235 = vmatprep.mubr.bf16.mxu0 0
      %1236 = vmatmul.mubr.bf16.gmra.mrb[0].mxu0 %v1183
      %v1237 = vpop.f32.mrb[0].mxu0
      %v1238 = vadd.f32 0.0, %v1237
      %v1239 = vpop.f32.mrb[0].mxu0
      %v1240 = vpop.f32.mrb[0].mxu0
      %v1241 = vadd.f32 0.0, %v1240
      %v1242 = vpop.f32.mrb[0].mxu0
      %1243 = vmatprep.mubr.bf16.mxu0 0
      %1244 = vmatmul.mubr.bf16.gmra.mrb[0].mxu0 %v1186
      %v1245 = vpop.f32.mrb[0].mxu0
      %v1246 = vadd.f32 0.0, %v1245
      %v1247 = vpop.f32.mrb[0].mxu0
      %v1248 = vpop.f32.mrb[0].mxu0
      %v1249 = vadd.f32 0.0, %v1248
      %v1250 = vpop.f32.mrb[0].mxu0
      %1251 = vmatprep.mubr.bf16.mxu0 0
      %1252 = vmatmul.mubr.bf16.gmra.mrb[0].mxu0 %v1189
      %v1253 = vpop.f32.mrb[0].mxu0
      %v1254 = vadd.f32 0.0, %v1253
      %v1255 = vpop.f32.mrb[0].mxu0
      %v1256 = vpop.f32.mrb[0].mxu0
      %v1257 = vadd.f32 0.0, %v1256
      %v1258 = vpop.f32.mrb[0].mxu0
      %1259 = vmatprep.mubr.bf16.mxu0 0
      %1260 = vmatmul.mubr.bf16.gmra.mrb[0].mxu0 %v1192
      %v1261 = vpop.f32.mrb[0].mxu0
      %v1262 = vadd.f32 0.0, %v1261
      %v1263 = vpop.f32.mrb[0].mxu0
      %v1264 = vpop.f32.mrb[0].mxu0
      %v1265 = vadd.f32 0.0, %v1264
      %v1266 = vpop.f32.mrb[0].mxu0
      %1267 = vmatprep.mubr.bf16.mxu0 0
      %1268 = vmatmul.mubr.bf16.gmra.mrb[0].mxu0 %v1195
      %v1269 = vpop.f32.mrb[0].mxu0
      %v1270 = vadd.f32 0.0, %v1269
      %v1271 = vpop.f32.mrb[0].mxu0
      %v1272 = vpop.f32.mrb[0].mxu0
      %v1273 = vadd.f32 0.0, %v1272
      %v1274 = vpop.f32.mrb[0].mxu0
      %1275 = vmatprep.mubr.bf16.mxu0 0
      %1276 = vmatmul.mubr.bf16.gmra.mrb[0].mxu0 %v1198
      %v1277 = vpop.f32.mrb[0].mxu0
      %v1278 = vadd.f32 0.0, %v1277
      %v1279 = vpop.f32.mrb[0].mxu0
      %v1280 = vpop.f32.mrb[0].mxu0
      %v1281 = vpop.f32.mrb[0].mxu0
      %1282 = vdwg.mxu0
      %v1283 = vadd.f32 %v1152, %v1238
      %v1284 = vadd.f32 %v1153, %v1241
      %v1285 = vadd.f32 %v1154, %v1246
      %v1286 = vadd.f32 %v1155, %v1249
      %v1287 = vadd.f32 %v1156, %v1254
      %v1288 = vadd.f32 %v1157, %v1257
      %v1289 = vadd.f32 %v1158, %v1262
      %v1290 = vadd.f32 %v1159, %v1265
      %v1291 = vadd.f32 %v1160, %v1270
      %v1292 = vadd.f32 %v1161, %v1273
      %v1293 = vadd.f32 %v1162, %v1278
      %v1294 = vld [vmem:[%s390 + $0x11] sm:$0xff]
      %v1295 = vld [vmem:[%s390 + $0x19] sm:$0xff]
      %v1296 = vld [vmem:[%s390 + $0x21] sm:$0xff]
      %v1297 = vld [vmem:[%s390 + $0x29] sm:$0xff]
      %v1298 = vld [vmem:[%s390 + $0x31] sm:$0xff]
      %v1299 = vld [vmem:[%s390 + $0x39] sm:$0xff]
      %v1300 = vld [vmem:[%s390 + $0x41] sm:$0xff]
      %v1301 = vld [vmem:[%s390 + $0x49] sm:$0xff]
      %v1302 = vld [vmem:[%s390 + $0x51] sm:$0xff]
      %v1303 = vld [vmem:[%s390 + $0x59] sm:$0xff]
      %v1304 = vld [vmem:[%s390 + $0x61] sm:$0x3]
      %v1305 = vpack.c.bf16 %v1295, %v1294
      %v1306 = vpack.c.bf16 %v1297, %v1296
      %v1307 = vpack.c.bf16 %v1299, %v1298
      %v1308 = vpack.c.bf16 %v1301, %v1300
      %v1309 = vpack.c.bf16 %v1303, %v1302
      %v1310 = vpack.c.bf16 %v1304, %v1304
      %s1311 = scalar_lea.vmem %s2, 14
      %v1312 = vld [vmem:[%s1311] sm:$0x3]
      %v1314 = vsel %vm435, %v1305, 0
      %v1317 = vsel %vm435, %v1306, 0
      %v1320 = vsel %vm435, %v1307, 0
      %v1323 = vsel %vm435, %v1308, 0
      %v1326 = vsel %vm435, %v1309, 0
      %v1329 = vsel %vm435, %v1310, 0
      %v1332 = vsel %vm454, %v1312, 0
      %1334 = vmatprep.subr.bf16.mxu0 0
      %1335 = vmatpush1.bf16.msra.mxu0 %v1332
      %1336 = vmatprep.subr.bf16.mxu0 0
      %1337 = vmatpush1.bf16.msra.mxu0 0
      %1338 = vmatprep.subr.bf16.mxu0 0
      %1339 = vmatpush1.bf16.msra.mxu0 0
      %1340 = vmatprep.subr.bf16.mxu0 0
      %1341 = vmatpush1.bf16.msra.mxu0 0
      %1342 = vmatprep.subr.bf16.mxu0 0
      %1343 = vmatpush1.bf16.msra.mxu0 0
      %1344 = vmatprep.subr.bf16.mxu0 0
      %1345 = vmatpush1.bf16.msra.mxu0 0
      %1346 = vmatprep.subr.bf16.mxu0 0
      %1347 = vmatpush1.bf16.msra.mxu0 0
      %1348 = vmatprep.subr.bf16.mxu0 0
      %1349 = vmatpush1.bf16.msra.mxu0 0
      %1350 = vmatprep.subr.bf16.mxu0 0
      %1351 = vmatpush1.bf16.msra.mxu0 0
      %1352 = vmatprep.subr.bf16.mxu0 0
      %1353 = vmatpush1.bf16.msra.mxu0 0
      %1354 = vmatprep.subr.bf16.mxu0 0
      %1355 = vmatpush1.bf16.msra.mxu0 0
      %1356 = vmatprep.subr.bf16.mxu0 0
      %1357 = vmatpush1.bf16.msra.mxu0 0
      %1358 = vmatprep.subr.bf16.mxu0 0
      %1359 = vmatpush1.bf16.msra.mxu0 0
      %1360 = vmatprep.subr.bf16.mxu0 0
      %1361 = vmatpush1.bf16.msra.mxu0 0
      %1362 = vmatprep.subr.bf16.mxu0 0
      %1363 = vmatpush1.bf16.msra.mxu0 0
      %1364 = vmatprep.subr.bf16.mxu0 0
      %1365 = vmatpush1.bf16.msra.mxu0 0
      %1366 = vmatprep.mubr.bf16.mxu0 0
      %1367 = vmatmul.mubr.bf16.gmra.mrb[0].mxu0 %v1314
      %v1368 = vpop.f32.mrb[0].mxu0
      %v1369 = vadd.f32 0.0, %v1368
      %v1370 = vpop.f32.mrb[0].mxu0
      %v1371 = vpop.f32.mrb[0].mxu0
      %v1372 = vadd.f32 0.0, %v1371
      %v1373 = vpop.f32.mrb[0].mxu0
      %1374 = vmatprep.mubr.bf16.mxu0 0
      %1375 = vmatmul.mubr.bf16.gmra.mrb[0].mxu0 %v1317
      %v1376 = vpop.f32.mrb[0].mxu0
      %v1377 = vadd.f32 0.0, %v1376
      %v1378 = vpop.f32.mrb[0].mxu0
      %v1379 = vpop.f32.mrb[0].mxu0
      %v1380 = vadd.f32 0.0, %v1379
      %v1381 = vpop.f32.mrb[0].mxu0
      %1382 = vmatprep.mubr.bf16.mxu0 0
      %1383 = vmatmul.mubr.bf16.gmra.mrb[0].mxu0 %v1320
      %v1384 = vpop.f32.mrb[0].mxu0
      %v1385 = vadd.f32 0.0, %v1384
      %v1386 = vpop.f32.mrb[0].mxu0
      %v1387 = vpop.f32.mrb[0].mxu0
      %v1388 = vadd.f32 0.0, %v1387
      %v1389 = vpop.f32.mrb[0].mxu0
      %1390 = vmatprep.mubr.bf16.mxu0 0
      %1391 = vmatmul.mubr.bf16.gmra.mrb[0].mxu0 %v1323
      %v1392 = vpop.f32.mrb[0].mxu0
      %v1393 = vadd.f32 0.0, %v1392
      %v1394 = vpop.f32.mrb[0].mxu0
      %v1395 = vpop.f32.mrb[0].mxu0
      %v1396 = vadd.f32 0.0, %v1395
      %v1397 = vpop.f32.mrb[0].mxu0
      %1398 = vmatprep.mubr.bf16.mxu0 0
      %1399 = vmatmul.mubr.bf16.gmra.mrb[0].mxu0 %v1326
      %v1400 = vpop.f32.mrb[0].mxu0
      %v1401 = vadd.f32 0.0, %v1400
      %v1402 = vpop.f32.mrb[0].mxu0
      %v1403 = vpop.f32.mrb[0].mxu0
      %v1404 = vadd.f32 0.0, %v1403
      %v1405 = vpop.f32.mrb[0].mxu0
      %1406 = vmatprep.mubr.bf16.mxu0 0
      %1407 = vmatmul.mubr.bf16.gmra.mrb[0].mxu0 %v1329
      %v1408 = vpop.f32.mrb[0].mxu0
      %v1409 = vadd.f32 0.0, %v1408
      %v1410 = vpop.f32.mrb[0].mxu0
      %v1411 = vpop.f32.mrb[0].mxu0
      %v1412 = vpop.f32.mrb[0].mxu0
      %1413 = vdwg.mxu0
      %v1414 = vadd.f32 %v1283, %v1369
      %v1415 = vadd.f32 %v1284, %v1372
      %v1416 = vadd.f32 %v1285, %v1377
      %v1417 = vadd.f32 %v1286, %v1380
      %v1418 = vadd.f32 %v1287, %v1385
      %v1419 = vadd.f32 %v1288, %v1388
      %v1420 = vadd.f32 %v1289, %v1393
      %v1421 = vadd.f32 %v1290, %v1396
      %v1422 = vadd.f32 %v1291, %v1401
      %v1423 = vadd.f32 %v1292, %v1404
      %v1424 = vadd.f32 %v1293, %v1409
      %v1425 = vld [vmem:[%s390 + $0x12] sm:$0xff]
      %v1426 = vld [vmem:[%s390 + $0x1a] sm:$0xff]
      %v1427 = vld [vmem:[%s390 + $0x22] sm:$0xff]
      %v1428 = vld [vmem:[%s390 + $0x2a] sm:$0xff]
      %v1429 = vld [vmem:[%s390 + $0x32] sm:$0xff]
      %v1430 = vld [vmem:[%s390 + $0x3a] sm:$0xff]
      %v1431 = vld [vmem:[%s390 + $0x42] sm:$0xff]
      %v1432 = vld [vmem:[%s390 + $0x4a] sm:$0xff]
      %v1433 = vld [vmem:[%s390 + $0x52] sm:$0xff]
      %v1434 = vld [vmem:[%s390 + $0x5a] sm:$0xff]
      %v1435 = vld [vmem:[%s390 + $0x62] sm:$0x3]
      %v1436 = vpack.c.bf16 %v1426, %v1425
      %v1437 = vpack.c.bf16 %v1428, %v1427
      %v1438 = vpack.c.bf16 %v1430, %v1429
      %v1439 = vpack.c.bf16 %v1432, %v1431
      %v1440 = vpack.c.bf16 %v1434, %v1433
      %v1441 = vpack.c.bf16 %v1435, %v1435
      %s1442 = scalar_lea.vmem %s2, 16
      %v1443 = vld [vmem:[%s1442] sm:$0x3]
      %v1445 = vsel %vm435, %v1436, 0
      %v1448 = vsel %vm435, %v1437, 0
      %v1451 = vsel %vm435, %v1438, 0
      %v1454 = vsel %vm435, %v1439, 0
      %v1457 = vsel %vm435, %v1440, 0
      %v1460 = vsel %vm435, %v1441, 0
      %v1463 = vsel %vm454, %v1443, 0
      %1465 = vmatprep.subr.bf16.mxu0 0
      %1466 = vmatpush1.bf16.msra.mxu0 %v1463
      %1467 = vmatprep.subr.bf16.mxu0 0
      %1468 = vmatpush1.bf16.msra.mxu0 0
      %1469 = vmatprep.subr.bf16.mxu0 0
      %1470 = vmatpush1.bf16.msra.mxu0 0
      %1471 = vmatprep.subr.bf16.mxu0 0
      %1472 = vmatpush1.bf16.msra.mxu0 0
      %1473 = vmatprep.subr.bf16.mxu0 0
      %1474 = vmatpush1.bf16.msra.mxu0 0
      %1475 = vmatprep.subr.bf16.mxu0 0
      %1476 = vmatpush1.bf16.msra.mxu0 0
      %1477 = vmatprep.subr.bf16.mxu0 0
      %1478 = vmatpush1.bf16.msra.mxu0 0
      %1479 = vmatprep.subr.bf16.mxu0 0
      %1480 = vmatpush1.bf16.msra.mxu0 0
      %1481 = vmatprep.subr.bf16.mxu0 0
      %1482 = vmatpush1.bf16.msra.mxu0 0
      %1483 = vmatprep.subr.bf16.mxu0 0
      %1484 = vmatpush1.bf16.msra.mxu0 0
      %1485 = vmatprep.subr.bf16.mxu0 0
      %1486 = vmatpush1.bf16.msra.mxu0 0
      %1487 = vmatprep.subr.bf16.mxu0 0
      %1488 = vmatpush1.bf16.msra.mxu0 0
      %1489 = vmatprep.subr.bf16.mxu0 0
      %1490 = vmatpush1.bf16.msra.mxu0 0
      %1491 = vmatprep.subr.bf16.mxu0 0
      %1492 = vmatpush1.bf16.msra.mxu0 0
      %1493 = vmatprep.subr.bf16.mxu0 0
      %1494 = vmatpush1.bf16.msra.mxu0 0
      %1495 = vmatprep.subr.bf16.mxu0 0
      %1496 = vmatpush1.bf16.msra.mxu0 0
      %1497 = vmatprep.mubr.bf16.mxu0 0
      %1498 = vmatmul.mubr.bf16.gmra.mrb[0].mxu0 %v1445
      %v1499 = vpop.f32.mrb[0].mxu0
      %v1500 = vadd.f32 0.0, %v1499
      %v1501 = vpop.f32.mrb[0].mxu0
      %v1502 = vpop.f32.mrb[0].mxu0
      %v1503 = vadd.f32 0.0, %v1502
      %v1504 = vpop.f32.mrb[0].mxu0
      %1505 = vmatprep.mubr.bf16.mxu0 0
      %1506 = vmatmul.mubr.bf16.gmra.mrb[0].mxu0 %v1448
      %v1507 = vpop.f32.mrb[0].mxu0
      %v1508 = vadd.f32 0.0, %v1507
      %v1509 = vpop.f32.mrb[0].mxu0
      %v1510 = vpop.f32.mrb[0].mxu0
      %v1511 = vadd.f32 0.0, %v1510
      %v1512 = vpop.f32.mrb[0].mxu0
      %1513 = vmatprep.mubr.bf16.mxu0 0
      %1514 = vmatmul.mubr.bf16.gmra.mrb[0].mxu0 %v1451
      %v1515 = vpop.f32.mrb[0].mxu0
      %v1516 = vadd.f32 0.0, %v1515
      %v1517 = vpop.f32.mrb[0].mxu0
      %v1518 = vpop.f32.mrb[0].mxu0
      %v1519 = vadd.f32 0.0, %v1518
      %v1520 = vpop.f32.mrb[0].mxu0
      %1521 = vmatprep.mubr.bf16.mxu0 0
      %1522 = vmatmul.mubr.bf16.gmra.mrb[0].mxu0 %v1454
      %v1523 = vpop.f32.mrb[0].mxu0
      %v1524 = vadd.f32 0.0, %v1523
      %v1525 = vpop.f32.mrb[0].mxu0
      %v1526 = vpop.f32.mrb[0].mxu0
      %v1527 = vadd.f32 0.0, %v1526
      %v1528 = vpop.f32.mrb[0].mxu0
      %1529 = vmatprep.mubr.bf16.mxu0 0
      %1530 = vmatmul.mubr.bf16.gmra.mrb[0].mxu0 %v1457
      %v1531 = vpop.f32.mrb[0].mxu0
      %v1532 = vadd.f32 0.0, %v1531
      %v1533 = vpop.f32.mrb[0].mxu0
      %v1534 = vpop.f32.mrb[0].mxu0
      %v1535 = vadd.f32 0.0, %v1534
      %v1536 = vpop.f32.mrb[0].mxu0
      %1537 = vmatprep.mubr.bf16.mxu0 0
      %1538 = vmatmul.mubr.bf16.gmra.mrb[0].mxu0 %v1460
      %v1539 = vpop.f32.mrb[0].mxu0
      %v1540 = vadd.f32 0.0, %v1539
      %v1541 = vpop.f32.mrb[0].mxu0
      %v1542 = vpop.f32.mrb[0].mxu0
      %v1543 = vpop.f32.mrb[0].mxu0
      %1544 = vdwg.mxu0
      %v1545 = vadd.f32 %v1414, %v1500
      %v1546 = vadd.f32 %v1415, %v1503
      %v1547 = vadd.f32 %v1416, %v1508
      %v1548 = vadd.f32 %v1417, %v1511
      %v1549 = vadd.f32 %v1418, %v1516
      %v1550 = vadd.f32 %v1419, %v1519
      %v1551 = vadd.f32 %v1420, %v1524
      %v1552 = vadd.f32 %v1421, %v1527
      %v1553 = vadd.f32 %v1422, %v1532
      %v1554 = vadd.f32 %v1423, %v1535
      %v1555 = vadd.f32 %v1424, %v1540
      %v1556 = vld [vmem:[%s3] sm:$0x1]
      %v1558 = vlaneseq
      %v1559 = vshrl.u32 %v1558, 7
      %v1560 = vsub.s32 0, %v1559
      %v1561 = vrot.slane %v1556, %v1560
      %v1563 = vadd.f32 %v1545, %v1561
      %v1564 = vadd.f32 %v1546, %v1561
      %v1565 = vadd.f32 %v1547, %v1561
      %v1566 = vadd.f32 %v1548, %v1561
      %v1567 = vadd.f32 %v1549, %v1561
      %v1568 = vadd.f32 %v1550, %v1561
      %v1569 = vadd.f32 %v1551, %v1561
      %v1570 = vadd.f32 %v1552, %v1561
      %v1571 = vadd.f32 %v1553, %v1561
      %v1572 = vadd.f32 %v1554, %v1561
      %v1573 = vadd.f32 %v1555, %v1561
      %v1574 = vmax.f32 %v1563, 0.0
      %v1575 = vmax.f32 %v1564, 0.0
      %v1576 = vmax.f32 %v1565, 0.0
      %v1577 = vmax.f32 %v1566, 0.0
      %v1578 = vmax.f32 %v1567, 0.0
      %v1579 = vmax.f32 %v1568, 0.0
      %v1580 = vmax.f32 %v1569, 0.0
      %v1581 = vmax.f32 %v1570, 0.0
      %v1582 = vmax.f32 %v1571, 0.0
      %v1583 = vmax.f32 %v1572, 0.0
      %v1584 = vmax.f32 %v1573, 0.0
      %vm1585 = vcmask 261120
      %1586 = vst.msk [vmem:[#allocation2] sm:$0xff] %vm1585, %v1574
      %1587 = vst.msk [vmem:[#allocation2 + $0x8] sm:$0xff] %vm1585, %v1575
      %1588 = vst.msk [vmem:[#allocation2 + $0x10] sm:$0xff] %vm1585, %v1576
      %1589 = vst.msk [vmem:[#allocation2 + $0x18] sm:$0xff] %vm1585, %v1577
      %1590 = vst.msk [vmem:[#allocation2 + $0x20] sm:$0xff] %vm1585, %v1578
      %1591 = vst.msk [vmem:[#allocation2 + $0x28] sm:$0xff] %vm1585, %v1579
      %1592 = vst.msk [vmem:[#allocation2 + $0x30] sm:$0xff] %vm1585, %v1580
      %1593 = vst.msk [vmem:[#allocation2 + $0x38] sm:$0xff] %vm1585, %v1581
      %1594 = vst.msk [vmem:[#allocation2 + $0x40] sm:$0xff] %vm1585, %v1582
      %1595 = vst.msk [vmem:[#allocation2 + $0x48] sm:$0xff] %vm1585, %v1583
      %vm1596 = vcmask 254976
      %1597 = vst.msk [vmem:[#allocation2 + $0x50] sm:$0x3] %vm1596, %v1584
      %v1598 = vld [vmem:[#allocation2] sm:$0xff]
      %v1599 = vld [vmem:[#allocation2 + $0x8] sm:$0xff]
      %v1600 = vld [vmem:[#allocation2 + $0x10] sm:$0xff]
      %v1601 = vld [vmem:[#allocation2 + $0x18] sm:$0xff]
      %v1602 = vld [vmem:[#allocation2 + $0x20] sm:$0xff]
      %v1603 = vld [vmem:[#allocation2 + $0x28] sm:$0xff]
      %v1604 = vld [vmem:[#allocation2 + $0x30] sm:$0xff]
      %v1605 = vld [vmem:[#allocation2 + $0x38] sm:$0xff]
      %v1606 = vpack.c.bf16 %v1599, %v1598
      %v1607 = vpack.c.bf16 %v1601, %v1600
      %v1608 = vpack.c.bf16 %v1603, %v1602
      %v1609 = vpack.c.bf16 %v1605, %v1604
      %v1610 = vld [vmem:[%s4] sm:$0xf]
      %v1611 = vld [vmem:[%s4 + $0x4] sm:$0xf]
      %v1612 = vld [vmem:[%s4 + $0x8] sm:$0xf]
      %v1613 = vld [vmem:[%s4 + $0xc] sm:$0xf]
      %v1614 = vld [vmem:[#allocation2 + $0x1] sm:$0xff]
      %v1615 = vld [vmem:[#allocation2 + $0x9] sm:$0xff]
      %v1616 = vld [vmem:[#allocation2 + $0x11] sm:$0xff]
      %v1617 = vld [vmem:[#allocation2 + $0x19] sm:$0xff]
      %v1618 = vld [vmem:[#allocation2 + $0x21] sm:$0xff]
      %v1619 = vld [vmem:[#allocation2 + $0x29] sm:$0xff]
      %v1620 = vld [vmem:[#allocation2 + $0x31] sm:$0xff]
      %v1621 = vld [vmem:[#allocation2 + $0x39] sm:$0xff]
      %v1622 = vpack.c.bf16 %v1615, %v1614
      %v1623 = vpack.c.bf16 %v1617, %v1616
      %v1624 = vpack.c.bf16 %v1619, %v1618
      %v1625 = vpack.c.bf16 %v1621, %v1620
      %s1626 = scalar_lea.vmem %s4, 16
      %v1627 = vld [vmem:[%s1626] sm:$0xf]
      %v1628 = vld [vmem:[%s1626 + $0x4] sm:$0xf]
      %v1629 = vld [vmem:[%s1626 + $0x8] sm:$0xf]
      %v1630 = vld [vmem:[%s1626 + $0xc] sm:$0xf]
      %v1635 = vunpack.c.l.b16 %v1627
      %v1636 = vunpack.c.l.b16 %v1628
      %v1637 = vunpack.c.l.b16 %v1629
      %v1638 = vunpack.c.l.b16 %v1630
      %v1639 = vpack.c.b16 %v1636, %v1635
      %v1640 = vpack.c.b16 %v1638, %v1637
      %v1644 = vsel %vm1585, %v1622, 0
      %v1647 = vsel %vm1585, %v1623, 0
      %v1650 = vsel %vm1585, %v1624, 0
      %v1653 = vsel %vm1585, %v1625, 0
      %1655 = vmatprep.subr.bf16.mxu0 0
      %1656 = vmatpush1.bf16.msra.mxu0 %v1639
      %1657 = vmatprep.subr.bf16.mxu0 0
      %1658 = vmatpush1.bf16.msra.mxu0 %v1640
      %1659 = vmatprep.subr.bf16.mxu0 0
      %1660 = vmatpush1.bf16.msra.mxu0 0
      %1661 = vmatprep.subr.bf16.mxu0 0
      %1662 = vmatpush1.bf16.msra.mxu0 0
      %1663 = vmatprep.subr.bf16.mxu0 0
      %1664 = vmatpush1.bf16.msra.mxu0 0
      %1665 = vmatprep.subr.bf16.mxu0 0
      %1666 = vmatpush1.bf16.msra.mxu0 0
      %1667 = vmatprep.subr.bf16.mxu0 0
      %1668 = vmatpush1.bf16.msra.mxu0 0
      %1669 = vmatprep.subr.bf16.mxu0 0
      %1670 = vmatpush1.bf16.msra.mxu0 0
      %1671 = vmatprep.subr.bf16.mxu0 0
      %1672 = vmatpush1.bf16.msra.mxu0 0
      %1673 = vmatprep.subr.bf16.mxu0 0
      %1674 = vmatpush1.bf16.msra.mxu0 0
      %1675 = vmatprep.subr.bf16.mxu0 0
      %1676 = vmatpush1.bf16.msra.mxu0 0
      %1677 = vmatprep.subr.bf16.mxu0 0
      %1678 = vmatpush1.bf16.msra.mxu0 0
      %1679 = vmatprep.subr.bf16.mxu0 0
      %1680 = vmatpush1.bf16.msra.mxu0 0
      %1681 = vmatprep.subr.bf16.mxu0 0
      %1682 = vmatpush1.bf16.msra.mxu0 0
      %1683 = vmatprep.subr.bf16.mxu0 0
      %1684 = vmatpush1.bf16.msra.mxu0 0
      %1685 = vmatprep.subr.bf16.mxu0 0
      %1686 = vmatpush1.bf16.msra.mxu0 0
      %1687 = vmatprep.mubr.bf16.mxu0 0
      %1688 = vmatmul.mubr.bf16.gmra.mrb[0].mxu0 %v1644
      %v1689 = vpop.f32.mrb[0].mxu0
      %v1690 = vadd.f32 0.0, %v1689
      %v1691 = vpop.f32.mrb[0].mxu0
      %v1692 = vpop.f32.mrb[0].mxu0
      %v1693 = vadd.f32 0.0, %v1692
      %v1694 = vpop.f32.mrb[0].mxu0
      %1695 = vmatprep.mubr.bf16.mxu0 0
      %1696 = vmatmul.mubr.bf16.gmra.mrb[0].mxu0 %v1647
      %v1697 = vpop.f32.mrb[0].mxu0
      %v1698 = vadd.f32 0.0, %v1697
      %v1699 = vpop.f32.mrb[0].mxu0
      %v1700 = vpop.f32.mrb[0].mxu0
      %v1701 = vadd.f32 0.0, %v1700
      %v1702 = vpop.f32.mrb[0].mxu0
      %1703 = vmatprep.mubr.bf16.mxu0 0
      %1704 = vmatmul.mubr.bf16.gmra.mrb[0].mxu0 %v1650
      %v1705 = vpop.f32.mrb[0].mxu0
      %v1706 = vadd.f32 0.0, %v1705
      %v1707 = vpop.f32.mrb[0].mxu0
      %v1708 = vpop.f32.mrb[0].mxu0
      %v1709 = vadd.f32 0.0, %v1708
      %v1710 = vpop.f32.mrb[0].mxu0
      %1711 = vmatprep.mubr.bf16.mxu0 0
      %1712 = vmatmul.mubr.bf16.gmra.mrb[0].mxu0 %v1653
      %v1713 = vpop.f32.mrb[0].mxu0
      %v1714 = vadd.f32 0.0, %v1713
      %v1715 = vpop.f32.mrb[0].mxu0
      %v1716 = vpop.f32.mrb[0].mxu0
      %v1717 = vadd.f32 0.0, %v1716
      %v1718 = vpop.f32.mrb[0].mxu0
      %1719 = vdwg.mxu0
      %v1724 = vunpack.c.l.b16 %v1610
      %v1725 = vunpack.c.l.b16 %v1611
      %v1726 = vunpack.c.l.b16 %v1612
      %v1727 = vunpack.c.l.b16 %v1613
      %v1728 = vpack.c.b16 %v1725, %v1724
      %v1729 = vpack.c.b16 %v1727, %v1726
      %v1733 = vsel %vm1585, %v1606, 0
      %v1736 = vsel %vm1585, %v1607, 0
      %v1739 = vsel %vm1585, %v1608, 0
      %v1742 = vsel %vm1585, %v1609, 0
      %1744 = vmatprep.subr.bf16.mxu0 0
      %1745 = vmatpush1.bf16.msra.mxu0 %v1728
      %1746 = vmatprep.subr.bf16.mxu0 0
      %1747 = vmatpush1.bf16.msra.mxu0 %v1729
      %1748 = vmatprep.subr.bf16.mxu0 0
      %1749 = vmatpush1.bf16.msra.mxu0 0
      %1750 = vmatprep.subr.bf16.mxu0 0
      %1751 = vmatpush1.bf16.msra.mxu0 0
      %1752 = vmatprep.subr.bf16.mxu0 0
      %1753 = vmatpush1.bf16.msra.mxu0 0
      %1754 = vmatprep.subr.bf16.mxu0 0
      %1755 = vmatpush1.bf16.msra.mxu0 0
      %1756 = vmatprep.subr.bf16.mxu0 0
      %1757 = vmatpush1.bf16.msra.mxu0 0
      %1758 = vmatprep.subr.bf16.mxu0 0
      %1759 = vmatpush1.bf16.msra.mxu0 0
      %1760 = vmatprep.subr.bf16.mxu0 0
      %1761 = vmatpush1.bf16.msra.mxu0 0
      %1762 = vmatprep.subr.bf16.mxu0 0
      %1763 = vmatpush1.bf16.msra.mxu0 0
      %1764 = vmatprep.subr.bf16.mxu0 0
      %1765 = vmatpush1.bf16.msra.mxu0 0
      %1766 = vmatprep.subr.bf16.mxu0 0
      %1767 = vmatpush1.bf16.msra.mxu0 0
      %1768 = vmatprep.subr.bf16.mxu0 0
      %1769 = vmatpush1.bf16.msra.mxu0 0
      %1770 = vmatprep.subr.bf16.mxu0 0
      %1771 = vmatpush1.bf16.msra.mxu0 0
      %1772 = vmatprep.subr.bf16.mxu0 0
      %1773 = vmatpush1.bf16.msra.mxu0 0
      %1774 = vmatprep.subr.bf16.mxu0 0
      %1775 = vmatpush1.bf16.msra.mxu0 0
      %1776 = vmatprep.mubr.bf16.mxu0 0
      %1777 = vmatmul.mubr.bf16.gmra.mrb[0].mxu0 %v1733
      %v1778 = vpop.f32.mrb[0].mxu0
      %v1779 = vadd.f32 %v1690, %v1778
      %v1780 = vpop.f32.mrb[0].mxu0
      %v1781 = vpop.f32.mrb[0].mxu0
      %v1782 = vadd.f32 %v1693, %v1781
      %v1783 = vpop.f32.mrb[0].mxu0
      %1784 = vmatprep.mubr.bf16.mxu0 0
      %1785 = vmatmul.mubr.bf16.gmra.mrb[0].mxu0 %v1736
      %v1786 = vpop.f32.mrb[0].mxu0
      %v1787 = vadd.f32 %v1698, %v1786
      %v1788 = vpop.f32.mrb[0].mxu0
      %v1789 = vpop.f32.mrb[0].mxu0
      %v1790 = vadd.f32 %v1701, %v1789
      %v1791 = vpop.f32.mrb[0].mxu0
      %1792 = vmatprep.mubr.bf16.mxu0 0
      %1793 = vmatmul.mubr.bf16.gmra.mrb[0].mxu0 %v1739
      %v1794 = vpop.f32.mrb[0].mxu0
      %v1795 = vadd.f32 %v1706, %v1794
      %v1796 = vpop.f32.mrb[0].mxu0
      %v1797 = vpop.f32.mrb[0].mxu0
      %v1798 = vadd.f32 %v1709, %v1797
      %v1799 = vpop.f32.mrb[0].mxu0
      %1800 = vmatprep.mubr.bf16.mxu0 0
      %1801 = vmatmul.mubr.bf16.gmra.mrb[0].mxu0 %v1742
      %v1802 = vpop.f32.mrb[0].mxu0
      %v1803 = vadd.f32 %v1714, %v1802
      %v1804 = vpop.f32.mrb[0].mxu0
      %v1805 = vpop.f32.mrb[0].mxu0
      %v1806 = vadd.f32 %v1717, %v1805
      %v1807 = vpop.f32.mrb[0].mxu0
      %1808 = vdwg.mxu0
      %v1809 = vld [vmem:[#allocation2 + $0x2] sm:$0xff]
      %v1810 = vld [vmem:[#allocation2 + $0xa] sm:$0xff]
      %v1811 = vld [vmem:[#allocation2 + $0x12] sm:$0xff]
      %v1812 = vld [vmem:[#allocation2 + $0x1a] sm:$0xff]
      %v1813 = vld [vmem:[#allocation2 + $0x22] sm:$0xff]
      %v1814 = vld [vmem:[#allocation2 + $0x2a] sm:$0xff]
      %v1815 = vld [vmem:[#allocation2 + $0x32] sm:$0xff]
      %v1816 = vld [vmem:[#allocation2 + $0x3a] sm:$0xff]
      %v1817 = vpack.c.bf16 %v1810, %v1809
      %v1818 = vpack.c.bf16 %v1812, %v1811
      %v1819 = vpack.c.bf16 %v1814, %v1813
      %v1820 = vpack.c.bf16 %v1816, %v1815
      %s1821 = scalar_lea.vmem %s4, 32
      %v1822 = vld [vmem:[%s1821] sm:$0xf]
      %v1823 = vld [vmem:[%s1821 + $0x4] sm:$0xf]
      %v1824 = vld [vmem:[%s1821 + $0x8] sm:$0xf]
      %v1825 = vld [vmem:[%s1821 + $0xc] sm:$0xf]
      %v1830 = vunpack.c.l.b16 %v1822
      %v1831 = vunpack.c.l.b16 %v1823
      %v1832 = vunpack.c.l.b16 %v1824
      %v1833 = vunpack.c.l.b16 %v1825
      %v1834 = vpack.c.b16 %v1831, %v1830
      %v1835 = vpack.c.b16 %v1833, %v1832
      %v1839 = vsel %vm1585, %v1817, 0
      %v1842 = vsel %vm1585, %v1818, 0
      %v1845 = vsel %vm1585, %v1819, 0
      %v1848 = vsel %vm1585, %v1820, 0
      %1850 = vmatprep.subr.bf16.mxu0 0
      %1851 = vmatpush1.bf16.msra.mxu0 %v1834
      %1852 = vmatprep.subr.bf16.mxu0 0
      %1853 = vmatpush1.bf16.msra.mxu0 %v1835
      %1854 = vmatprep.subr.bf16.mxu0 0
      %1855 = vmatpush1.bf16.msra.mxu0 0
      %1856 = vmatprep.subr.bf16.mxu0 0
      %1857 = vmatpush1.bf16.msra.mxu0 0
      %1858 = vmatprep.subr.bf16.mxu0 0
      %1859 = vmatpush1.bf16.msra.mxu0 0
      %1860 = vmatprep.subr.bf16.mxu0 0
      %1861 = vmatpush1.bf16.msra.mxu0 0
      %1862 = vmatprep.subr.bf16.mxu0 0
      %1863 = vmatpush1.bf16.msra.mxu0 0
      %1864 = vmatprep.subr.bf16.mxu0 0
      %1865 = vmatpush1.bf16.msra.mxu0 0
      %1866 = vmatprep.subr.bf16.mxu0 0
      %1867 = vmatpush1.bf16.msra.mxu0 0
      %1868 = vmatprep.subr.bf16.mxu0 0
      %1869 = vmatpush1.bf16.msra.mxu0 0
      %1870 = vmatprep.subr.bf16.mxu0 0
      %1871 = vmatpush1.bf16.msra.mxu0 0
      %1872 = vmatprep.subr.bf16.mxu0 0
      %1873 = vmatpush1.bf16.msra.mxu0 0
      %1874 = vmatprep.subr.bf16.mxu0 0
      %1875 = vmatpush1.bf16.msra.mxu0 0
      %1876 = vmatprep.subr.bf16.mxu0 0
      %1877 = vmatpush1.bf16.msra.mxu0 0
      %1878 = vmatprep.subr.bf16.mxu0 0
      %1879 = vmatpush1.bf16.msra.mxu0 0
      %1880 = vmatprep.subr.bf16.mxu0 0
      %1881 = vmatpush1.bf16.msra.mxu0 0
      %1882 = vmatprep.mubr.bf16.mxu0 0
      %1883 = vmatmul.mubr.bf16.gmra.mrb[0].mxu0 %v1839
      %v1884 = vpop.f32.mrb[0].mxu0
      %v1885 = vadd.f32 0.0, %v1884
      %v1886 = vpop.f32.mrb[0].mxu0
      %v1887 = vpop.f32.mrb[0].mxu0
      %v1888 = vadd.f32 0.0, %v1887
      %v1889 = vpop.f32.mrb[0].mxu0
      %1890 = vmatprep.mubr.bf16.mxu0 0
      %1891 = vmatmul.mubr.bf16.gmra.mrb[0].mxu0 %v1842
      %v1892 = vpop.f32.mrb[0].mxu0
      %v1893 = vadd.f32 0.0, %v1892
      %v1894 = vpop.f32.mrb[0].mxu0
      %v1895 = vpop.f32.mrb[0].mxu0
      %v1896 = vadd.f32 0.0, %v1895
      %v1897 = vpop.f32.mrb[0].mxu0
      %1898 = vmatprep.mubr.bf16.mxu0 0
      %1899 = vmatmul.mubr.bf16.gmra.mrb[0].mxu0 %v1845
      %v1900 = vpop.f32.mrb[0].mxu0
      %v1901 = vadd.f32 0.0, %v1900
      %v1902 = vpop.f32.mrb[0].mxu0
      %v1903 = vpop.f32.mrb[0].mxu0
      %v1904 = vadd.f32 0.0, %v1903
      %v1905 = vpop.f32.mrb[0].mxu0
      %1906 = vmatprep.mubr.bf16.mxu0 0
      %1907 = vmatmul.mubr.bf16.gmra.mrb[0].mxu0 %v1848
      %v1908 = vpop.f32.mrb[0].mxu0
      %v1909 = vadd.f32 0.0, %v1908
      %v1910 = vpop.f32.mrb[0].mxu0
      %v1911 = vpop.f32.mrb[0].mxu0
      %v1912 = vadd.f32 0.0, %v1911
      %v1913 = vpop.f32.mrb[0].mxu0
      %1914 = vdwg.mxu0
      %v1915 = vadd.f32 %v1779, %v1885
      %v1916 = vadd.f32 %v1782, %v1888
      %v1917 = vadd.f32 %v1787, %v1893
      %v1918 = vadd.f32 %v1790, %v1896
      %v1919 = vadd.f32 %v1795, %v1901
      %v1920 = vadd.f32 %v1798, %v1904
      %v1921 = vadd.f32 %v1803, %v1909
      %v1922 = vadd.f32 %v1806, %v1912
      %v1923 = vld [vmem:[#allocation2 + $0x8] sm:$0xff]
      %v1924 = vld [vmem:[#allocation2 + $0x10] sm:$0xff]
      %v1925 = vld [vmem:[#allocation2 + $0x18] sm:$0xff]
      %v1926 = vld [vmem:[#allocation2 + $0x20] sm:$0xff]
      %v1927 = vld [vmem:[#allocation2 + $0x28] sm:$0xff]
      %v1928 = vld [vmem:[#allocation2 + $0x30] sm:$0xff]
      %v1929 = vld [vmem:[#allocation2 + $0x38] sm:$0xff]
      %v1930 = vld [vmem:[#allocation2 + $0x40] sm:$0xff]
      %v1931 = vpack.c.bf16 %v1924, %v1923
      %v1932 = vpack.c.bf16 %v1926, %v1925
      %v1933 = vpack.c.bf16 %v1928, %v1927
      %v1934 = vpack.c.bf16 %v1930, %v1929
      %s1935 = scalar_lea.vmem %s4, 48
      %v1936 = vld [vmem:[%s1935] sm:$0xf]
      %v1937 = vld [vmem:[%s1935 + $0x4] sm:$0xf]
      %v1938 = vld [vmem:[%s1935 + $0x8] sm:$0xf]
      %v1939 = vld [vmem:[%s1935 + $0xc] sm:$0xf]
      %v1944 = vunpack.c.l.b16 %v1936
      %v1945 = vunpack.c.l.b16 %v1937
      %v1946 = vunpack.c.l.b16 %v1938
      %v1947 = vunpack.c.l.b16 %v1939
      %v1948 = vpack.c.b16 %v1945, %v1944
      %v1949 = vpack.c.b16 %v1947, %v1946
      %v1953 = vsel %vm1585, %v1931, 0
      %v1956 = vsel %vm1585, %v1932, 0
      %v1959 = vsel %vm1585, %v1933, 0
      %v1962 = vsel %vm1585, %v1934, 0
      %1964 = vmatprep.subr.bf16.mxu0 0
      %1965 = vmatpush1.bf16.msra.mxu0 %v1948
      %1966 = vmatprep.subr.bf16.mxu0 0
      %1967 = vmatpush1.bf16.msra.mxu0 %v1949
      %1968 = vmatprep.subr.bf16.mxu0 0
      %1969 = vmatpush1.bf16.msra.mxu0 0
      %1970 = vmatprep.subr.bf16.mxu0 0
      %1971 = vmatpush1.bf16.msra.mxu0 0
      %1972 = vmatprep.subr.bf16.mxu0 0
      %1973 = vmatpush1.bf16.msra.mxu0 0
      %1974 = vmatprep.subr.bf16.mxu0 0
      %1975 = vmatpush1.bf16.msra.mxu0 0
      %1976 = vmatprep.subr.bf16.mxu0 0
      %1977 = vmatpush1.bf16.msra.mxu0 0
      %1978 = vmatprep.subr.bf16.mxu0 0
      %1979 = vmatpush1.bf16.msra.mxu0 0
      %1980 = vmatprep.subr.bf16.mxu0 0
      %1981 = vmatpush1.bf16.msra.mxu0 0
      %1982 = vmatprep.subr.bf16.mxu0 0
      %1983 = vmatpush1.bf16.msra.mxu0 0
      %1984 = vmatprep.subr.bf16.mxu0 0
      %1985 = vmatpush1.bf16.msra.mxu0 0
      %1986 = vmatprep.subr.bf16.mxu0 0
      %1987 = vmatpush1.bf16.msra.mxu0 0
      %1988 = vmatprep.subr.bf16.mxu0 0
      %1989 = vmatpush1.bf16.msra.mxu0 0
      %1990 = vmatprep.subr.bf16.mxu0 0
      %1991 = vmatpush1.bf16.msra.mxu0 0
      %1992 = vmatprep.subr.bf16.mxu0 0
      %1993 = vmatpush1.bf16.msra.mxu0 0
      %1994 = vmatprep.subr.bf16.mxu0 0
      %1995 = vmatpush1.bf16.msra.mxu0 0
      %1996 = vmatprep.mubr.bf16.mxu0 0
      %1997 = vmatmul.mubr.bf16.gmra.mrb[0].mxu0 %v1953
      %v1998 = vpop.f32.mrb[0].mxu0
      %v1999 = vadd.f32 0.0, %v1998
      %v2000 = vpop.f32.mrb[0].mxu0
      %v2001 = vpop.f32.mrb[0].mxu0
      %v2002 = vadd.f32 0.0, %v2001
      %v2003 = vpop.f32.mrb[0].mxu0
      %2004 = vmatprep.mubr.bf16.mxu0 0
      %2005 = vmatmul.mubr.bf16.gmra.mrb[0].mxu0 %v1956
      %v2006 = vpop.f32.mrb[0].mxu0
      %v2007 = vadd.f32 0.0, %v2006
      %v2008 = vpop.f32.mrb[0].mxu0
      %v2009 = vpop.f32.mrb[0].mxu0
      %v2010 = vadd.f32 0.0, %v2009
      %v2011 = vpop.f32.mrb[0].mxu0
      %2012 = vmatprep.mubr.bf16.mxu0 0
      %2013 = vmatmul.mubr.bf16.gmra.mrb[0].mxu0 %v1959
      %v2014 = vpop.f32.mrb[0].mxu0
      %v2015 = vadd.f32 0.0, %v2014
      %v2016 = vpop.f32.mrb[0].mxu0
      %v2017 = vpop.f32.mrb[0].mxu0
      %v2018 = vadd.f32 0.0, %v2017
      %v2019 = vpop.f32.mrb[0].mxu0
      %2020 = vmatprep.mubr.bf16.mxu0 0
      %2021 = vmatmul.mubr.bf16.gmra.mrb[0].mxu0 %v1962
      %v2022 = vpop.f32.mrb[0].mxu0
      %v2023 = vadd.f32 0.0, %v2022
      %v2024 = vpop.f32.mrb[0].mxu0
      %v2025 = vpop.f32.mrb[0].mxu0
      %v2026 = vadd.f32 0.0, %v2025
      %v2027 = vpop.f32.mrb[0].mxu0
      %2028 = vdwg.mxu0
      %v2029 = vadd.f32 %v1915, %v1999
      %v2030 = vadd.f32 %v1916, %v2002
      %v2031 = vadd.f32 %v1917, %v2007
      %v2032 = vadd.f32 %v1918, %v2010
      %v2033 = vadd.f32 %v1919, %v2015
      %v2034 = vadd.f32 %v1920, %v2018
      %v2035 = vadd.f32 %v1921, %v2023
      %v2036 = vadd.f32 %v1922, %v2026
      %v2037 = vld [vmem:[#allocation2 + $0x9] sm:$0xff]
      %v2038 = vld [vmem:[#allocation2 + $0x11] sm:$0xff]
      %v2039 = vld [vmem:[#allocation2 + $0x19] sm:$0xff]
      %v2040 = vld [vmem:[#allocation2 + $0x21] sm:$0xff]
      %v2041 = vld [vmem:[#allocation2 + $0x29] sm:$0xff]
      %v2042 = vld [vmem:[#allocation2 + $0x31] sm:$0xff]
      %v2043 = vld [vmem:[#allocation2 + $0x39] sm:$0xff]
      %v2044 = vld [vmem:[#allocation2 + $0x41] sm:$0xff]
      %v2045 = vpack.c.bf16 %v2038, %v2037
      %v2046 = vpack.c.bf16 %v2040, %v2039
      %v2047 = vpack.c.bf16 %v2042, %v2041
      %v2048 = vpack.c.bf16 %v2044, %v2043
      %s2049 = scalar_lea.vmem %s4, 64
      %v2050 = vld [vmem:[%s2049] sm:$0xf]
      %v2051 = vld [vmem:[%s2049 + $0x4] sm:$0xf]
      %v2052 = vld [vmem:[%s2049 + $0x8] sm:$0xf]
      %v2053 = vld [vmem:[%s2049 + $0xc] sm:$0xf]
      %v2058 = vunpack.c.l.b16 %v2050
      %v2059 = vunpack.c.l.b16 %v2051
      %v2060 = vunpack.c.l.b16 %v2052
      %v2061 = vunpack.c.l.b16 %v2053
      %v2062 = vpack.c.b16 %v2059, %v2058
      %v2063 = vpack.c.b16 %v2061, %v2060
      %v2067 = vsel %vm1585, %v2045, 0
      %v2070 = vsel %vm1585, %v2046, 0
      %v2073 = vsel %vm1585, %v2047, 0
      %v2076 = vsel %vm1585, %v2048, 0
      %2078 = vmatprep.subr.bf16.mxu0 0
      %2079 = vmatpush1.bf16.msra.mxu0 %v2062
      %2080 = vmatprep.subr.bf16.mxu0 0
      %2081 = vmatpush1.bf16.msra.mxu0 %v2063
      %2082 = vmatprep.subr.bf16.mxu0 0
      %2083 = vmatpush1.bf16.msra.mxu0 0
      %2084 = vmatprep.subr.bf16.mxu0 0
      %2085 = vmatpush1.bf16.msra.mxu0 0
      %2086 = vmatprep.subr.bf16.mxu0 0
      %2087 = vmatpush1.bf16.msra.mxu0 0
      %2088 = vmatprep.subr.bf16.mxu0 0
      %2089 = vmatpush1.bf16.msra.mxu0 0
      %2090 = vmatprep.subr.bf16.mxu0 0
      %2091 = vmatpush1.bf16.msra.mxu0 0
      %2092 = vmatprep.subr.bf16.mxu0 0
      %2093 = vmatpush1.bf16.msra.mxu0 0
      %2094 = vmatprep.subr.bf16.mxu0 0
      %2095 = vmatpush1.bf16.msra.mxu0 0
      %2096 = vmatprep.subr.bf16.mxu0 0
      %2097 = vmatpush1.bf16.msra.mxu0 0
      %2098 = vmatprep.subr.bf16.mxu0 0
      %2099 = vmatpush1.bf16.msra.mxu0 0
      %2100 = vmatprep.subr.bf16.mxu0 0
      %2101 = vmatpush1.bf16.msra.mxu0 0
      %2102 = vmatprep.subr.bf16.mxu0 0
      %2103 = vmatpush1.bf16.msra.mxu0 0
      %2104 = vmatprep.subr.bf16.mxu0 0
      %2105 = vmatpush1.bf16.msra.mxu0 0
      %2106 = vmatprep.subr.bf16.mxu0 0
      %2107 = vmatpush1.bf16.msra.mxu0 0
      %2108 = vmatprep.subr.bf16.mxu0 0
      %2109 = vmatpush1.bf16.msra.mxu0 0
      %2110 = vmatprep.mubr.bf16.mxu0 0
      %2111 = vmatmul.mubr.bf16.gmra.mrb[0].mxu0 %v2067
      %v2112 = vpop.f32.mrb[0].mxu0
      %v2113 = vadd.f32 0.0, %v2112
      %v2114 = vpop.f32.mrb[0].mxu0
      %v2115 = vpop.f32.mrb[0].mxu0
      %v2116 = vadd.f32 0.0, %v2115
      %v2117 = vpop.f32.mrb[0].mxu0
      %2118 = vmatprep.mubr.bf16.mxu0 0
      %2119 = vmatmul.mubr.bf16.gmra.mrb[0].mxu0 %v2070
      %v2120 = vpop.f32.mrb[0].mxu0
      %v2121 = vadd.f32 0.0, %v2120
      %v2122 = vpop.f32.mrb[0].mxu0
      %v2123 = vpop.f32.mrb[0].mxu0
      %v2124 = vadd.f32 0.0, %v2123
      %v2125 = vpop.f32.mrb[0].mxu0
      %2126 = vmatprep.mubr.bf16.mxu0 0
      %2127 = vmatmul.mubr.bf16.gmra.mrb[0].mxu0 %v2073
      %v2128 = vpop.f32.mrb[0].mxu0
      %v2129 = vadd.f32 0.0, %v2128
      %v2130 = vpop.f32.mrb[0].mxu0
      %v2131 = vpop.f32.mrb[0].mxu0
      %v2132 = vadd.f32 0.0, %v2131
      %v2133 = vpop.f32.mrb[0].mxu0
      %2134 = vmatprep.mubr.bf16.mxu0 0
      %2135 = vmatmul.mubr.bf16.gmra.mrb[0].mxu0 %v2076
      %v2136 = vpop.f32.mrb[0].mxu0
      %v2137 = vadd.f32 0.0, %v2136
      %v2138 = vpop.f32.mrb[0].mxu0
      %v2139 = vpop.f32.mrb[0].mxu0
      %v2140 = vadd.f32 0.0, %v2139
      %v2141 = vpop.f32.mrb[0].mxu0
      %2142 = vdwg.mxu0
      %v2143 = vadd.f32 %v2029, %v2113
      %v2144 = vadd.f32 %v2030, %v2116
      %v2145 = vadd.f32 %v2031, %v2121
      %v2146 = vadd.f32 %v2032, %v2124
      %v2147 = vadd.f32 %v2033, %v2129
      %v2148 = vadd.f32 %v2034, %v2132
      %v2149 = vadd.f32 %v2035, %v2137
      %v2150 = vadd.f32 %v2036, %v2140
      %v2151 = vld [vmem:[#allocation2 + $0xa] sm:$0xff]
      %v2152 = vld [vmem:[#allocation2 + $0x12] sm:$0xff]
      %v2153 = vld [vmem:[#allocation2 + $0x1a] sm:$0xff]
      %v2154 = vld [vmem:[#allocation2 + $0x22] sm:$0xff]
      %v2155 = vld [vmem:[#allocation2 + $0x2a] sm:$0xff]
      %v2156 = vld [vmem:[#allocation2 + $0x32] sm:$0xff]
      %v2157 = vld [vmem:[#allocation2 + $0x3a] sm:$0xff]
      %v2158 = vld [vmem:[#allocation2 + $0x42] sm:$0xff]
      %v2159 = vpack.c.bf16 %v2152, %v2151
      %v2160 = vpack.c.bf16 %v2154, %v2153
      %v2161 = vpack.c.bf16 %v2156, %v2155
      %v2162 = vpack.c.bf16 %v2158, %v2157
      %s2163 = scalar_lea.vmem %s4, 80
      %v2164 = vld [vmem:[%s2163] sm:$0xf]
      %v2165 = vld [vmem:[%s2163 + $0x4] sm:$0xf]
      %v2166 = vld [vmem:[%s2163 + $0x8] sm:$0xf]
      %v2167 = vld [vmem:[%s2163 + $0xc] sm:$0xf]
      %v2172 = vunpack.c.l.b16 %v2164
      %v2173 = vunpack.c.l.b16 %v2165
      %v2174 = vunpack.c.l.b16 %v2166
      %v2175 = vunpack.c.l.b16 %v2167
      %v2176 = vpack.c.b16 %v2173, %v2172
      %v2177 = vpack.c.b16 %v2175, %v2174
      %v2181 = vsel %vm1585, %v2159, 0
      %v2184 = vsel %vm1585, %v2160, 0
      %v2187 = vsel %vm1585, %v2161, 0
      %v2190 = vsel %vm1585, %v2162, 0
      %2192 = vmatprep.subr.bf16.mxu0 0
      %2193 = vmatpush1.bf16.msra.mxu0 %v2176
      %2194 = vmatprep.subr.bf16.mxu0 0
      %2195 = vmatpush1.bf16.msra.mxu0 %v2177
      %2196 = vmatprep.subr.bf16.mxu0 0
      %2197 = vmatpush1.bf16.msra.mxu0 0
      %2198 = vmatprep.subr.bf16.mxu0 0
      %2199 = vmatpush1.bf16.msra.mxu0 0
      %2200 = vmatprep.subr.bf16.mxu0 0
      %2201 = vmatpush1.bf16.msra.mxu0 0
      %2202 = vmatprep.subr.bf16.mxu0 0
      %2203 = vmatpush1.bf16.msra.mxu0 0
      %2204 = vmatprep.subr.bf16.mxu0 0
      %2205 = vmatpush1.bf16.msra.mxu0 0
      %2206 = vmatprep.subr.bf16.mxu0 0
      %2207 = vmatpush1.bf16.msra.mxu0 0
      %2208 = vmatprep.subr.bf16.mxu0 0
      %2209 = vmatpush1.bf16.msra.mxu0 0
      %2210 = vmatprep.subr.bf16.mxu0 0
      %2211 = vmatpush1.bf16.msra.mxu0 0
      %2212 = vmatprep.subr.bf16.mxu0 0
      %2213 = vmatpush1.bf16.msra.mxu0 0
      %2214 = vmatprep.subr.bf16.mxu0 0
      %2215 = vmatpush1.bf16.msra.mxu0 0
      %2216 = vmatprep.subr.bf16.mxu0 0
      %2217 = vmatpush1.bf16.msra.mxu0 0
      %2218 = vmatprep.subr.bf16.mxu0 0
      %2219 = vmatpush1.bf16.msra.mxu0 0
      %2220 = vmatprep.subr.bf16.mxu0 0
      %2221 = vmatpush1.bf16.msra.mxu0 0
      %2222 = vmatprep.subr.bf16.mxu0 0
      %2223 = vmatpush1.bf16.msra.mxu0 0
      %2224 = vmatprep.mubr.bf16.mxu0 0
      %2225 = vmatmul.mubr.bf16.gmra.mrb[0].mxu0 %v2181
      %v2226 = vpop.f32.mrb[0].mxu0
      %v2227 = vadd.f32 0.0, %v2226
      %v2228 = vpop.f32.mrb[0].mxu0
      %v2229 = vpop.f32.mrb[0].mxu0
      %v2230 = vadd.f32 0.0, %v2229
      %v2231 = vpop.f32.mrb[0].mxu0
      %2232 = vmatprep.mubr.bf16.mxu0 0
      %2233 = vmatmul.mubr.bf16.gmra.mrb[0].mxu0 %v2184
      %v2234 = vpop.f32.mrb[0].mxu0
      %v2235 = vadd.f32 0.0, %v2234
      %v2236 = vpop.f32.mrb[0].mxu0
      %v2237 = vpop.f32.mrb[0].mxu0
      %v2238 = vadd.f32 0.0, %v2237
      %v2239 = vpop.f32.mrb[0].mxu0
      %2240 = vmatprep.mubr.bf16.mxu0 0
      %2241 = vmatmul.mubr.bf16.gmra.mrb[0].mxu0 %v2187
      %v2242 = vpop.f32.mrb[0].mxu0
      %v2243 = vadd.f32 0.0, %v2242
      %v2244 = vpop.f32.mrb[0].mxu0
      %v2245 = vpop.f32.mrb[0].mxu0
      %v2246 = vadd.f32 0.0, %v2245
      %v2247 = vpop.f32.mrb[0].mxu0
      %2248 = vmatprep.mubr.bf16.mxu0 0
      %2249 = vmatmul.mubr.bf16.gmra.mrb[0].mxu0 %v2190
      %v2250 = vpop.f32.mrb[0].mxu0
      %v2251 = vadd.f32 0.0, %v2250
      %v2252 = vpop.f32.mrb[0].mxu0
      %v2253 = vpop.f32.mrb[0].mxu0
      %v2254 = vadd.f32 0.0, %v2253
      %v2255 = vpop.f32.mrb[0].mxu0
      %2256 = vdwg.mxu0
      %v2257 = vadd.f32 %v2143, %v2227
      %v2258 = vadd.f32 %v2144, %v2230
      %v2259 = vadd.f32 %v2145, %v2235
      %v2260 = vadd.f32 %v2146, %v2238
      %v2261 = vadd.f32 %v2147, %v2243
      %v2262 = vadd.f32 %v2148, %v2246
      %v2263 = vadd.f32 %v2149, %v2251
      %v2264 = vadd.f32 %v2150, %v2254
      %v2265 = vld [vmem:[#allocation2 + $0x10] sm:$0xff]
      %v2266 = vld [vmem:[#allocation2 + $0x18] sm:$0xff]
      %v2267 = vld [vmem:[#allocation2 + $0x20] sm:$0xff]
      %v2268 = vld [vmem:[#allocation2 + $0x28] sm:$0xff]
      %v2269 = vld [vmem:[#allocation2 + $0x30] sm:$0xff]
      %v2270 = vld [vmem:[#allocation2 + $0x38] sm:$0xff]
      %v2271 = vld [vmem:[#allocation2 + $0x40] sm:$0xff]
      %v2272 = vld [vmem:[#allocation2 + $0x48] sm:$0xff]
      %v2273 = vpack.c.bf16 %v2266, %v2265
      %v2274 = vpack.c.bf16 %v2268, %v2267
      %v2275 = vpack.c.bf16 %v2270, %v2269
      %v2276 = vpack.c.bf16 %v2272, %v2271
      %s2277 = scalar_lea.vmem %s4, 96
      %v2278 = vld [vmem:[%s2277] sm:$0xf]
      %v2279 = vld [vmem:[%s2277 + $0x4] sm:$0xf]
      %v2280 = vld [vmem:[%s2277 + $0x8] sm:$0xf]
      %v2281 = vld [vmem:[%s2277 + $0xc] sm:$0xf]
      %v2286 = vunpack.c.l.b16 %v2278
      %v2287 = vunpack.c.l.b16 %v2279
      %v2288 = vunpack.c.l.b16 %v2280
      %v2289 = vunpack.c.l.b16 %v2281
      %v2290 = vpack.c.b16 %v2287, %v2286
      %v2291 = vpack.c.b16 %v2289, %v2288
      %v2295 = vsel %vm1585, %v2273, 0
      %v2298 = vsel %vm1585, %v2274, 0
      %v2301 = vsel %vm1585, %v2275, 0
      %v2304 = vsel %vm1585, %v2276, 0
      %2306 = vmatprep.subr.bf16.mxu0 0
      %2307 = vmatpush1.bf16.msra.mxu0 %v2290
      %2308 = vmatprep.subr.bf16.mxu0 0
      %2309 = vmatpush1.bf16.msra.mxu0 %v2291
      %2310 = vmatprep.subr.bf16.mxu0 0
      %2311 = vmatpush1.bf16.msra.mxu0 0
      %2312 = vmatprep.subr.bf16.mxu0 0
      %2313 = vmatpush1.bf16.msra.mxu0 0
      %2314 = vmatprep.subr.bf16.mxu0 0
      %2315 = vmatpush1.bf16.msra.mxu0 0
      %2316 = vmatprep.subr.bf16.mxu0 0
      %2317 = vmatpush1.bf16.msra.mxu0 0
      %2318 = vmatprep.subr.bf16.mxu0 0
      %2319 = vmatpush1.bf16.msra.mxu0 0
      %2320 = vmatprep.subr.bf16.mxu0 0
      %2321 = vmatpush1.bf16.msra.mxu0 0
      %2322 = vmatprep.subr.bf16.mxu0 0
      %2323 = vmatpush1.bf16.msra.mxu0 0
      %2324 = vmatprep.subr.bf16.mxu0 0
      %2325 = vmatpush1.bf16.msra.mxu0 0
      %2326 = vmatprep.subr.bf16.mxu0 0
      %2327 = vmatpush1.bf16.msra.mxu0 0
      %2328 = vmatprep.subr.bf16.mxu0 0
      %2329 = vmatpush1.bf16.msra.mxu0 0
      %2330 = vmatprep.subr.bf16.mxu0 0
      %2331 = vmatpush1.bf16.msra.mxu0 0
      %2332 = vmatprep.subr.bf16.mxu0 0
      %2333 = vmatpush1.bf16.msra.mxu0 0
      %2334 = vmatprep.subr.bf16.mxu0 0
      %2335 = vmatpush1.bf16.msra.mxu0 0
      %2336 = vmatprep.subr.bf16.mxu0 0
      %2337 = vmatpush1.bf16.msra.mxu0 0
      %2338 = vmatprep.mubr.bf16.mxu0 0
      %2339 = vmatmul.mubr.bf16.gmra.mrb[0].mxu0 %v2295
      %v2340 = vpop.f32.mrb[0].mxu0
      %v2341 = vadd.f32 0.0, %v2340
      %v2342 = vpop.f32.mrb[0].mxu0
      %v2343 = vpop.f32.mrb[0].mxu0
      %v2344 = vadd.f32 0.0, %v2343
      %v2345 = vpop.f32.mrb[0].mxu0
      %2346 = vmatprep.mubr.bf16.mxu0 0
      %2347 = vmatmul.mubr.bf16.gmra.mrb[0].mxu0 %v2298
      %v2348 = vpop.f32.mrb[0].mxu0
      %v2349 = vadd.f32 0.0, %v2348
      %v2350 = vpop.f32.mrb[0].mxu0
      %v2351 = vpop.f32.mrb[0].mxu0
      %v2352 = vadd.f32 0.0, %v2351
      %v2353 = vpop.f32.mrb[0].mxu0
      %2354 = vmatprep.mubr.bf16.mxu0 0
      %2355 = vmatmul.mubr.bf16.gmra.mrb[0].mxu0 %v2301
      %v2356 = vpop.f32.mrb[0].mxu0
      %v2357 = vadd.f32 0.0, %v2356
      %v2358 = vpop.f32.mrb[0].mxu0
      %v2359 = vpop.f32.mrb[0].mxu0
      %v2360 = vadd.f32 0.0, %v2359
      %v2361 = vpop.f32.mrb[0].mxu0
      %2362 = vmatprep.mubr.bf16.mxu0 0
      %2363 = vmatmul.mubr.bf16.gmra.mrb[0].mxu0 %v2304
      %v2364 = vpop.f32.mrb[0].mxu0
      %v2365 = vadd.f32 0.0, %v2364
      %v2366 = vpop.f32.mrb[0].mxu0
      %v2367 = vpop.f32.mrb[0].mxu0
      %v2368 = vadd.f32 0.0, %v2367
      %v2369 = vpop.f32.mrb[0].mxu0
      %2370 = vdwg.mxu0
      %v2371 = vadd.f32 %v2257, %v2341
      %v2372 = vadd.f32 %v2258, %v2344
      %v2373 = vadd.f32 %v2259, %v2349
      %v2374 = vadd.f32 %v2260, %v2352
      %v2375 = vadd.f32 %v2261, %v2357
      %v2376 = vadd.f32 %v2262, %v2360
      %v2377 = vadd.f32 %v2263, %v2365
      %v2378 = vadd.f32 %v2264, %v2368
      %v2379 = vld [vmem:[#allocation2 + $0x11] sm:$0xff]
      %v2380 = vld [vmem:[#allocation2 + $0x19] sm:$0xff]
      %v2381 = vld [vmem:[#allocation2 + $0x21] sm:$0xff]
      %v2382 = vld [vmem:[#allocation2 + $0x29] sm:$0xff]
      %v2383 = vld [vmem:[#allocation2 + $0x31] sm:$0xff]
      %v2384 = vld [vmem:[#allocation2 + $0x39] sm:$0xff]
      %v2385 = vld [vmem:[#allocation2 + $0x41] sm:$0xff]
      %v2386 = vld [vmem:[#allocation2 + $0x49] sm:$0xff]
      %v2387 = vpack.c.bf16 %v2380, %v2379
      %v2388 = vpack.c.bf16 %v2382, %v2381
      %v2389 = vpack.c.bf16 %v2384, %v2383
      %v2390 = vpack.c.bf16 %v2386, %v2385
      %s2391 = scalar_lea.vmem %s4, 112
      %v2392 = vld [vmem:[%s2391] sm:$0xf]
      %v2393 = vld [vmem:[%s2391 + $0x4] sm:$0xf]
      %v2394 = vld [vmem:[%s2391 + $0x8] sm:$0xf]
      %v2395 = vld [vmem:[%s2391 + $0xc] sm:$0xf]
      %v2400 = vunpack.c.l.b16 %v2392
      %v2401 = vunpack.c.l.b16 %v2393
      %v2402 = vunpack.c.l.b16 %v2394
      %v2403 = vunpack.c.l.b16 %v2395
      %v2404 = vpack.c.b16 %v2401, %v2400
      %v2405 = vpack.c.b16 %v2403, %v2402
      %v2409 = vsel %vm1585, %v2387, 0
      %v2412 = vsel %vm1585, %v2388, 0
      %v2415 = vsel %vm1585, %v2389, 0
      %v2418 = vsel %vm1585, %v2390, 0
      %2420 = vmatprep.subr.bf16.mxu0 0
      %2421 = vmatpush1.bf16.msra.mxu0 %v2404
      %2422 = vmatprep.subr.bf16.mxu0 0
      %2423 = vmatpush1.bf16.msra.mxu0 %v2405
      %2424 = vmatprep.subr.bf16.mxu0 0
      %2425 = vmatpush1.bf16.msra.mxu0 0
      %2426 = vmatprep.subr.bf16.mxu0 0
      %2427 = vmatpush1.bf16.msra.mxu0 0
      %2428 = vmatprep.subr.bf16.mxu0 0
      %2429 = vmatpush1.bf16.msra.mxu0 0
      %2430 = vmatprep.subr.bf16.mxu0 0
      %2431 = vmatpush1.bf16.msra.mxu0 0
      %2432 = vmatprep.subr.bf16.mxu0 0
      %2433 = vmatpush1.bf16.msra.mxu0 0
      %2434 = vmatprep.subr.bf16.mxu0 0
      %2435 = vmatpush1.bf16.msra.mxu0 0
      %2436 = vmatprep.subr.bf16.mxu0 0
      %2437 = vmatpush1.bf16.msra.mxu0 0
      %2438 = vmatprep.subr.bf16.mxu0 0
      %2439 = vmatpush1.bf16.msra.mxu0 0
      %2440 = vmatprep.subr.bf16.mxu0 0
      %2441 = vmatpush1.bf16.msra.mxu0 0
      %2442 = vmatprep.subr.bf16.mxu0 0
      %2443 = vmatpush1.bf16.msra.mxu0 0
      %2444 = vmatprep.subr.bf16.mxu0 0
      %2445 = vmatpush1.bf16.msra.mxu0 0
      %2446 = vmatprep.subr.bf16.mxu0 0
      %2447 = vmatpush1.bf16.msra.mxu0 0
      %2448 = vmatprep.subr.bf16.mxu0 0
      %2449 = vmatpush1.bf16.msra.mxu0 0
      %2450 = vmatprep.subr.bf16.mxu0 0
      %2451 = vmatpush1.bf16.msra.mxu0 0
      %2452 = vmatprep.mubr.bf16.mxu0 0
      %2453 = vmatmul.mubr.bf16.gmra.mrb[0].mxu0 %v2409
      %v2454 = vpop.f32.mrb[0].mxu0
      %v2455 = vadd.f32 0.0, %v2454
      %v2456 = vpop.f32.mrb[0].mxu0
      %v2457 = vpop.f32.mrb[0].mxu0
      %v2458 = vadd.f32 0.0, %v2457
      %v2459 = vpop.f32.mrb[0].mxu0
      %2460 = vmatprep.mubr.bf16.mxu0 0
      %2461 = vmatmul.mubr.bf16.gmra.mrb[0].mxu0 %v2412
      %v2462 = vpop.f32.mrb[0].mxu0
      %v2463 = vadd.f32 0.0, %v2462
      %v2464 = vpop.f32.mrb[0].mxu0
      %v2465 = vpop.f32.mrb[0].mxu0
      %v2466 = vadd.f32 0.0, %v2465
      %v2467 = vpop.f32.mrb[0].mxu0
      %2468 = vmatprep.mubr.bf16.mxu0 0
      %2469 = vmatmul.mubr.bf16.gmra.mrb[0].mxu0 %v2415
      %v2470 = vpop.f32.mrb[0].mxu0
      %v2471 = vadd.f32 0.0, %v2470
      %v2472 = vpop.f32.mrb[0].mxu0
      %v2473 = vpop.f32.mrb[0].mxu0
      %v2474 = vadd.f32 0.0, %v2473
      %v2475 = vpop.f32.mrb[0].mxu0
      %2476 = vmatprep.mubr.bf16.mxu0 0
      %2477 = vmatmul.mubr.bf16.gmra.mrb[0].mxu0 %v2418
      %v2478 = vpop.f32.mrb[0].mxu0
      %v2479 = vadd.f32 0.0, %v2478
      %v2480 = vpop.f32.mrb[0].mxu0
      %v2481 = vpop.f32.mrb[0].mxu0
      %v2482 = vadd.f32 0.0, %v2481
      %v2483 = vpop.f32.mrb[0].mxu0
      %2484 = vdwg.mxu0
      %v2485 = vadd.f32 %v2371, %v2455
      %v2486 = vadd.f32 %v2372, %v2458
      %v2487 = vadd.f32 %v2373, %v2463
      %v2488 = vadd.f32 %v2374, %v2466
      %v2489 = vadd.f32 %v2375, %v2471
      %v2490 = vadd.f32 %v2376, %v2474
      %v2491 = vadd.f32 %v2377, %v2479
      %v2492 = vadd.f32 %v2378, %v2482
      %v2493 = vld [vmem:[#allocation2 + $0x12] sm:$0xff]
      %v2494 = vld [vmem:[#allocation2 + $0x1a] sm:$0xff]
      %v2495 = vld [vmem:[#allocation2 + $0x22] sm:$0xff]
      %v2496 = vld [vmem:[#allocation2 + $0x2a] sm:$0xff]
      %v2497 = vld [vmem:[#allocation2 + $0x32] sm:$0xff]
      %v2498 = vld [vmem:[#allocation2 + $0x3a] sm:$0xff]
      %v2499 = vld [vmem:[#allocation2 + $0x42] sm:$0xff]
      %v2500 = vld [vmem:[#allocation2 + $0x4a] sm:$0xff]
      %v2501 = vpack.c.bf16 %v2494, %v2493
      %v2502 = vpack.c.bf16 %v2496, %v2495
      %v2503 = vpack.c.bf16 %v2498, %v2497
      %v2504 = vpack.c.bf16 %v2500, %v2499
      %s2505 = scalar_lea.vmem %s4, 128
      %v2506 = vld [vmem:[%s2505] sm:$0xf]
      %v2507 = vld [vmem:[%s2505 + $0x4] sm:$0xf]
      %v2508 = vld [vmem:[%s2505 + $0x8] sm:$0xf]
      %v2509 = vld [vmem:[%s2505 + $0xc] sm:$0xf]
      %v2514 = vunpack.c.l.b16 %v2506
      %v2515 = vunpack.c.l.b16 %v2507
      %v2516 = vunpack.c.l.b16 %v2508
      %v2517 = vunpack.c.l.b16 %v2509
      %v2518 = vpack.c.b16 %v2515, %v2514
      %v2519 = vpack.c.b16 %v2517, %v2516
      %v2523 = vsel %vm1585, %v2501, 0
      %v2526 = vsel %vm1585, %v2502, 0
      %v2529 = vsel %vm1585, %v2503, 0
      %v2532 = vsel %vm1585, %v2504, 0
      %2534 = vmatprep.subr.bf16.mxu0 0
      %2535 = vmatpush1.bf16.msra.mxu0 %v2518
      %2536 = vmatprep.subr.bf16.mxu0 0
      %2537 = vmatpush1.bf16.msra.mxu0 %v2519
      %2538 = vmatprep.subr.bf16.mxu0 0
      %2539 = vmatpush1.bf16.msra.mxu0 0
      %2540 = vmatprep.subr.bf16.mxu0 0
      %2541 = vmatpush1.bf16.msra.mxu0 0
      %2542 = vmatprep.subr.bf16.mxu0 0
      %2543 = vmatpush1.bf16.msra.mxu0 0
      %2544 = vmatprep.subr.bf16.mxu0 0
      %2545 = vmatpush1.bf16.msra.mxu0 0
      %2546 = vmatprep.subr.bf16.mxu0 0
      %2547 = vmatpush1.bf16.msra.mxu0 0
      %2548 = vmatprep.subr.bf16.mxu0 0
      %2549 = vmatpush1.bf16.msra.mxu0 0
      %2550 = vmatprep.subr.bf16.mxu0 0
      %2551 = vmatpush1.bf16.msra.mxu0 0
      %2552 = vmatprep.subr.bf16.mxu0 0
      %2553 = vmatpush1.bf16.msra.mxu0 0
      %2554 = vmatprep.subr.bf16.mxu0 0
      %2555 = vmatpush1.bf16.msra.mxu0 0
      %2556 = vmatprep.subr.bf16.mxu0 0
      %2557 = vmatpush1.bf16.msra.mxu0 0
      %2558 = vmatprep.subr.bf16.mxu0 0
      %2559 = vmatpush1.bf16.msra.mxu0 0
      %2560 = vmatprep.subr.bf16.mxu0 0
      %2561 = vmatpush1.bf16.msra.mxu0 0
      %2562 = vmatprep.subr.bf16.mxu0 0
      %2563 = vmatpush1.bf16.msra.mxu0 0
      %2564 = vmatprep.subr.bf16.mxu0 0
      %2565 = vmatpush1.bf16.msra.mxu0 0
      %2566 = vmatprep.mubr.bf16.mxu0 0
      %2567 = vmatmul.mubr.bf16.gmra.mrb[0].mxu0 %v2523
      %v2568 = vpop.f32.mrb[0].mxu0
      %v2569 = vadd.f32 0.0, %v2568
      %v2570 = vpop.f32.mrb[0].mxu0
      %v2571 = vpop.f32.mrb[0].mxu0
      %v2572 = vadd.f32 0.0, %v2571
      %v2573 = vpop.f32.mrb[0].mxu0
      %2574 = vmatprep.mubr.bf16.mxu0 0
      %2575 = vmatmul.mubr.bf16.gmra.mrb[0].mxu0 %v2526
      %v2576 = vpop.f32.mrb[0].mxu0
      %v2577 = vadd.f32 0.0, %v2576
      %v2578 = vpop.f32.mrb[0].mxu0
      %v2579 = vpop.f32.mrb[0].mxu0
      %v2580 = vadd.f32 0.0, %v2579
      %v2581 = vpop.f32.mrb[0].mxu0
      %2582 = vmatprep.mubr.bf16.mxu0 0
      %2583 = vmatmul.mubr.bf16.gmra.mrb[0].mxu0 %v2529
      %v2584 = vpop.f32.mrb[0].mxu0
      %v2585 = vadd.f32 0.0, %v2584
      %v2586 = vpop.f32.mrb[0].mxu0
      %v2587 = vpop.f32.mrb[0].mxu0
      %v2588 = vadd.f32 0.0, %v2587
      %v2589 = vpop.f32.mrb[0].mxu0
      %2590 = vmatprep.mubr.bf16.mxu0 0
      %2591 = vmatmul.mubr.bf16.gmra.mrb[0].mxu0 %v2532
      %v2592 = vpop.f32.mrb[0].mxu0
      %v2593 = vadd.f32 0.0, %v2592
      %v2594 = vpop.f32.mrb[0].mxu0
      %v2595 = vpop.f32.mrb[0].mxu0
      %v2596 = vadd.f32 0.0, %v2595
      %v2597 = vpop.f32.mrb[0].mxu0
      %2598 = vdwg.mxu0
      %v2599 = vadd.f32 %v2485, %v2569
      %v2600 = vadd.f32 %v2486, %v2572
      %v2601 = vadd.f32 %v2487, %v2577
      %v2602 = vadd.f32 %v2488, %v2580
      %v2603 = vadd.f32 %v2489, %v2585
      %v2604 = vadd.f32 %v2490, %v2588
      %v2605 = vadd.f32 %v2491, %v2593
      %v2606 = vadd.f32 %v2492, %v2596
      %v2607 = vld [vmem:[%s5] sm:$0x1]
      %v2609 = vlaneseq
      %v2610 = vshrl.u32 %v2609, 7
      %v2611 = vsub.s32 0, %v2610
      %v2612 = vrot.slane %v2607, %v2611
      %v2614 = vadd.f32 %v2599, %v2612
      %v2615 = vadd.f32 %v2600, %v2612
      %v2616 = vadd.f32 %v2601, %v2612
      %v2617 = vadd.f32 %v2602, %v2612
      %v2618 = vadd.f32 %v2603, %v2612
      %v2619 = vadd.f32 %v2604, %v2612
      %v2620 = vadd.f32 %v2605, %v2612
      %v2621 = vadd.f32 %v2606, %v2612
      %v2622 = vmax.f32 %v2614, 0.0
      %v2623 = vmax.f32 %v2615, 0.0
      %v2624 = vmax.f32 %v2616, 0.0
      %v2625 = vmax.f32 %v2617, 0.0
      %v2626 = vmax.f32 %v2618, 0.0
      %v2627 = vmax.f32 %v2619, 0.0
      %v2628 = vmax.f32 %v2620, 0.0
      %v2629 = vmax.f32 %v2621, 0.0
      %2630 = vst.msk [vmem:[#allocation3] sm:$0xff] %vm1585, %v2622
      %2631 = vst.msk [vmem:[#allocation3 + $0x8] sm:$0xff] %vm1585, %v2623
      %2632 = vst.msk [vmem:[#allocation3 + $0x10] sm:$0xff] %vm1585, %v2624
      %2633 = vst.msk [vmem:[#allocation3 + $0x18] sm:$0xff] %vm1585, %v2625
      %2634 = vst.msk [vmem:[#allocation3 + $0x20] sm:$0xff] %vm1585, %v2626
      %2635 = vst.msk [vmem:[#allocation3 + $0x28] sm:$0xff] %vm1585, %v2627
      %2636 = vst.msk [vmem:[#allocation3 + $0x30] sm:$0xff] %vm1585, %v2628
      %2637 = vst.msk [vmem:[#allocation3 + $0x38] sm:$0xff] %vm1585, %v2629
      %v2638 = vld [vmem:[%s393] sm:$0x1]
      %v2639 = vpack.c.bf16 %v2638, %v2638
      %v2640 = vld [vmem:[%s7] sm:$0xf]
      %v2641 = vld [vmem:[#allocation3] sm:$0x1]
      %v2642 = vpack.c.bf16 %v2641, %v2641
      %v2643 = vld [vmem:[%s6] sm:$0xf]
      %v2644 = vld [vmem:[%s6 + $0x4] sm:$0xf]
      %v2645 = vld [vmem:[%s6 + $0x8] sm:$0xf]
      %v2646 = vld [vmem:[%s6 + $0xc] sm:$0xf]
      %v2651 = vunpack.c.l.b16 %v2643
      %v2652 = vunpack.c.l.b16 %v2644
      %v2653 = vunpack.c.l.b16 %v2645
      %v2654 = vunpack.c.l.b16 %v2646
      %v2655 = vpack.c.b16 %v2652, %v2651
      %v2656 = vpack.c.b16 %v2654, %v2653
      %v2660 = vsel %vm1585, %v2642, 0
      %2662 = vmatprep.subr.bf16.mxu0 0
      %2663 = vmatpush1.bf16.msra.mxu0 %v2655
      %2664 = vmatprep.subr.bf16.mxu0 0
      %2665 = vmatpush1.bf16.msra.mxu0 %v2656
      %2666 = vmatprep.subr.bf16.mxu0 0
      %2667 = vmatpush1.bf16.msra.mxu0 0
      %2668 = vmatprep.subr.bf16.mxu0 0
      %2669 = vmatpush1.bf16.msra.mxu0 0
      %2670 = vmatprep.subr.bf16.mxu0 0
      %2671 = vmatpush1.bf16.msra.mxu0 0
      %2672 = vmatprep.subr.bf16.mxu0 0
      %2673 = vmatpush1.bf16.msra.mxu0 0
      %2674 = vmatprep.subr.bf16.mxu0 0
      %2675 = vmatpush1.bf16.msra.mxu0 0
      %2676 = vmatprep.subr.bf16.mxu0 0
      %2677 = vmatpush1.bf16.msra.mxu0 0
      %2678 = vmatprep.subr.bf16.mxu0 0
      %2679 = vmatpush1.bf16.msra.mxu0 0
      %2680 = vmatprep.subr.bf16.mxu0 0
      %2681 = vmatpush1.bf16.msra.mxu0 0
      %2682 = vmatprep.subr.bf16.mxu0 0
      %2683 = vmatpush1.bf16.msra.mxu0 0
      %2684 = vmatprep.subr.bf16.mxu0 0
      %2685 = vmatpush1.bf16.msra.mxu0 0
      %2686 = vmatprep.subr.bf16.mxu0 0
      %2687 = vmatpush1.bf16.msra.mxu0 0
      %2688 = vmatprep.subr.bf16.mxu0 0
      %2689 = vmatpush1.bf16.msra.mxu0 0
      %2690 = vmatprep.subr.bf16.mxu0 0
      %2691 = vmatpush1.bf16.msra.mxu0 0
      %2692 = vmatprep.subr.bf16.mxu0 0
      %2693 = vmatpush1.bf16.msra.mxu0 0
      %2694 = vmatprep.mubr.bf16.mxu0 0
      %2695 = vmatmul.mubr.bf16.gmra.mrb[0].mxu0 %v2660
      %v2696 = vpop.f32.mrb[0].mxu0
      %v2697 = vadd.f32 0.0, %v2696
      %v2698 = vpop.f32.mrb[0].mxu0
      %v2699 = vpop.f32.mrb[0].mxu0
      %v2700 = vpop.f32.mrb[0].mxu0
      %2701 = vdwg.mxu0
      %vm2702 = vcmask 64512
      %v2704 = vsel %vm2702, %v2639, 0
      %vm2706 = vcmask 1043456
      %v2708 = vsel %vm2706, %v2640, 0
      %2710 = vmatprep.subr.bf16.mxu0 0
      %2711 = vmatpush1.bf16.msra.mxu0 %v2708
      %2712 = vmatprep.subr.bf16.mxu0 0
      %2713 = vmatpush1.bf16.msra.mxu0 0
      %2714 = vmatprep.subr.bf16.mxu0 0
      %2715 = vmatpush1.bf16.msra.mxu0 0
      %2716 = vmatprep.subr.bf16.mxu0 0
      %2717 = vmatpush1.bf16.msra.mxu0 0
      %2718 = vmatprep.subr.bf16.mxu0 0
      %2719 = vmatpush1.bf16.msra.mxu0 0
      %2720 = vmatprep.subr.bf16.mxu0 0
      %2721 = vmatpush1.bf16.msra.mxu0 0
      %2722 = vmatprep.subr.bf16.mxu0 0
      %2723 = vmatpush1.bf16.msra.mxu0 0
      %2724 = vmatprep.subr.bf16.mxu0 0
      %2725 = vmatpush1.bf16.msra.mxu0 0
      %2726 = vmatprep.subr.bf16.mxu0 0
      %2727 = vmatpush1.bf16.msra.mxu0 0
      %2728 = vmatprep.subr.bf16.mxu0 0
      %2729 = vmatpush1.bf16.msra.mxu0 0
      %2730 = vmatprep.subr.bf16.mxu0 0
      %2731 = vmatpush1.bf16.msra.mxu0 0
      %2732 = vmatprep.subr.bf16.mxu0 0
      %2733 = vmatpush1.bf16.msra.mxu0 0
      %2734 = vmatprep.subr.bf16.mxu0 0
      %2735 = vmatpush1.bf16.msra.mxu0 0
      %2736 = vmatprep.subr.bf16.mxu0 0
      %2737 = vmatpush1.bf16.msra.mxu0 0
      %2738 = vmatprep.subr.bf16.mxu0 0
      %2739 = vmatpush1.bf16.msra.mxu0 0
      %2740 = vmatprep.subr.bf16.mxu0 0
      %2741 = vmatpush1.bf16.msra.mxu0 0
      %2742 = vmatprep.mubr.bf16.mxu0 0
      %2743 = vmatmul.mubr.bf16.gmra.mrb[0].mxu0 %v2704
      %v2744 = vpop.f32.mrb[0].mxu0
      %v2745 = vadd.f32 %v2697, %v2744
      %v2746 = vpop.f32.mrb[0].mxu0
      %v2747 = vpop.f32.mrb[0].mxu0
      %v2748 = vpop.f32.mrb[0].mxu0
      %2749 = vdwg.mxu0
      %v2750 = vld [vmem:[#allocation3 + $0x1] sm:$0x1]
      %v2751 = vpack.c.bf16 %v2750, %v2750
      %s2752 = scalar_lea.vmem %s6, 16
      %v2753 = vld [vmem:[%s2752] sm:$0xf]
      %v2754 = vld [vmem:[%s2752 + $0x4] sm:$0xf]
      %v2755 = vld [vmem:[%s2752 + $0x8] sm:$0xf]
      %v2756 = vld [vmem:[%s2752 + $0xc] sm:$0xf]
      %v2761 = vunpack.c.l.b16 %v2753
      %v2762 = vunpack.c.l.b16 %v2754
      %v2763 = vunpack.c.l.b16 %v2755
      %v2764 = vunpack.c.l.b16 %v2756
      %v2765 = vpack.c.b16 %v2762, %v2761
      %v2766 = vpack.c.b16 %v2764, %v2763
      %v2770 = vsel %vm1585, %v2751, 0
      %2772 = vmatprep.subr.bf16.mxu0 0
      %2773 = vmatpush1.bf16.msra.mxu0 %v2765
      %2774 = vmatprep.subr.bf16.mxu0 0
      %2775 = vmatpush1.bf16.msra.mxu0 %v2766
      %2776 = vmatprep.subr.bf16.mxu0 0
      %2777 = vmatpush1.bf16.msra.mxu0 0
      %2778 = vmatprep.subr.bf16.mxu0 0
      %2779 = vmatpush1.bf16.msra.mxu0 0
      %2780 = vmatprep.subr.bf16.mxu0 0
      %2781 = vmatpush1.bf16.msra.mxu0 0
      %2782 = vmatprep.subr.bf16.mxu0 0
      %2783 = vmatpush1.bf16.msra.mxu0 0
      %2784 = vmatprep.subr.bf16.mxu0 0
      %2785 = vmatpush1.bf16.msra.mxu0 0
      %2786 = vmatprep.subr.bf16.mxu0 0
      %2787 = vmatpush1.bf16.msra.mxu0 0
      %2788 = vmatprep.subr.bf16.mxu0 0
      %2789 = vmatpush1.bf16.msra.mxu0 0
      %2790 = vmatprep.subr.bf16.mxu0 0
      %2791 = vmatpush1.bf16.msra.mxu0 0
      %2792 = vmatprep.subr.bf16.mxu0 0
      %2793 = vmatpush1.bf16.msra.mxu0 0
      %2794 = vmatprep.subr.bf16.mxu0 0
      %2795 = vmatpush1.bf16.msra.mxu0 0
      %2796 = vmatprep.subr.bf16.mxu0 0
      %2797 = vmatpush1.bf16.msra.mxu0 0
      %2798 = vmatprep.subr.bf16.mxu0 0
      %2799 = vmatpush1.bf16.msra.mxu0 0
      %2800 = vmatprep.subr.bf16.mxu0 0
      %2801 = vmatpush1.bf16.msra.mxu0 0
      %2802 = vmatprep.subr.bf16.mxu0 0
      %2803 = vmatpush1.bf16.msra.mxu0 0
      %2804 = vmatprep.mubr.bf16.mxu0 0
      %2805 = vmatmul.mubr.bf16.gmra.mrb[0].mxu0 %v2770
      %v2806 = vpop.f32.mrb[0].mxu0
      %v2807 = vadd.f32 0.0, %v2806
      %v2808 = vpop.f32.mrb[0].mxu0
      %v2809 = vpop.f32.mrb[0].mxu0
      %v2810 = vpop.f32.mrb[0].mxu0
      %2811 = vdwg.mxu0
      %v2812 = vadd.f32 %v2745, %v2807
      %v2813 = vld [vmem:[#allocation3 + $0x2] sm:$0x1]
      %v2814 = vpack.c.bf16 %v2813, %v2813
      %s2815 = scalar_lea.vmem %s6, 32
      %v2816 = vld [vmem:[%s2815] sm:$0xf]
      %v2817 = vld [vmem:[%s2815 + $0x4] sm:$0xf]
      %v2818 = vld [vmem:[%s2815 + $0x8] sm:$0xf]
      %v2819 = vld [vmem:[%s2815 + $0xc] sm:$0xf]
      %v2824 = vunpack.c.l.b16 %v2816
      %v2825 = vunpack.c.l.b16 %v2817
      %v2826 = vunpack.c.l.b16 %v2818
      %v2827 = vunpack.c.l.b16 %v2819
      %v2828 = vpack.c.b16 %v2825, %v2824
      %v2829 = vpack.c.b16 %v2827, %v2826
      %v2833 = vsel %vm1585, %v2814, 0
      %2835 = vmatprep.subr.bf16.mxu0 0
      %2836 = vmatpush1.bf16.msra.mxu0 %v2828
      %2837 = vmatprep.subr.bf16.mxu0 0
      %2838 = vmatpush1.bf16.msra.mxu0 %v2829
      %2839 = vmatprep.subr.bf16.mxu0 0
      %2840 = vmatpush1.bf16.msra.mxu0 0
      %2841 = vmatprep.subr.bf16.mxu0 0
      %2842 = vmatpush1.bf16.msra.mxu0 0
      %2843 = vmatprep.subr.bf16.mxu0 0
      %2844 = vmatpush1.bf16.msra.mxu0 0
      %2845 = vmatprep.subr.bf16.mxu0 0
      %2846 = vmatpush1.bf16.msra.mxu0 0
      %2847 = vmatprep.subr.bf16.mxu0 0
      %2848 = vmatpush1.bf16.msra.mxu0 0
      %2849 = vmatprep.subr.bf16.mxu0 0
      %2850 = vmatpush1.bf16.msra.mxu0 0
      %2851 = vmatprep.subr.bf16.mxu0 0
      %2852 = vmatpush1.bf16.msra.mxu0 0
      %2853 = vmatprep.subr.bf16.mxu0 0
      %2854 = vmatpush1.bf16.msra.mxu0 0
      %2855 = vmatprep.subr.bf16.mxu0 0
      %2856 = vmatpush1.bf16.msra.mxu0 0
      %2857 = vmatprep.subr.bf16.mxu0 0
      %2858 = vmatpush1.bf16.msra.mxu0 0
      %2859 = vmatprep.subr.bf16.mxu0 0
      %2860 = vmatpush1.bf16.msra.mxu0 0
      %2861 = vmatprep.subr.bf16.mxu0 0
      %2862 = vmatpush1.bf16.msra.mxu0 0
      %2863 = vmatprep.subr.bf16.mxu0 0
      %2864 = vmatpush1.bf16.msra.mxu0 0
      %2865 = vmatprep.subr.bf16.mxu0 0
      %2866 = vmatpush1.bf16.msra.mxu0 0
      %2867 = vmatprep.mubr.bf16.mxu0 0
      %2868 = vmatmul.mubr.bf16.gmra.mrb[0].mxu0 %v2833
      %v2869 = vpop.f32.mrb[0].mxu0
      %v2870 = vadd.f32 0.0, %v2869
      %v2871 = vpop.f32.mrb[0].mxu0
      %v2872 = vpop.f32.mrb[0].mxu0
      %v2873 = vpop.f32.mrb[0].mxu0
      %2874 = vdwg.mxu0
      %v2875 = vadd.f32 %v2812, %v2870
      %v2876 = vld [vmem:[#allocation3 + $0x3] sm:$0x1]
      %v2877 = vpack.c.bf16 %v2876, %v2876
      %s2878 = scalar_lea.vmem %s6, 48
      %v2879 = vld [vmem:[%s2878] sm:$0xf]
      %v2880 = vld [vmem:[%s2878 + $0x4] sm:$0xf]
      %v2881 = vld [vmem:[%s2878 + $0x8] sm:$0xf]
      %v2882 = vld [vmem:[%s2878 + $0xc] sm:$0xf]
      %v2887 = vunpack.c.l.b16 %v2879
      %v2888 = vunpack.c.l.b16 %v2880
      %v2889 = vunpack.c.l.b16 %v2881
      %v2890 = vunpack.c.l.b16 %v2882
      %v2891 = vpack.c.b16 %v2888, %v2887
      %v2892 = vpack.c.b16 %v2890, %v2889
      %v2896 = vsel %vm1585, %v2877, 0
      %2898 = vmatprep.subr.bf16.mxu0 0
      %2899 = vmatpush1.bf16.msra.mxu0 %v2891
      %2900 = vmatprep.subr.bf16.mxu0 0
      %2901 = vmatpush1.bf16.msra.mxu0 %v2892
      %2902 = vmatprep.subr.bf16.mxu0 0
      %2903 = vmatpush1.bf16.msra.mxu0 0
      %2904 = vmatprep.subr.bf16.mxu0 0
      %2905 = vmatpush1.bf16.msra.mxu0 0
      %2906 = vmatprep.subr.bf16.mxu0 0
      %2907 = vmatpush1.bf16.msra.mxu0 0
      %2908 = vmatprep.subr.bf16.mxu0 0
      %2909 = vmatpush1.bf16.msra.mxu0 0
      %2910 = vmatprep.subr.bf16.mxu0 0
      %2911 = vmatpush1.bf16.msra.mxu0 0
      %2912 = vmatprep.subr.bf16.mxu0 0
      %2913 = vmatpush1.bf16.msra.mxu0 0
      %2914 = vmatprep.subr.bf16.mxu0 0
      %2915 = vmatpush1.bf16.msra.mxu0 0
      %2916 = vmatprep.subr.bf16.mxu0 0
      %2917 = vmatpush1.bf16.msra.mxu0 0
      %2918 = vmatprep.subr.bf16.mxu0 0
      %2919 = vmatpush1.bf16.msra.mxu0 0
      %2920 = vmatprep.subr.bf16.mxu0 0
      %2921 = vmatpush1.bf16.msra.mxu0 0
      %2922 = vmatprep.subr.bf16.mxu0 0
      %2923 = vmatpush1.bf16.msra.mxu0 0
      %2924 = vmatprep.subr.bf16.mxu0 0
      %2925 = vmatpush1.bf16.msra.mxu0 0
      %2926 = vmatprep.subr.bf16.mxu0 0
      %2927 = vmatpush1.bf16.msra.mxu0 0
      %2928 = vmatprep.subr.bf16.mxu0 0
      %2929 = vmatpush1.bf16.msra.mxu0 0
      %2930 = vmatprep.mubr.bf16.mxu0 0
      %2931 = vmatmul.mubr.bf16.gmra.mrb[0].mxu0 %v2896
      %v2932 = vpop.f32.mrb[0].mxu0
      %v2933 = vadd.f32 0.0, %v2932
      %v2934 = vpop.f32.mrb[0].mxu0
      %v2935 = vpop.f32.mrb[0].mxu0
      %v2936 = vpop.f32.mrb[0].mxu0
      %2937 = vdwg.mxu0
      %v2938 = vadd.f32 %v2875, %v2933
      %v2939 = vld [vmem:[#allocation3 + $0x8] sm:$0x1]
      %v2940 = vpack.c.bf16 %v2939, %v2939
      %s2941 = scalar_lea.vmem %s6, 64
      %v2942 = vld [vmem:[%s2941] sm:$0xf]
      %v2943 = vld [vmem:[%s2941 + $0x4] sm:$0xf]
      %v2944 = vld [vmem:[%s2941 + $0x8] sm:$0xf]
      %v2945 = vld [vmem:[%s2941 + $0xc] sm:$0xf]
      %v2950 = vunpack.c.l.b16 %v2942
      %v2951 = vunpack.c.l.b16 %v2943
      %v2952 = vunpack.c.l.b16 %v2944
      %v2953 = vunpack.c.l.b16 %v2945
      %v2954 = vpack.c.b16 %v2951, %v2950
      %v2955 = vpack.c.b16 %v2953, %v2952
      %v2959 = vsel %vm1585, %v2940, 0
      %2961 = vmatprep.subr.bf16.mxu0 0
      %2962 = vmatpush1.bf16.msra.mxu0 %v2954
      %2963 = vmatprep.subr.bf16.mxu0 0
      %2964 = vmatpush1.bf16.msra.mxu0 %v2955
      %2965 = vmatprep.subr.bf16.mxu0 0
      %2966 = vmatpush1.bf16.msra.mxu0 0
      %2967 = vmatprep.subr.bf16.mxu0 0
      %2968 = vmatpush1.bf16.msra.mxu0 0
      %2969 = vmatprep.subr.bf16.mxu0 0
      %2970 = vmatpush1.bf16.msra.mxu0 0
      %2971 = vmatprep.subr.bf16.mxu0 0
      %2972 = vmatpush1.bf16.msra.mxu0 0
      %2973 = vmatprep.subr.bf16.mxu0 0
      %2974 = vmatpush1.bf16.msra.mxu0 0
      %2975 = vmatprep.subr.bf16.mxu0 0
      %2976 = vmatpush1.bf16.msra.mxu0 0
      %2977 = vmatprep.subr.bf16.mxu0 0
      %2978 = vmatpush1.bf16.msra.mxu0 0
      %2979 = vmatprep.subr.bf16.mxu0 0
      %2980 = vmatpush1.bf16.msra.mxu0 0
      %2981 = vmatprep.subr.bf16.mxu0 0
      %2982 = vmatpush1.bf16.msra.mxu0 0
      %2983 = vmatprep.subr.bf16.mxu0 0
      %2984 = vmatpush1.bf16.msra.mxu0 0
      %2985 = vmatprep.subr.bf16.mxu0 0
      %2986 = vmatpush1.bf16.msra.mxu0 0
      %2987 = vmatprep.subr.bf16.mxu0 0
      %2988 = vmatpush1.bf16.msra.mxu0 0
      %2989 = vmatprep.subr.bf16.mxu0 0
      %2990 = vmatpush1.bf16.msra.mxu0 0
      %2991 = vmatprep.subr.bf16.mxu0 0
      %2992 = vmatpush1.bf16.msra.mxu0 0
      %2993 = vmatprep.mubr.bf16.mxu0 0
      %2994 = vmatmul.mubr.bf16.gmra.mrb[0].mxu0 %v2959
      %v2995 = vpop.f32.mrb[0].mxu0
      %v2996 = vadd.f32 0.0, %v2995
      %v2997 = vpop.f32.mrb[0].mxu0
      %v2998 = vpop.f32.mrb[0].mxu0
      %v2999 = vpop.f32.mrb[0].mxu0
      %3000 = vdwg.mxu0
      %v3001 = vadd.f32 %v2938, %v2996
      %v3002 = vld [vmem:[#allocation3 + $0x9] sm:$0x1]
      %v3003 = vpack.c.bf16 %v3002, %v3002
      %s3004 = scalar_lea.vmem %s6, 80
      %v3005 = vld [vmem:[%s3004] sm:$0xf]
      %v3006 = vld [vmem:[%s3004 + $0x4] sm:$0xf]
      %v3007 = vld [vmem:[%s3004 + $0x8] sm:$0xf]
      %v3008 = vld [vmem:[%s3004 + $0xc] sm:$0xf]
      %v3013 = vunpack.c.l.b16 %v3005
      %v3014 = vunpack.c.l.b16 %v3006
      %v3015 = vunpack.c.l.b16 %v3007
      %v3016 = vunpack.c.l.b16 %v3008
      %v3017 = vpack.c.b16 %v3014, %v3013
      %v3018 = vpack.c.b16 %v3016, %v3015
      %v3022 = vsel %vm1585, %v3003, 0
      %3024 = vmatprep.subr.bf16.mxu0 0
      %3025 = vmatpush1.bf16.msra.mxu0 %v3017
      %3026 = vmatprep.subr.bf16.mxu0 0
      %3027 = vmatpush1.bf16.msra.mxu0 %v3018
      %3028 = vmatprep.subr.bf16.mxu0 0
      %3029 = vmatpush1.bf16.msra.mxu0 0
      %3030 = vmatprep.subr.bf16.mxu0 0
      %3031 = vmatpush1.bf16.msra.mxu0 0
      %3032 = vmatprep.subr.bf16.mxu0 0
      %3033 = vmatpush1.bf16.msra.mxu0 0
      %3034 = vmatprep.subr.bf16.mxu0 0
      %3035 = vmatpush1.bf16.msra.mxu0 0
      %3036 = vmatprep.subr.bf16.mxu0 0
      %3037 = vmatpush1.bf16.msra.mxu0 0
      %3038 = vmatprep.subr.bf16.mxu0 0
      %3039 = vmatpush1.bf16.msra.mxu0 0
      %3040 = vmatprep.subr.bf16.mxu0 0
      %3041 = vmatpush1.bf16.msra.mxu0 0
      %3042 = vmatprep.subr.bf16.mxu0 0
      %3043 = vmatpush1.bf16.msra.mxu0 0
      %3044 = vmatprep.subr.bf16.mxu0 0
      %3045 = vmatpush1.bf16.msra.mxu0 0
      %3046 = vmatprep.subr.bf16.mxu0 0
      %3047 = vmatpush1.bf16.msra.mxu0 0
      %3048 = vmatprep.subr.bf16.mxu0 0
      %3049 = vmatpush1.bf16.msra.mxu0 0
      %3050 = vmatprep.subr.bf16.mxu0 0
      %3051 = vmatpush1.bf16.msra.mxu0 0
      %3052 = vmatprep.subr.bf16.mxu0 0
      %3053 = vmatpush1.bf16.msra.mxu0 0
      %3054 = vmatprep.subr.bf16.mxu0 0
      %3055 = vmatpush1.bf16.msra.mxu0 0
      %3056 = vmatprep.mubr.bf16.mxu0 0
      %3057 = vmatmul.mubr.bf16.gmra.mrb[0].mxu0 %v3022
      %v3058 = vpop.f32.mrb[0].mxu0
      %v3059 = vadd.f32 0.0, %v3058
      %v3060 = vpop.f32.mrb[0].mxu0
      %v3061 = vpop.f32.mrb[0].mxu0
      %v3062 = vpop.f32.mrb[0].mxu0
      %3063 = vdwg.mxu0
      %v3064 = vadd.f32 %v3001, %v3059
      %v3065 = vld [vmem:[#allocation3 + $0xa] sm:$0x1]
      %v3066 = vpack.c.bf16 %v3065, %v3065
      %s3067 = scalar_lea.vmem %s6, 96
      %v3068 = vld [vmem:[%s3067] sm:$0xf]
      %v3069 = vld [vmem:[%s3067 + $0x4] sm:$0xf]
      %v3070 = vld [vmem:[%s3067 + $0x8] sm:$0xf]
      %v3071 = vld [vmem:[%s3067 + $0xc] sm:$0xf]
      %v3076 = vunpack.c.l.b16 %v3068
      %v3077 = vunpack.c.l.b16 %v3069
      %v3078 = vunpack.c.l.b16 %v3070
      %v3079 = vunpack.c.l.b16 %v3071
      %v3080 = vpack.c.b16 %v3077, %v3076
      %v3081 = vpack.c.b16 %v3079, %v3078
      %v3085 = vsel %vm1585, %v3066, 0
      %3087 = vmatprep.subr.bf16.mxu0 0
      %3088 = vmatpush1.bf16.msra.mxu0 %v3080
      %3089 = vmatprep.subr.bf16.mxu0 0
      %3090 = vmatpush1.bf16.msra.mxu0 %v3081
      %3091 = vmatprep.subr.bf16.mxu0 0
      %3092 = vmatpush1.bf16.msra.mxu0 0
      %3093 = vmatprep.subr.bf16.mxu0 0
      %3094 = vmatpush1.bf16.msra.mxu0 0
      %3095 = vmatprep.subr.bf16.mxu0 0
      %3096 = vmatpush1.bf16.msra.mxu0 0
      %3097 = vmatprep.subr.bf16.mxu0 0
      %3098 = vmatpush1.bf16.msra.mxu0 0
      %3099 = vmatprep.subr.bf16.mxu0 0
      %3100 = vmatpush1.bf16.msra.mxu0 0
      %3101 = vmatprep.subr.bf16.mxu0 0
      %3102 = vmatpush1.bf16.msra.mxu0 0
      %3103 = vmatprep.subr.bf16.mxu0 0
      %3104 = vmatpush1.bf16.msra.mxu0 0
      %3105 = vmatprep.subr.bf16.mxu0 0
      %3106 = vmatpush1.bf16.msra.mxu0 0
      %3107 = vmatprep.subr.bf16.mxu0 0
      %3108 = vmatpush1.bf16.msra.mxu0 0
      %3109 = vmatprep.subr.bf16.mxu0 0
      %3110 = vmatpush1.bf16.msra.mxu0 0
      %3111 = vmatprep.subr.bf16.mxu0 0
      %3112 = vmatpush1.bf16.msra.mxu0 0
      %3113 = vmatprep.subr.bf16.mxu0 0
      %3114 = vmatpush1.bf16.msra.mxu0 0
      %3115 = vmatprep.subr.bf16.mxu0 0
      %3116 = vmatpush1.bf16.msra.mxu0 0
      %3117 = vmatprep.subr.bf16.mxu0 0
      %3118 = vmatpush1.bf16.msra.mxu0 0
      %3119 = vmatprep.mubr.bf16.mxu0 0
      %3120 = vmatmul.mubr.bf16.gmra.mrb[0].mxu0 %v3085
      %v3121 = vpop.f32.mrb[0].mxu0
      %v3122 = vadd.f32 0.0, %v3121
      %v3123 = vpop.f32.mrb[0].mxu0
      %v3124 = vpop.f32.mrb[0].mxu0
      %v3125 = vpop.f32.mrb[0].mxu0
      %3126 = vdwg.mxu0
      %v3127 = vadd.f32 %v3064, %v3122
      %v3128 = vld [vmem:[#allocation3 + $0xb] sm:$0x1]
      %v3129 = vpack.c.bf16 %v3128, %v3128
      %s3130 = scalar_lea.vmem %s6, 112
      %v3131 = vld [vmem:[%s3130] sm:$0xf]
      %v3132 = vld [vmem:[%s3130 + $0x4] sm:$0xf]
      %v3133 = vld [vmem:[%s3130 + $0x8] sm:$0xf]
      %v3134 = vld [vmem:[%s3130 + $0xc] sm:$0xf]
      %v3139 = vunpack.c.l.b16 %v3131
      %v3140 = vunpack.c.l.b16 %v3132
      %v3141 = vunpack.c.l.b16 %v3133
      %v3142 = vunpack.c.l.b16 %v3134
      %v3143 = vpack.c.b16 %v3140, %v3139
      %v3144 = vpack.c.b16 %v3142, %v3141
      %v3148 = vsel %vm1585, %v3129, 0
      %3150 = vmatprep.subr.bf16.mxu0 0
      %3151 = vmatpush1.bf16.msra.mxu0 %v3143
      %3152 = vmatprep.subr.bf16.mxu0 0
      %3153 = vmatpush1.bf16.msra.mxu0 %v3144
      %3154 = vmatprep.subr.bf16.mxu0 0
      %3155 = vmatpush1.bf16.msra.mxu0 0
      %3156 = vmatprep.subr.bf16.mxu0 0
      %3157 = vmatpush1.bf16.msra.mxu0 0
      %3158 = vmatprep.subr.bf16.mxu0 0
      %3159 = vmatpush1.bf16.msra.mxu0 0
      %3160 = vmatprep.subr.bf16.mxu0 0
      %3161 = vmatpush1.bf16.msra.mxu0 0
      %3162 = vmatprep.subr.bf16.mxu0 0
      %3163 = vmatpush1.bf16.msra.mxu0 0
      %3164 = vmatprep.subr.bf16.mxu0 0
      %3165 = vmatpush1.bf16.msra.mxu0 0
      %3166 = vmatprep.subr.bf16.mxu0 0
      %3167 = vmatpush1.bf16.msra.mxu0 0
      %3168 = vmatprep.subr.bf16.mxu0 0
      %3169 = vmatpush1.bf16.msra.mxu0 0
      %3170 = vmatprep.subr.bf16.mxu0 0
      %3171 = vmatpush1.bf16.msra.mxu0 0
      %3172 = vmatprep.subr.bf16.mxu0 0
      %3173 = vmatpush1.bf16.msra.mxu0 0
      %3174 = vmatprep.subr.bf16.mxu0 0
      %3175 = vmatpush1.bf16.msra.mxu0 0
      %3176 = vmatprep.subr.bf16.mxu0 0
      %3177 = vmatpush1.bf16.msra.mxu0 0
      %3178 = vmatprep.subr.bf16.mxu0 0
      %3179 = vmatpush1.bf16.msra.mxu0 0
      %3180 = vmatprep.subr.bf16.mxu0 0
      %3181 = vmatpush1.bf16.msra.mxu0 0
      %3182 = vmatprep.mubr.bf16.mxu0 0
      %3183 = vmatmul.mubr.bf16.gmra.mrb[0].mxu0 %v3148
      %v3184 = vpop.f32.mrb[0].mxu0
      %v3185 = vadd.f32 0.0, %v3184
      %v3186 = vpop.f32.mrb[0].mxu0
      %v3187 = vpop.f32.mrb[0].mxu0
      %v3188 = vpop.f32.mrb[0].mxu0
      %3189 = vdwg.mxu0
      %v3190 = vadd.f32 %v3127, %v3185
      %v3191 = vld [vmem:[#allocation3 + $0x10] sm:$0x1]
      %v3192 = vpack.c.bf16 %v3191, %v3191
      %s3193 = scalar_lea.vmem %s6, 128
      %v3194 = vld [vmem:[%s3193] sm:$0xf]
      %v3195 = vld [vmem:[%s3193 + $0x4] sm:$0xf]
      %v3196 = vld [vmem:[%s3193 + $0x8] sm:$0xf]
      %v3197 = vld [vmem:[%s3193 + $0xc] sm:$0xf]
      %v3202 = vunpack.c.l.b16 %v3194
      %v3203 = vunpack.c.l.b16 %v3195
      %v3204 = vunpack.c.l.b16 %v3196
      %v3205 = vunpack.c.l.b16 %v3197
      %v3206 = vpack.c.b16 %v3203, %v3202
      %v3207 = vpack.c.b16 %v3205, %v3204
      %v3211 = vsel %vm1585, %v3192, 0
      %3213 = vmatprep.subr.bf16.mxu0 0
      %3214 = vmatpush1.bf16.msra.mxu0 %v3206
      %3215 = vmatprep.subr.bf16.mxu0 0
      %3216 = vmatpush1.bf16.msra.mxu0 %v3207
      %3217 = vmatprep.subr.bf16.mxu0 0
      %3218 = vmatpush1.bf16.msra.mxu0 0
      %3219 = vmatprep.subr.bf16.mxu0 0
      %3220 = vmatpush1.bf16.msra.mxu0 0
      %3221 = vmatprep.subr.bf16.mxu0 0
      %3222 = vmatpush1.bf16.msra.mxu0 0
      %3223 = vmatprep.subr.bf16.mxu0 0
      %3224 = vmatpush1.bf16.msra.mxu0 0
      %3225 = vmatprep.subr.bf16.mxu0 0
      %3226 = vmatpush1.bf16.msra.mxu0 0
      %3227 = vmatprep.subr.bf16.mxu0 0
      %3228 = vmatpush1.bf16.msra.mxu0 0
      %3229 = vmatprep.subr.bf16.mxu0 0
      %3230 = vmatpush1.bf16.msra.mxu0 0
      %3231 = vmatprep.subr.bf16.mxu0 0
      %3232 = vmatpush1.bf16.msra.mxu0 0
      %3233 = vmatprep.subr.bf16.mxu0 0
      %3234 = vmatpush1.bf16.msra.mxu0 0
      %3235 = vmatprep.subr.bf16.mxu0 0
      %3236 = vmatpush1.bf16.msra.mxu0 0
      %3237 = vmatprep.subr.bf16.mxu0 0
      %3238 = vmatpush1.bf16.msra.mxu0 0
      %3239 = vmatprep.subr.bf16.mxu0 0
      %3240 = vmatpush1.bf16.msra.mxu0 0
      %3241 = vmatprep.subr.bf16.mxu0 0
      %3242 = vmatpush1.bf16.msra.mxu0 0
      %3243 = vmatprep.subr.bf16.mxu0 0
      %3244 = vmatpush1.bf16.msra.mxu0 0
      %3245 = vmatprep.mubr.bf16.mxu0 0
      %3246 = vmatmul.mubr.bf16.gmra.mrb[0].mxu0 %v3211
      %v3247 = vpop.f32.mrb[0].mxu0
      %v3248 = vadd.f32 0.0, %v3247
      %v3249 = vpop.f32.mrb[0].mxu0
      %v3250 = vpop.f32.mrb[0].mxu0
      %v3251 = vpop.f32.mrb[0].mxu0
      %3252 = vdwg.mxu0
      %v3253 = vadd.f32 %v3190, %v3248
      %v3254 = vld [vmem:[#allocation3 + $0x11] sm:$0x1]
      %v3255 = vpack.c.bf16 %v3254, %v3254
      %s3256 = scalar_lea.vmem %s6, 144
      %v3257 = vld [vmem:[%s3256] sm:$0xf]
      %v3258 = vld [vmem:[%s3256 + $0x4] sm:$0xf]
      %v3259 = vld [vmem:[%s3256 + $0x8] sm:$0xf]
      %v3260 = vld [vmem:[%s3256 + $0xc] sm:$0xf]
      %v3265 = vunpack.c.l.b16 %v3257
      %v3266 = vunpack.c.l.b16 %v3258
      %v3267 = vunpack.c.l.b16 %v3259
      %v3268 = vunpack.c.l.b16 %v3260
      %v3269 = vpack.c.b16 %v3266, %v3265
      %v3270 = vpack.c.b16 %v3268, %v3267
      %v3274 = vsel %vm1585, %v3255, 0
      %3276 = vmatprep.subr.bf16.mxu0 0
      %3277 = vmatpush1.bf16.msra.mxu0 %v3269
      %3278 = vmatprep.subr.bf16.mxu0 0
      %3279 = vmatpush1.bf16.msra.mxu0 %v3270
      %3280 = vmatprep.subr.bf16.mxu0 0
      %3281 = vmatpush1.bf16.msra.mxu0 0
      %3282 = vmatprep.subr.bf16.mxu0 0
      %3283 = vmatpush1.bf16.msra.mxu0 0
      %3284 = vmatprep.subr.bf16.mxu0 0
      %3285 = vmatpush1.bf16.msra.mxu0 0
      %3286 = vmatprep.subr.bf16.mxu0 0
      %3287 = vmatpush1.bf16.msra.mxu0 0
      %3288 = vmatprep.subr.bf16.mxu0 0
      %3289 = vmatpush1.bf16.msra.mxu0 0
      %3290 = vmatprep.subr.bf16.mxu0 0
      %3291 = vmatpush1.bf16.msra.mxu0 0
      %3292 = vmatprep.subr.bf16.mxu0 0
      %3293 = vmatpush1.bf16.msra.mxu0 0
      %3294 = vmatprep.subr.bf16.mxu0 0
      %3295 = vmatpush1.bf16.msra.mxu0 0
      %3296 = vmatprep.subr.bf16.mxu0 0
      %3297 = vmatpush1.bf16.msra.mxu0 0
      %3298 = vmatprep.subr.bf16.mxu0 0
      %3299 = vmatpush1.bf16.msra.mxu0 0
      %3300 = vmatprep.subr.bf16.mxu0 0
      %3301 = vmatpush1.bf16.msra.mxu0 0
      %3302 = vmatprep.subr.bf16.mxu0 0
      %3303 = vmatpush1.bf16.msra.mxu0 0
      %3304 = vmatprep.subr.bf16.mxu0 0
      %3305 = vmatpush1.bf16.msra.mxu0 0
      %3306 = vmatprep.subr.bf16.mxu0 0
      %3307 = vmatpush1.bf16.msra.mxu0 0
      %3308 = vmatprep.mubr.bf16.mxu0 0
      %3309 = vmatmul.mubr.bf16.gmra.mrb[0].mxu0 %v3274
      %v3310 = vpop.f32.mrb[0].mxu0
      %v3311 = vadd.f32 0.0, %v3310
      %v3312 = vpop.f32.mrb[0].mxu0
      %v3313 = vpop.f32.mrb[0].mxu0
      %v3314 = vpop.f32.mrb[0].mxu0
      %3315 = vdwg.mxu0
      %v3316 = vadd.f32 %v3253, %v3311
      %v3317 = vld [vmem:[#allocation3 + $0x12] sm:$0x1]
      %v3318 = vpack.c.bf16 %v3317, %v3317
      %s3319 = scalar_lea.vmem %s6, 160
      %v3320 = vld [vmem:[%s3319] sm:$0xf]
      %v3321 = vld [vmem:[%s3319 + $0x4] sm:$0xf]
      %v3322 = vld [vmem:[%s3319 + $0x8] sm:$0xf]
      %v3323 = vld [vmem:[%s3319 + $0xc] sm:$0xf]
      %v3328 = vunpack.c.l.b16 %v3320
      %v3329 = vunpack.c.l.b16 %v3321
      %v3330 = vunpack.c.l.b16 %v3322
      %v3331 = vunpack.c.l.b16 %v3323
      %v3332 = vpack.c.b16 %v3329, %v3328
      %v3333 = vpack.c.b16 %v3331, %v3330
      %v3337 = vsel %vm1585, %v3318, 0
      %3339 = vmatprep.subr.bf16.mxu0 0
      %3340 = vmatpush1.bf16.msra.mxu0 %v3332
      %3341 = vmatprep.subr.bf16.mxu0 0
      %3342 = vmatpush1.bf16.msra.mxu0 %v3333
      %3343 = vmatprep.subr.bf16.mxu0 0
      %3344 = vmatpush1.bf16.msra.mxu0 0
      %3345 = vmatprep.subr.bf16.mxu0 0
      %3346 = vmatpush1.bf16.msra.mxu0 0
      %3347 = vmatprep.subr.bf16.mxu0 0
      %3348 = vmatpush1.bf16.msra.mxu0 0
      %3349 = vmatprep.subr.bf16.mxu0 0
      %3350 = vmatpush1.bf16.msra.mxu0 0
      %3351 = vmatprep.subr.bf16.mxu0 0
      %3352 = vmatpush1.bf16.msra.mxu0 0
      %3353 = vmatprep.subr.bf16.mxu0 0
      %3354 = vmatpush1.bf16.msra.mxu0 0
      %3355 = vmatprep.subr.bf16.mxu0 0
      %3356 = vmatpush1.bf16.msra.mxu0 0
      %3357 = vmatprep.subr.bf16.mxu0 0
      %3358 = vmatpush1.bf16.msra.mxu0 0
      %3359 = vmatprep.subr.bf16.mxu0 0
      %3360 = vmatpush1.bf16.msra.mxu0 0
      %3361 = vmatprep.subr.bf16.mxu0 0
      %3362 = vmatpush1.bf16.msra.mxu0 0
      %3363 = vmatprep.subr.bf16.mxu0 0
      %3364 = vmatpush1.bf16.msra.mxu0 0
      %3365 = vmatprep.subr.bf16.mxu0 0
      %3366 = vmatpush1.bf16.msra.mxu0 0
      %3367 = vmatprep.subr.bf16.mxu0 0
      %3368 = vmatpush1.bf16.msra.mxu0 0
      %3369 = vmatprep.subr.bf16.mxu0 0
      %3370 = vmatpush1.bf16.msra.mxu0 0
      %3371 = vmatprep.mubr.bf16.mxu0 0
      %3372 = vmatmul.mubr.bf16.gmra.mrb[0].mxu0 %v3337
      %v3373 = vpop.f32.mrb[0].mxu0
      %v3374 = vadd.f32 0.0, %v3373
      %v3375 = vpop.f32.mrb[0].mxu0
      %v3376 = vpop.f32.mrb[0].mxu0
      %v3377 = vpop.f32.mrb[0].mxu0
      %3378 = vdwg.mxu0
      %v3379 = vadd.f32 %v3316, %v3374
      %v3380 = vld [vmem:[#allocation3 + $0x13] sm:$0x1]
      %v3381 = vpack.c.bf16 %v3380, %v3380
      %s3382 = scalar_lea.vmem %s6, 176
      %v3383 = vld [vmem:[%s3382] sm:$0xf]
      %v3384 = vld [vmem:[%s3382 + $0x4] sm:$0xf]
      %v3385 = vld [vmem:[%s3382 + $0x8] sm:$0xf]
      %v3386 = vld [vmem:[%s3382 + $0xc] sm:$0xf]
      %v3391 = vunpack.c.l.b16 %v3383
      %v3392 = vunpack.c.l.b16 %v3384
      %v3393 = vunpack.c.l.b16 %v3385
      %v3394 = vunpack.c.l.b16 %v3386
      %v3395 = vpack.c.b16 %v3392, %v3391
      %v3396 = vpack.c.b16 %v3394, %v3393
      %v3400 = vsel %vm1585, %v3381, 0
      %3402 = vmatprep.subr.bf16.mxu0 0
      %3403 = vmatpush1.bf16.msra.mxu0 %v3395
      %3404 = vmatprep.subr.bf16.mxu0 0
      %3405 = vmatpush1.bf16.msra.mxu0 %v3396
      %3406 = vmatprep.subr.bf16.mxu0 0
      %3407 = vmatpush1.bf16.msra.mxu0 0
      %3408 = vmatprep.subr.bf16.mxu0 0
      %3409 = vmatpush1.bf16.msra.mxu0 0
      %3410 = vmatprep.subr.bf16.mxu0 0
      %3411 = vmatpush1.bf16.msra.mxu0 0
      %3412 = vmatprep.subr.bf16.mxu0 0
      %3413 = vmatpush1.bf16.msra.mxu0 0
      %3414 = vmatprep.subr.bf16.mxu0 0
      %3415 = vmatpush1.bf16.msra.mxu0 0
      %3416 = vmatprep.subr.bf16.mxu0 0
      %3417 = vmatpush1.bf16.msra.mxu0 0
      %3418 = vmatprep.subr.bf16.mxu0 0
      %3419 = vmatpush1.bf16.msra.mxu0 0
      %3420 = vmatprep.subr.bf16.mxu0 0
      %3421 = vmatpush1.bf16.msra.mxu0 0
      %3422 = vmatprep.subr.bf16.mxu0 0
      %3423 = vmatpush1.bf16.msra.mxu0 0
      %3424 = vmatprep.subr.bf16.mxu0 0
      %3425 = vmatpush1.bf16.msra.mxu0 0
      %3426 = vmatprep.subr.bf16.mxu0 0
      %3427 = vmatpush1.bf16.msra.mxu0 0
      %3428 = vmatprep.subr.bf16.mxu0 0
      %3429 = vmatpush1.bf16.msra.mxu0 0
      %3430 = vmatprep.subr.bf16.mxu0 0
      %3431 = vmatpush1.bf16.msra.mxu0 0
      %3432 = vmatprep.subr.bf16.mxu0 0
      %3433 = vmatpush1.bf16.msra.mxu0 0
      %3434 = vmatprep.mubr.bf16.mxu0 0
      %3435 = vmatmul.mubr.bf16.gmra.mrb[0].mxu0 %v3400
      %v3436 = vpop.f32.mrb[0].mxu0
      %v3437 = vadd.f32 0.0, %v3436
      %v3438 = vpop.f32.mrb[0].mxu0
      %v3439 = vpop.f32.mrb[0].mxu0
      %v3440 = vpop.f32.mrb[0].mxu0
      %3441 = vdwg.mxu0
      %v3442 = vadd.f32 %v3379, %v3437
      %v3443 = vld [vmem:[#allocation3 + $0x18] sm:$0x1]
      %v3444 = vpack.c.bf16 %v3443, %v3443
      %s3445 = scalar_lea.vmem %s6, 192
      %v3446 = vld [vmem:[%s3445] sm:$0xf]
      %v3447 = vld [vmem:[%s3445 + $0x4] sm:$0xf]
      %v3448 = vld [vmem:[%s3445 + $0x8] sm:$0xf]
      %v3449 = vld [vmem:[%s3445 + $0xc] sm:$0xf]
      %v3454 = vunpack.c.l.b16 %v3446
      %v3455 = vunpack.c.l.b16 %v3447
      %v3456 = vunpack.c.l.b16 %v3448
      %v3457 = vunpack.c.l.b16 %v3449
      %v3458 = vpack.c.b16 %v3455, %v3454
      %v3459 = vpack.c.b16 %v3457, %v3456
      %v3463 = vsel %vm1585, %v3444, 0
      %3465 = vmatprep.subr.bf16.mxu0 0
      %3466 = vmatpush1.bf16.msra.mxu0 %v3458
      %3467 = vmatprep.subr.bf16.mxu0 0
      %3468 = vmatpush1.bf16.msra.mxu0 %v3459
      %3469 = vmatprep.subr.bf16.mxu0 0
      %3470 = vmatpush1.bf16.msra.mxu0 0
      %3471 = vmatprep.subr.bf16.mxu0 0
      %3472 = vmatpush1.bf16.msra.mxu0 0
      %3473 = vmatprep.subr.bf16.mxu0 0
      %3474 = vmatpush1.bf16.msra.mxu0 0
      %3475 = vmatprep.subr.bf16.mxu0 0
      %3476 = vmatpush1.bf16.msra.mxu0 0
      %3477 = vmatprep.subr.bf16.mxu0 0
      %3478 = vmatpush1.bf16.msra.mxu0 0
      %3479 = vmatprep.subr.bf16.mxu0 0
      %3480 = vmatpush1.bf16.msra.mxu0 0
      %3481 = vmatprep.subr.bf16.mxu0 0
      %3482 = vmatpush1.bf16.msra.mxu0 0
      %3483 = vmatprep.subr.bf16.mxu0 0
      %3484 = vmatpush1.bf16.msra.mxu0 0
      %3485 = vmatprep.subr.bf16.mxu0 0
      %3486 = vmatpush1.bf16.msra.mxu0 0
      %3487 = vmatprep.subr.bf16.mxu0 0
      %3488 = vmatpush1.bf16.msra.mxu0 0
      %3489 = vmatprep.subr.bf16.mxu0 0
      %3490 = vmatpush1.bf16.msra.mxu0 0
      %3491 = vmatprep.subr.bf16.mxu0 0
      %3492 = vmatpush1.bf16.msra.mxu0 0
      %3493 = vmatprep.subr.bf16.mxu0 0
      %3494 = vmatpush1.bf16.msra.mxu0 0
      %3495 = vmatprep.subr.bf16.mxu0 0
      %3496 = vmatpush1.bf16.msra.mxu0 0
      %3497 = vmatprep.mubr.bf16.mxu0 0
      %3498 = vmatmul.mubr.bf16.gmra.mrb[0].mxu0 %v3463
      %v3499 = vpop.f32.mrb[0].mxu0
      %v3500 = vadd.f32 0.0, %v3499
      %v3501 = vpop.f32.mrb[0].mxu0
      %v3502 = vpop.f32.mrb[0].mxu0
      %v3503 = vpop.f32.mrb[0].mxu0
      %3504 = vdwg.mxu0
      %v3505 = vadd.f32 %v3442, %v3500
      %v3506 = vld [vmem:[#allocation3 + $0x19] sm:$0x1]
      %v3507 = vpack.c.bf16 %v3506, %v3506
      %s3508 = scalar_lea.vmem %s6, 208
      %v3509 = vld [vmem:[%s3508] sm:$0xf]
      %v3510 = vld [vmem:[%s3508 + $0x4] sm:$0xf]
      %v3511 = vld [vmem:[%s3508 + $0x8] sm:$0xf]
      %v3512 = vld [vmem:[%s3508 + $0xc] sm:$0xf]
      %v3517 = vunpack.c.l.b16 %v3509
      %v3518 = vunpack.c.l.b16 %v3510
      %v3519 = vunpack.c.l.b16 %v3511
      %v3520 = vunpack.c.l.b16 %v3512
      %v3521 = vpack.c.b16 %v3518, %v3517
      %v3522 = vpack.c.b16 %v3520, %v3519
      %v3526 = vsel %vm1585, %v3507, 0
      %3528 = vmatprep.subr.bf16.mxu0 0
      %3529 = vmatpush1.bf16.msra.mxu0 %v3521
      %3530 = vmatprep.subr.bf16.mxu0 0
      %3531 = vmatpush1.bf16.msra.mxu0 %v3522
      %3532 = vmatprep.subr.bf16.mxu0 0
      %3533 = vmatpush1.bf16.msra.mxu0 0
      %3534 = vmatprep.subr.bf16.mxu0 0
      %3535 = vmatpush1.bf16.msra.mxu0 0
      %3536 = vmatprep.subr.bf16.mxu0 0
      %3537 = vmatpush1.bf16.msra.mxu0 0
      %3538 = vmatprep.subr.bf16.mxu0 0
      %3539 = vmatpush1.bf16.msra.mxu0 0
      %3540 = vmatprep.subr.bf16.mxu0 0
      %3541 = vmatpush1.bf16.msra.mxu0 0
      %3542 = vmatprep.subr.bf16.mxu0 0
      %3543 = vmatpush1.bf16.msra.mxu0 0
      %3544 = vmatprep.subr.bf16.mxu0 0
      %3545 = vmatpush1.bf16.msra.mxu0 0
      %3546 = vmatprep.subr.bf16.mxu0 0
      %3547 = vmatpush1.bf16.msra.mxu0 0
      %3548 = vmatprep.subr.bf16.mxu0 0
      %3549 = vmatpush1.bf16.msra.mxu0 0
      %3550 = vmatprep.subr.bf16.mxu0 0
      %3551 = vmatpush1.bf16.msra.mxu0 0
      %3552 = vmatprep.subr.bf16.mxu0 0
      %3553 = vmatpush1.bf16.msra.mxu0 0
      %3554 = vmatprep.subr.bf16.mxu0 0
      %3555 = vmatpush1.bf16.msra.mxu0 0
      %3556 = vmatprep.subr.bf16.mxu0 0
      %3557 = vmatpush1.bf16.msra.mxu0 0
      %3558 = vmatprep.subr.bf16.mxu0 0
      %3559 = vmatpush1.bf16.msra.mxu0 0
      %3560 = vmatprep.mubr.bf16.mxu0 0
      %3561 = vmatmul.mubr.bf16.gmra.mrb[0].mxu0 %v3526
      %v3562 = vpop.f32.mrb[0].mxu0
      %v3563 = vadd.f32 0.0, %v3562
      %v3564 = vpop.f32.mrb[0].mxu0
      %v3565 = vpop.f32.mrb[0].mxu0
      %v3566 = vpop.f32.mrb[0].mxu0
      %3567 = vdwg.mxu0
      %v3568 = vadd.f32 %v3505, %v3563
      %v3569 = vld [vmem:[#allocation3 + $0x1a] sm:$0x1]
      %v3570 = vpack.c.bf16 %v3569, %v3569
      %s3571 = scalar_lea.vmem %s6, 224
      %v3572 = vld [vmem:[%s3571] sm:$0xf]
      %v3573 = vld [vmem:[%s3571 + $0x4] sm:$0xf]
      %v3574 = vld [vmem:[%s3571 + $0x8] sm:$0xf]
      %v3575 = vld [vmem:[%s3571 + $0xc] sm:$0xf]
      %v3580 = vunpack.c.l.b16 %v3572
      %v3581 = vunpack.c.l.b16 %v3573
      %v3582 = vunpack.c.l.b16 %v3574
      %v3583 = vunpack.c.l.b16 %v3575
      %v3584 = vpack.c.b16 %v3581, %v3580
      %v3585 = vpack.c.b16 %v3583, %v3582
      %v3589 = vsel %vm1585, %v3570, 0
      %3591 = vmatprep.subr.bf16.mxu0 0
      %3592 = vmatpush1.bf16.msra.mxu0 %v3584
      %3593 = vmatprep.subr.bf16.mxu0 0
      %3594 = vmatpush1.bf16.msra.mxu0 %v3585
      %3595 = vmatprep.subr.bf16.mxu0 0
      %3596 = vmatpush1.bf16.msra.mxu0 0
      %3597 = vmatprep.subr.bf16.mxu0 0
      %3598 = vmatpush1.bf16.msra.mxu0 0
      %3599 = vmatprep.subr.bf16.mxu0 0
      %3600 = vmatpush1.bf16.msra.mxu0 0
      %3601 = vmatprep.subr.bf16.mxu0 0
      %3602 = vmatpush1.bf16.msra.mxu0 0
      %3603 = vmatprep.subr.bf16.mxu0 0
      %3604 = vmatpush1.bf16.msra.mxu0 0
      %3605 = vmatprep.subr.bf16.mxu0 0
      %3606 = vmatpush1.bf16.msra.mxu0 0
      %3607 = vmatprep.subr.bf16.mxu0 0
      %3608 = vmatpush1.bf16.msra.mxu0 0
      %3609 = vmatprep.subr.bf16.mxu0 0
      %3610 = vmatpush1.bf16.msra.mxu0 0
      %3611 = vmatprep.subr.bf16.mxu0 0
      %3612 = vmatpush1.bf16.msra.mxu0 0
      %3613 = vmatprep.subr.bf16.mxu0 0
      %3614 = vmatpush1.bf16.msra.mxu0 0
      %3615 = vmatprep.subr.bf16.mxu0 0
      %3616 = vmatpush1.bf16.msra.mxu0 0
      %3617 = vmatprep.subr.bf16.mxu0 0
      %3618 = vmatpush1.bf16.msra.mxu0 0
      %3619 = vmatprep.subr.bf16.mxu0 0
      %3620 = vmatpush1.bf16.msra.mxu0 0
      %3621 = vmatprep.subr.bf16.mxu0 0
      %3622 = vmatpush1.bf16.msra.mxu0 0
      %3623 = vmatprep.mubr.bf16.mxu0 0
      %3624 = vmatmul.mubr.bf16.gmra.mrb[0].mxu0 %v3589
      %v3625 = vpop.f32.mrb[0].mxu0
      %v3626 = vadd.f32 0.0, %v3625
      %v3627 = vpop.f32.mrb[0].mxu0
      %v3628 = vpop.f32.mrb[0].mxu0
      %v3629 = vpop.f32.mrb[0].mxu0
      %3630 = vdwg.mxu0
      %v3631 = vadd.f32 %v3568, %v3626
      %v3632 = vld [vmem:[#allocation3 + $0x1b] sm:$0x1]
      %v3633 = vpack.c.bf16 %v3632, %v3632
      %s3634 = scalar_lea.vmem %s6, 240
      %v3635 = vld [vmem:[%s3634] sm:$0xf]
      %v3636 = vld [vmem:[%s3634 + $0x4] sm:$0xf]
      %v3637 = vld [vmem:[%s3634 + $0x8] sm:$0xf]
      %v3638 = vld [vmem:[%s3634 + $0xc] sm:$0xf]
      %v3643 = vunpack.c.l.b16 %v3635
      %v3644 = vunpack.c.l.b16 %v3636
      %v3645 = vunpack.c.l.b16 %v3637
      %v3646 = vunpack.c.l.b16 %v3638
      %v3647 = vpack.c.b16 %v3644, %v3643
      %v3648 = vpack.c.b16 %v3646, %v3645
      %v3652 = vsel %vm1585, %v3633, 0
      %3654 = vmatprep.subr.bf16.mxu0 0
      %3655 = vmatpush1.bf16.msra.mxu0 %v3647
      %3656 = vmatprep.subr.bf16.mxu0 0
      %3657 = vmatpush1.bf16.msra.mxu0 %v3648
      %3658 = vmatprep.subr.bf16.mxu0 0
      %3659 = vmatpush1.bf16.msra.mxu0 0
      %3660 = vmatprep.subr.bf16.mxu0 0
      %3661 = vmatpush1.bf16.msra.mxu0 0
      %3662 = vmatprep.subr.bf16.mxu0 0
      %3663 = vmatpush1.bf16.msra.mxu0 0
      %3664 = vmatprep.subr.bf16.mxu0 0
      %3665 = vmatpush1.bf16.msra.mxu0 0
      %3666 = vmatprep.subr.bf16.mxu0 0
      %3667 = vmatpush1.bf16.msra.mxu0 0
      %3668 = vmatprep.subr.bf16.mxu0 0
      %3669 = vmatpush1.bf16.msra.mxu0 0
      %3670 = vmatprep.subr.bf16.mxu0 0
      %3671 = vmatpush1.bf16.msra.mxu0 0
      %3672 = vmatprep.subr.bf16.mxu0 0
      %3673 = vmatpush1.bf16.msra.mxu0 0
      %3674 = vmatprep.subr.bf16.mxu0 0
      %3675 = vmatpush1.bf16.msra.mxu0 0
      %3676 = vmatprep.subr.bf16.mxu0 0
      %3677 = vmatpush1.bf16.msra.mxu0 0
      %3678 = vmatprep.subr.bf16.mxu0 0
      %3679 = vmatpush1.bf16.msra.mxu0 0
      %3680 = vmatprep.subr.bf16.mxu0 0
      %3681 = vmatpush1.bf16.msra.mxu0 0
      %3682 = vmatprep.subr.bf16.mxu0 0
      %3683 = vmatpush1.bf16.msra.mxu0 0
      %3684 = vmatprep.subr.bf16.mxu0 0
      %3685 = vmatpush1.bf16.msra.mxu0 0
      %3686 = vmatprep.mubr.bf16.mxu0 0
      %3687 = vmatmul.mubr.bf16.gmra.mrb[0].mxu0 %v3652
      %v3688 = vpop.f32.mrb[0].mxu0
      %v3689 = vadd.f32 0.0, %v3688
      %v3690 = vpop.f32.mrb[0].mxu0
      %v3691 = vpop.f32.mrb[0].mxu0
      %v3692 = vpop.f32.mrb[0].mxu0
      %3693 = vdwg.mxu0
      %v3694 = vadd.f32 %v3631, %v3689
      %v3695 = vld [vmem:[%s8] sm:$0x1]
      %v3696 = vadd.f32 %v3694, %v3695
      %v3697 = vmax.f32 %v3696, 0.0
      %v3698 = vpack.c.bf16 %v3697, %v3697
      %v3699 = vld [vmem:[%s9] sm:$0xf]
      %v3700 = vld [vmem:[%s9 + $0x4] sm:$0xf]
      %v3701 = vld [vmem:[%s9 + $0x8] sm:$0xf]
      %v3702 = vld [vmem:[%s9 + $0xc] sm:$0xf]
      %v3703 = vld [vmem:[%s9 + $0x10] sm:$0xf]
      %v3704 = vld [vmem:[%s9 + $0x14] sm:$0xf]
      %v3705 = vld [vmem:[%s9 + $0x18] sm:$0xf]
      %v3706 = vld [vmem:[%s9 + $0x1c] sm:$0xf]
      %v3707 = vld [vmem:[%s10] sm:$0x1]
      %v3716 = vunpack.c.l.b16 %v3699
      %v3717 = vunpack.c.l.b16 %v3700
      %v3718 = vunpack.c.l.b16 %v3701
      %v3719 = vunpack.c.l.b16 %v3702
      %v3720 = vunpack.c.l.b16 %v3703
      %v3721 = vunpack.c.l.b16 %v3704
      %v3722 = vunpack.c.l.b16 %v3705
      %v3723 = vunpack.c.l.b16 %v3706
      %v3724 = vpack.c.b16 %v3717, %v3716
      %v3725 = vpack.c.b16 %v3719, %v3718
      %v3726 = vpack.c.b16 %v3721, %v3720
      %v3727 = vpack.c.b16 %v3723, %v3722
      %vm3732 = vcmask 523264
      %v3734 = vsel %vm3732, %v3698, 0
      %3736 = vmatprep.subr.bf16.mxu0 0
      %3737 = vmatpush1.bf16.msra.mxu0 %v3724
      %3738 = vmatprep.subr.bf16.mxu0 0
      %3739 = vmatpush1.bf16.msra.mxu0 %v3725
      %3740 = vmatprep.subr.bf16.mxu0 0
      %3741 = vmatpush1.bf16.msra.mxu0 %v3726
      %3742 = vmatprep.subr.bf16.mxu0 0
      %3743 = vmatpush1.bf16.msra.mxu0 %v3727
      %3744 = vmatprep.subr.bf16.mxu0 0
      %3745 = vmatpush1.bf16.msra.mxu0 0
      %3746 = vmatprep.subr.bf16.mxu0 0
      %3747 = vmatpush1.bf16.msra.mxu0 0
      %3748 = vmatprep.subr.bf16.mxu0 0
      %3749 = vmatpush1.bf16.msra.mxu0 0
      %3750 = vmatprep.subr.bf16.mxu0 0
      %3751 = vmatpush1.bf16.msra.mxu0 0
      %3752 = vmatprep.subr.bf16.mxu0 0
      %3753 = vmatpush1.bf16.msra.mxu0 0
      %3754 = vmatprep.subr.bf16.mxu0 0
      %3755 = vmatpush1.bf16.msra.mxu0 0
      %3756 = vmatprep.subr.bf16.mxu0 0
      %3757 = vmatpush1.bf16.msra.mxu0 0
      %3758 = vmatprep.subr.bf16.mxu0 0
      %3759 = vmatpush1.bf16.msra.mxu0 0
      %3760 = vmatprep.subr.bf16.mxu0 0
      %3761 = vmatpush1.bf16.msra.mxu0 0
      %3762 = vmatprep.subr.bf16.mxu0 0
      %3763 = vmatpush1.bf16.msra.mxu0 0
      %3764 = vmatprep.subr.bf16.mxu0 0
      %3765 = vmatpush1.bf16.msra.mxu0 0
      %3766 = vmatprep.subr.bf16.mxu0 0
      %3767 = vmatpush1.bf16.msra.mxu0 0
      %3768 = vmatprep.mubr.bf16.mxu0 0
      %3769 = vmatmul.mubr.bf16.gmra.mrb[0].mxu0 %v3734
      %v3770 = vpop.f32.mrb[0].mxu0
      %v3771 = vadd.f32 %v3707, %v3770
      %v3772 = vpop.f32.mrb[0].mxu0
      %v3773 = vpop.f32.mrb[0].mxu0
      %v3774 = vpop.f32.mrb[0].mxu0
      %3775 = vdwg.mxu0
      %3776 = vst [vmem:[%s396] sm:$0x1] %v3771
      %p3777 = scmp.lt.s32.totalorder %s22, 5
      %s3778 = scalar_select %p3777, %s22, 5
      %s3779 = scalar_lea.vmem %s11, %s3778
      // Predicated region
      $region65: #{maicnn_forward.1} parent=63 // pred_check
        %p3780 = pneg %p281
      $region66: #{maicnn_forward.1} parent=63 // pred_check_branch
        %3782 = sbr.rel (%p3780) target = $region68
      $region67: #{maicnn_forward.1} parent=63 // pred_region
        _
      $region68: #{maicnn_forward.1} parent=63 // pred_fallthru
        _
    $region64: #{maicnn_forward.1} parent=5 // pred_fallthru
      _
    %p3783 = scmp.le.s32.totalorder 2, %s17
    // Predicated region
    $region69: #{maicnn_forward.1} parent=5 // pred_check
      %p3784 = pneg %p3783
    $region70: #{maicnn_forward.1} parent=5 // pred_check_branch
      %3786 = sbr.rel (%p3784) target = $region72
    $region71: #{maicnn_forward.1} parent=5 // pred_region
      %s3787 = ssub.s32 %s17, 2
      // Predicated region
      $region73: #{maicnn_forward.1} parent=71 // pred_check
        %p3788 = pneg %p287
      $region74: #{maicnn_forward.1} parent=71 // pred_check_branch
        %3790 = sbr.rel (%p3788) target = $region76
      $region75: #{maicnn_forward.1} parent=71 // pred_region
        %p3791 = scmp.lt.s32.totalorder %s23, 5
        %s3792 = scalar_select %p3791, %s23, 5
        %s3793 = scalar_lea.vmem %s11, %s3792
      $region76: #{maicnn_forward.1} parent=71 // pred_fallthru
        _
    $region72: #{maicnn_forward.1} parent=5 // pred_fallthru
      _
  $region6: #{maicnn_forward.1} parent=0 // loop_footer
    %s21 = sadd.s32 1, %s17
  $region7: #{maicnn_forward.1} parent=0 // loop_footer_branch
    %16 = sbr.rel target = $region3
  $region8: #{maicnn_forward.1} parent=0 // loop_exit
    _

</llo_original>
